<compile_context>
chip_gen: v6e
topology: v6e:2x2x1
jax: 0.10.0
libtpu: 0.0.40
codegen_flags: <defaults>
</compile_context>

<pallas_src>
import jax
import jax.numpy as jnp
from jax.experimental import pallas as pl
from jax.experimental.pallas import tpu as pltpu

_BN_EPS = 1e-5
_VMEM_LIMIT = 32 * 1024 * 1024      # safe on all of v5e / v6e / v7x
_TILE_M_MAX = 1024                  # rows per grid step
_LANE = 128


def _round_up(x, m):
    return (x + m - 1) // m * m


# ----------------------------- Pallas kernels ------------------------------ #

def _matmul_stats_kernel(p_ref, w_ref, y_ref, stat_ref):
    """y = patches @ weights (bf16 x bf16 -> f32 acc) + per-tile column stats."""
    y = jnp.dot(p_ref[...], w_ref[...], preferred_element_type=jnp.float32)
    y_ref[...] = y
    stat_ref[0:1, :] = jnp.sum(y, axis=0, keepdims=True)
    stat_ref[1:2, :] = jnp.sum(y * y, axis=0, keepdims=True)


def _scale_shift_relu_kernel(y_ref, scale_ref, shift_ref, o_ref):
    """Folded BatchNorm (y*scale + shift) + ReLU; f32 math, bf16 store."""
    o_ref[...] = jnp.maximum(
        y_ref[...] * scale_ref[...] + shift_ref[...], 0.0).astype(o_ref.dtype)


def _matmul_tanh_kernel(p_ref, w_ref, o_ref):
    y = jnp.dot(p_ref[...], w_ref[...], preferred_element_type=jnp.float32)
    o_ref[...] = jnp.tanh(y)


_COMPILER_PARAMS = pltpu.CompilerParams(
    dimension_semantics=("parallel", "parallel"),
    vmem_limit_bytes=_VMEM_LIMIT)


def _matmul_stats_call(patches, weights, tile_m):
    p_, rp, kp = patches.shape
    cp = weights.shape[2]
    t = rp // tile_m
    return pl.pallas_call(
        _matmul_stats_kernel,
        out_shape=(jax.ShapeDtypeStruct((p_, rp, cp), jnp.float32),
                   jax.ShapeDtypeStruct((p_, t, 2, cp), jnp.float32)),
        grid=(p_, t),
        in_specs=[pl.BlockSpec((None, tile_m, kp), lambda p, i: (p, i, 0)),
                  pl.BlockSpec((None, kp, cp), lambda p, i: (p, 0, 0))],
        out_specs=[pl.BlockSpec((None, tile_m, cp), lambda p, i: (p, i, 0)),
                   pl.BlockSpec((None, None, 2, cp), lambda p, i: (p, i, 0, 0))],
        compiler_params=_COMPILER_PARAMS,
    )(patches, weights)


def _scale_shift_relu_call(y_raw, scale, shift, tile_m):
    p_, rp, cp = y_raw.shape
    t = rp // tile_m
    return pl.pallas_call(
        _scale_shift_relu_kernel,
        out_shape=jax.ShapeDtypeStruct((p_, rp, cp), jnp.bfloat16),
        grid=(p_, t),
        in_specs=[pl.BlockSpec((None, tile_m, cp), lambda p, i: (p, i, 0)),
                  pl.BlockSpec((1, cp), lambda p, i: (0, 0)),
                  pl.BlockSpec((1, cp), lambda p, i: (0, 0))],
        out_specs=pl.BlockSpec((None, tile_m, cp), lambda p, i: (p, i, 0)),
        compiler_params=_COMPILER_PARAMS,
    )(y_raw, scale, shift)


def _matmul_tanh_call(patches, weights, tile_m):
    p_, rp, kp = patches.shape
    cp = weights.shape[2]
    t = rp // tile_m
    return pl.pallas_call(
        _matmul_tanh_kernel,
        out_shape=jax.ShapeDtypeStruct((p_, rp, cp), jnp.float32),
        grid=(p_, t),
        in_specs=[pl.BlockSpec((None, tile_m, kp), lambda p, i: (p, i, 0)),
                  pl.BlockSpec((None, kp, cp), lambda p, i: (p, 0, 0))],
        out_specs=pl.BlockSpec((None, tile_m, cp), lambda p, i: (p, i, 0)),
        compiler_params=_COMPILER_PARAMS,
    )(patches, weights)


# ------------------------------ JAX-side glue ------------------------------ #

def _flipped_weights(w_torch):
    """Wflip[j1, j2, ci, co] = W[ci, co, KH-1-j1, KW-1-j2] (correlation form)."""
    return jnp.transpose(w_torch[:, :, ::-1, ::-1], (2, 3, 0, 1))


def _patches_stride1(x, w_torch, pad):
    """Generic stride-1 ConvTranspose as correlation: pad by (K-1-pad), im2col."""
    n, h, w, cin = x.shape
    _, cout, kh, kw = w_torch.shape
    hout = h + kh - 1 - 2 * pad
    wout = w + kw - 1 - 2 * pad
    pa = kh - 1 - pad
    xp = jnp.pad(x, ((0, 0), (pa, pa), (pa, pa), (0, 0)))
    cols = []
    for j1 in range(kh):
        for j2 in range(kw):
            cols.append(xp[:, j1:j1 + hout, j2:j2 + wout, :])
    patches = jnp.stack(cols, axis=3).reshape(n * hout * wout, kh * kw * cin)
    weights = _flipped_weights(w_torch).reshape(kh * kw * cin, cout)
    return patches[None], weights[None], (hout, wout)


def _patches_stride2(x, w_torch):
    """Sub-pixel decomposition of ConvTranspose2d(k=4, s=2, p=1): 4 parity
    stride-1 correlations with 2x2 sub-kernels (no zero-dilated input).
    Output pixel (2m+py, 2n+px) = patches_p[m, n] @ W_p."""
    n, h, w, cin = x.shape
    _, cout, kh, kw = w_torch.shape
    assert kh == 4 and kw == 4
    wflip = _flipped_weights(w_torch)                      # (4, 4, Cin, Cout)
    xp = jnp.pad(x, ((0, 0), (1, 1), (1, 1), (0, 0)))
    patches_list, weights_list = [], []
    for py in range(2):
        for px in range(2):
            cols = []
            for t1 in range(2):
                for t2 in range(2):
                    cols.append(xp[:, py + t1:py + t1 + h,
                                      px + t2:px + t2 + w, :])
            patches_list.append(
                jnp.stack(cols, axis=3).reshape(n * h * w, 4 * cin))
            weights_list.append(wflip[py::2, px::2].reshape(4 * cin, cout))
    return (jnp.stack(patches_list, axis=0),
            jnp.stack(weights_list, axis=0), (h, w))


def _pad_operands(patches, weights):
    """bf16-cast + zero-pad rows to a tile multiple and K / Cout to 128 lanes."""
    p_, r, k = patches.shape
    cout = weights.shape[2]
    kp = _round_up(k, _LANE)
    cp = _round_up(cout, _LANE)
    tile_m = min(_TILE_M_MAX, _round_up(r, 16))
    rp = _round_up(r, tile_m)
    patches = jnp.pad(patches.astype(jnp.bfloat16),
                      ((0, 0), (0, rp - r), (0, kp - k)))
    weights = jnp.pad(weights.astype(jnp.bfloat16),
                      ((0, 0), (0, kp - k), (0, cp - cout)))
    return patches, weights, tile_m


def _interleave_parities(y, n, h, w, c):
    """y: (4, N*H*W, C) in parity order (py, px) -> (N, 2H, 2W, C)."""
    y = y.reshape(2, 2, n, h, w, c)
    y = jnp.transpose(y, (2, 3, 0, 4, 1, 5))     # (n, h, py, w, px, c)
    return y.reshape(n, 2 * h, 2 * w, c)


def _bn_scale_shift(stats, gamma, beta, count, cp):
    """Fold training-mode BatchNorm (biased batch variance) into scale/shift."""
    sums = jnp.sum(stats[:, :, 0, :], axis=(0, 1))
    sumsq = jnp.sum(stats[:, :, 1, :], axis=(0, 1))
    mean = sums / count
    var = jnp.maximum(sumsq / count - mean * mean, 0.0)
    inv = jax.lax.rsqrt(var + _BN_EPS)
    g = jnp.pad(gamma, (0, cp - gamma.shape[0]))   # padded lanes produce 0
    b = jnp.pad(beta, (0, cp - beta.shape[0]))
    scale = g * inv
    shift = b - mean * scale
    return scale.reshape(1, cp), shift.reshape(1, cp)


def _deconv_bn_relu(x, w_torch, gamma, beta, stride, pad):
    """ConvTranspose2d(bias=False) + BatchNorm2d (train-mode stats) + ReLU."""
    n = x.shape[0]
    cout = w_torch.shape[1]
    if stride == 1:
        patches, weights, (hout, wout) = _patches_stride1(x, w_torch, pad)
        h = w_sp = None
    else:
        assert stride == 2 and pad == 1
        patches, weights, (h, w_sp) = _patches_stride2(x, w_torch)
        hout, wout = 2 * h, 2 * w_sp
    p_, rows, _ = patches.shape
    patches, weights, tile_m = _pad_operands(patches, weights)
    cp = weights.shape[2]
    y_raw, stats = _matmul_stats_call(patches, weights, tile_m)
    count = float(p_ * rows)                      # = N * Hout * Wout
    scale, shift = _bn_scale_shift(stats, gamma, beta, count, cp)
    y = _scale_shift_relu_call(y_raw, scale, shift, tile_m)
    y = y[:, :rows, :cout]
    if stride == 1:
        return y.reshape(n, hout, wout, cout)
    return _interleave_parities(y, n, h, w_sp, cout)


def _deconv_tanh(x, w_torch):
    """ConvTranspose2d(k=4, s=2, p=1, bias=False) + tanh (final layer)."""
    n = x.shape[0]
    cout = w_torch.shape[1]
    patches, weights, (h, w_sp) = _patches_stride2(x, w_torch)
    _, rows, _ = patches.shape
    patches, weights, tile_m = _pad_operands(patches, weights)
    y = _matmul_tanh_call(patches, weights, tile_m)
    y = y[:, :rows, :cout]
    return _interleave_parities(y, n, h, w_sp, cout)


# ------------------------------ Generator ---------------------------------- #

def init_generator_params(key, num_noise, num_feat, ngf, num_img_channels):
    """Deterministic synthetic init. Shapes mirror the PyTorch module __init__."""
    ks = jax.random.split(key, 16)

    def conv_w(k, cin, cout):            # ConvTranspose2d weight: (Cin, Cout, 4, 4)
        return 0.02 * jax.random.normal(k, (cin, cout, 4, 4), jnp.float32)

    def bn(kg, kb, c):                   # BatchNorm2d affine params
        g = 1.0 + 0.1 * jax.random.normal(kg, (c,), jnp.float32)
        b = 0.1 * jax.random.normal(kb, (c,), jnp.float32)
        return g, b

    p = {}
    p["w1i"] = conv_w(ks[0], num_noise, ngf * 4)
    p["g1i"], p["b1i"] = bn(ks[1], ks[2], ngf * 4)
    p["w1l"] = conv_w(ks[3], num_feat, ngf * 4)
    p["g1l"], p["b1l"] = bn(ks[4], ks[5], ngf * 4)
    p["w2"] = conv_w(ks[6], ngf * 8, ngf * 4)
    p["g2"], p["b2"] = bn(ks[7], ks[8], ngf * 4)
    p["w3"] = conv_w(ks[9], ngf * 4, ngf * 2)
    p["g3"], p["b3"] = bn(ks[10], ks[11], ngf * 2)
    p["w4"] = conv_w(ks[12], ngf * 2, ngf)
    p["g4"], p["b4"] = bn(ks[13], ks[14], ngf)
    p["w5"] = conv_w(ks[15], ngf, num_img_channels)
    return p


def generator_forward(params, noise_nchw, label_nchw):
    # External layout NCHW (PyTorch); internal NHWC.
    x_in = jnp.transpose(noise_nchw, (0, 2, 3, 1))
    y_in = jnp.transpose(label_nchw, (0, 2, 3, 1))

    # TODO(synk): only training-mode BatchNorm (batch statistics) is
    # implemented; eval-mode running-stats tracking is not part of this forward.
    x = _deconv_bn_relu(x_in, params["w1i"], params["g1i"], params["b1i"], 1, 0)
    y = _deconv_bn_relu(y_in, params["w1l"], params["g1l"], params["b1l"], 1, 0)
    x = jnp.concatenate([x, y], axis=-1)          # torch.cat(dim=1) in NHWC

    x = _deconv_bn_relu(x, params["w2"], params["g2"], params["b2"], 2, 1)
    x = _deconv_bn_relu(x, params["w3"], params["g3"], params["b3"], 2, 1)
    x = _deconv_bn_relu(x, params["w4"], params["g4"], params["b4"], 2, 1)
    x = _deconv_tanh(x, params["w5"])
    return jnp.transpose(x, (0, 3, 1, 2))         # back to NCHW (f32)


if __name__ == "__main__":
    key = jax.random.PRNGKey(0)
    batch = 2
    num_noise_vec_channels = 16
    num_feature_vec_channels = 8
    base_num_out_channels = 8
    num_img_channels = 3

    kp, kn, kl = jax.random.split(key, 3)
    params = init_generator_params(kp, num_noise_vec_channels,
                                   num_feature_vec_channels,
                                   base_num_out_channels, num_img_channels)
    noise = jax.random.normal(kn, (batch, num_noise_vec_channels, 1, 1), jnp.float32)
    label = jax.random.normal(kl, (batch, num_feature_vec_channels, 1, 1), jnp.float32)

    fwd = jax.jit(generator_forward)
    out = fwd(params, noise, label)
    out = jax.block_until_ready(out)

    assert out.shape == (batch, num_img_channels, 64, 64), out.shape
    assert bool(jnp.all(jnp.isfinite(out)))
    assert bool(jnp.all(jnp.abs(out) <= 1.0))     # tanh output range
    print("KERNEL_OK")
</pallas_src>

<mosaic_0001>
module attributes {stable_mosaic.version = 11 : i64} {
  func.func @_matmul_stats_kernel(%arg0: i32, %arg1: i32, %arg2: memref<1x32x256xbf16, #tpu.memory_space<vmem>>, %arg3: memref<1x256x128xbf16, #tpu.memory_space<vmem>>, %arg4: memref<1x32x128xf32, #tpu.memory_space<vmem>>, %arg5: memref<1x1x2x128xf32, #tpu.memory_space<vmem>>) attributes {dimension_semantics = [#tpu.dimension_semantics<parallel>, #tpu.dimension_semantics<parallel>], iteration_bounds = array<i64: 1, 1>, scalar_prefetch = 0 : i64, scratch_operands = 0 : i64, tpu.core_type = #tpu.core_type<tc>, window_params = [{transform_indices = @transform_0, window_bounds = array<i64: 1, 32, 256>}, {transform_indices = @transform_1, window_bounds = array<i64: 1, 256, 128>}, {transform_indices = @transform_2, window_bounds = array<i64: 1, 32, 128>}, {transform_indices = @transform_3, window_bounds = array<i64: 1, 1, 2, 128>}]} {
    %c0 = arith.constant 0 : index
    %c0_0 = arith.constant 0 : index
    %c0_1 = arith.constant 0 : index
    %0 = vector.load %arg2[%c0, %c0_0, %c0_1] : memref<1x32x256xbf16, #tpu.memory_space<vmem>>, vector<1x32x256xbf16>
    %1 = vector.shape_cast %0 : vector<1x32x256xbf16> to vector<32x256xbf16>
    %c0_2 = arith.constant 0 : index
    %c0_3 = arith.constant 0 : index
    %c0_4 = arith.constant 0 : index
    %2 = vector.load %arg3[%c0_2, %c0_3, %c0_4] : memref<1x256x128xbf16, #tpu.memory_space<vmem>>, vector<1x256x128xbf16>
    %3 = vector.shape_cast %2 : vector<1x256x128xbf16> to vector<256x128xbf16>
    %cst = arith.constant dense<0.000000e+00> : vector<32x128xf32>
    %4 = tpu.matmul %1, %3, %cst {dimension_numbers = #tpu.dot_dimension_numbers<[1], [0], [0], [1], [0, 0, 1, 1], [], []>} : vector<32x256xbf16>, vector<256x128xbf16>, vector<32x128xf32> -> vector<32x128xf32>
    %c0_5 = arith.constant 0 : index
    %c0_6 = arith.constant 0 : index
    %c0_7 = arith.constant 0 : index
    %5 = vector.load %arg4[%c0_5, %c0_6, %c0_7] : memref<1x32x128xf32, #tpu.memory_space<vmem>>, vector<1x32x128xf32>
    %6 = vector.shape_cast %5 : vector<1x32x128xf32> to vector<32x128xf32>
    %7 = vector.shape_cast %4 : vector<32x128xf32> to vector<1x32x128xf32>
    tpu.vector_store %arg4[%c0_5, %c0_6, %c0_7], %7 {strides = array<i32>} : memref<1x32x128xf32, #tpu.memory_space<vmem>>, vector<1x32x128xf32>,
    %cst_8 = arith.constant dense<0.000000e+00> : vector<128xf32>
    %8 = vector.multi_reduction <add>, %4, %cst_8 [0] : vector<32x128xf32> to vector<128xf32>
    %9 = vector.shape_cast %8 : vector<128xf32> to vector<1x128xf32>
    %c0_9 = arith.constant 0 : index
    %c0_10 = arith.constant 0 : index
    %c0_11 = arith.constant 0 : index
    %c0_12 = arith.constant 0 : index
    %10 = vector.load %arg5[%c0_9, %c0_10, %c0_11, %c0_12] : memref<1x1x2x128xf32, #tpu.memory_space<vmem>>, vector<1x1x1x128xf32>
    %11 = vector.shape_cast %10 : vector<1x1x1x128xf32> to vector<1x128xf32>
    %12 = vector.shape_cast %9 : vector<1x128xf32> to vector<1x1x1x128xf32>
    tpu.vector_store %arg5[%c0_9, %c0_10, %c0_11, %c0_12], %12 {strides = array<i32>} : memref<1x1x2x128xf32, #tpu.memory_space<vmem>>, vector<1x1x1x128xf32>,
    %13 = arith.mulf %4, %4 : vector<32x128xf32>
    %cst_13 = arith.constant dense<0.000000e+00> : vector<128xf32>
    %14 = vector.multi_reduction <add>, %13, %cst_13 [0] : vector<32x128xf32> to vector<128xf32>
    %15 = vector.shape_cast %14 : vector<128xf32> to vector<1x128xf32>
    %c0_14 = arith.constant 0 : index
    %c0_15 = arith.constant 0 : index
    %c1 = arith.constant 1 : index
    %c0_16 = arith.constant 0 : index
    %16 = vector.load %arg5[%c0_14, %c0_15, %c1, %c0_16] : memref<1x1x2x128xf32, #tpu.memory_space<vmem>>, vector<1x1x1x128xf32>
    %17 = vector.shape_cast %16 : vector<1x1x1x128xf32> to vector<1x128xf32>
    %18 = vector.shape_cast %15 : vector<1x128xf32> to vector<1x1x1x128xf32>
    tpu.vector_store %arg5[%c0_14, %c0_15, %c1, %c0_16], %18 {strides = array<i32>} : memref<1x1x2x128xf32, #tpu.memory_space<vmem>>, vector<1x1x1x128xf32>,
    return
  }
  func.func @transform_0(%arg0: i32, %arg1: i32) -> (i32, i32, i32) {
    %c0_i32 = arith.constant 0 : i32
    %c0_i32_0 = arith.constant 0 : i32
    return %arg0, %arg1, %c0_i32 : i32, i32, i32
  }
  func.func @transform_1(%arg0: i32, %arg1: i32) -> (i32, i32, i32) {
    %c0_i32 = arith.constant 0 : i32
    %c0_i32_0 = arith.constant 0 : i32
    %c0_i32_1 = arith.constant 0 : i32
    return %arg0, %c0_i32, %c0_i32_0 : i32, i32, i32
  }
  func.func @transform_2(%arg0: i32, %arg1: i32) -> (i32, i32, i32) {
    %c0_i32 = arith.constant 0 : i32
    %c0_i32_0 = arith.constant 0 : i32
    return %arg0, %arg1, %c0_i32 : i32, i32, i32
  }
  func.func @transform_3(%arg0: i32, %arg1: i32) -> (i32, i32, i32, i32) {
    %c0_i32 = arith.constant 0 : i32
    %c0_i32_0 = arith.constant 0 : i32
    %c0_i32_1 = arith.constant 0 : i32
    return %arg0, %arg1, %c0_i32, %c0_i32_0 : i32, i32, i32, i32
  }
}

module attributes {stable_mosaic.version = 11 : i64} {
  func.func @_scale_shift_relu_kernel(%arg0: i32, %arg1: i32, %arg2: memref<1x32x128xf32, #tpu.memory_space<vmem>>, %arg3: memref<1x128xf32, #tpu.memory_space<vmem>>, %arg4: memref<1x128xf32, #tpu.memory_space<vmem>>, %arg5: memref<1x32x128xbf16, #tpu.memory_space<vmem>>) attributes {dimension_semantics = [#tpu.dimension_semantics<parallel>, #tpu.dimension_semantics<parallel>], iteration_bounds = array<i64: 1, 1>, scalar_prefetch = 0 : i64, scratch_operands = 0 : i64, tpu.core_type = #tpu.core_type<tc>, window_params = [{transform_indices = @transform_0, window_bounds = array<i64: 1, 32, 128>}, {pipeline_mode = #tpu.pipeline_mode<synchronous>, transform_indices = @transform_1, window_bounds = array<i64: 1, 128>}, {pipeline_mode = #tpu.pipeline_mode<synchronous>, transform_indices = @transform_2, window_bounds = array<i64: 1, 128>}, {transform_indices = @transform_3, window_bounds = array<i64: 1, 32, 128>}]} {
    %c0 = arith.constant 0 : index
    %c0_0 = arith.constant 0 : index
    %c0_1 = arith.constant 0 : index
    %0 = vector.load %arg2[%c0, %c0_0, %c0_1] : memref<1x32x128xf32, #tpu.memory_space<vmem>>, vector<1x32x128xf32>
    %1 = vector.shape_cast %0 : vector<1x32x128xf32> to vector<32x128xf32>
    %c0_2 = arith.constant 0 : index
    %c0_3 = arith.constant 0 : index
    %2 = vector.load %arg3[%c0_2, %c0_3] : memref<1x128xf32, #tpu.memory_space<vmem>>, vector<1x128xf32>
    %3 = vector.broadcast %2 : vector<1x128xf32> to vector<32x128xf32>
    %4 = arith.mulf %1, %3 : vector<32x128xf32>
    %c0_4 = arith.constant 0 : index
    %c0_5 = arith.constant 0 : index
    %5 = vector.load %arg4[%c0_4, %c0_5] : memref<1x128xf32, #tpu.memory_space<vmem>>, vector<1x128xf32>
    %6 = vector.broadcast %5 : vector<1x128xf32> to vector<32x128xf32>
    %7 = arith.addf %4, %6 : vector<32x128xf32>
    %cst = arith.constant 0.000000e+00 : f32
    %8 = vector.broadcast %cst : f32 to vector<32x128xf32>
    %9 = arith.maximumf %7, %8 : vector<32x128xf32>
    %10 = arith.truncf %9 : vector<32x128xf32> to vector<32x128xbf16>
    %c0_6 = arith.constant 0 : index
    %c0_7 = arith.constant 0 : index
    %c0_8 = arith.constant 0 : index
    %11 = vector.load %arg5[%c0_6, %c0_7, %c0_8] : memref<1x32x128xbf16, #tpu.memory_space<vmem>>, vector<1x32x128xbf16>
    %12 = vector.shape_cast %11 : vector<1x32x128xbf16> to vector<32x128xbf16>
    %13 = vector.shape_cast %10 : vector<32x128xbf16> to vector<1x32x128xbf16>
    tpu.vector_store %arg5[%c0_6, %c0_7, %c0_8], %13 {strides = array<i32>} : memref<1x32x128xbf16, #tpu.memory_space<vmem>>, vector<1x32x128xbf16>,
    return
  }
  func.func @transform_0(%arg0: i32, %arg1: i32) -> (i32, i32, i32) {
    %c0_i32 = arith.constant 0 : i32
    %c0_i32_0 = arith.constant 0 : i32
    return %arg0, %arg1, %c0_i32 : i32, i32, i32
  }
  func.func @transform_1(%arg0: i32, %arg1: i32) -> (i32, i32) {
    %c0_i32 = arith.constant 0 : i32
    %c0_i32_0 = arith.constant 0 : i32
    %c0_i32_1 = arith.constant 0 : i32
    return %c0_i32, %c0_i32_0 : i32, i32
  }
  func.func @transform_2(%arg0: i32, %arg1: i32) -> (i32, i32) {
    %c0_i32 = arith.constant 0 : i32
    %c0_i32_0 = arith.constant 0 : i32
    %c0_i32_1 = arith.constant 0 : i32
    return %c0_i32, %c0_i32_0 : i32, i32
  }
  func.func @transform_3(%arg0: i32, %arg1: i32) -> (i32, i32, i32) {
    %c0_i32 = arith.constant 0 : i32
    %c0_i32_0 = arith.constant 0 : i32
    return %arg0, %arg1, %c0_i32 : i32, i32, i32
  }
}

module attributes {stable_mosaic.version = 11 : i64} {
  func.func @_matmul_stats_kernel(%arg0: i32, %arg1: i32, %arg2: memref<1x32x128xbf16, #tpu.memory_space<vmem>>, %arg3: memref<1x128x128xbf16, #tpu.memory_space<vmem>>, %arg4: memref<1x32x128xf32, #tpu.memory_space<vmem>>, %arg5: memref<1x1x2x128xf32, #tpu.memory_space<vmem>>) attributes {dimension_semantics = [#tpu.dimension_semantics<parallel>, #tpu.dimension_semantics<parallel>], iteration_bounds = array<i64: 1, 1>, scalar_prefetch = 0 : i64, scratch_operands = 0 : i64, tpu.core_type = #tpu.core_type<tc>, window_params = [{transform_indices = @transform_0, window_bounds = array<i64: 1, 32, 128>}, {transform_indices = @transform_1, window_bounds = array<i64: 1, 128, 128>}, {transform_indices = @transform_2, window_bounds = array<i64: 1, 32, 128>}, {transform_indices = @transform_3, window_bounds = array<i64: 1, 1, 2, 128>}]} {
    %c0 = arith.constant 0 : index
    %c0_0 = arith.constant 0 : index
    %c0_1 = arith.constant 0 : index
    %0 = vector.load %arg2[%c0, %c0_0, %c0_1] : memref<1x32x128xbf16, #tpu.memory_space<vmem>>, vector<1x32x128xbf16>
    %1 = vector.shape_cast %0 : vector<1x32x128xbf16> to vector<32x128xbf16>
    %c0_2 = arith.constant 0 : index
    %c0_3 = arith.constant 0 : index
    %c0_4 = arith.constant 0 : index
    %2 = vector.load %arg3[%c0_2, %c0_3, %c0_4] : memref<1x128x128xbf16, #tpu.memory_space<vmem>>, vector<1x128x128xbf16>
    %3 = vector.shape_cast %2 : vector<1x128x128xbf16> to vector<128x128xbf16>
    %cst = arith.constant dense<0.000000e+00> : vector<32x128xf32>
    %4 = tpu.matmul %1, %3, %cst {dimension_numbers = #tpu.dot_dimension_numbers<[1], [0], [0], [1], [0, 0, 1, 1], [], []>} : vector<32x128xbf16>, vector<128x128xbf16>, vector<32x128xf32> -> vector<32x128xf32>
    %c0_5 = arith.constant 0 : index
    %c0_6 = arith.constant 0 : index
    %c0_7 = arith.constant 0 : index
    %5 = vector.load %arg4[%c0_5, %c0_6, %c0_7] : memref<1x32x128xf32, #tpu.memory_space<vmem>>, vector<1x32x128xf32>
    %6 = vector.shape_cast %5 : vector<1x32x128xf32> to vector<32x128xf32>
    %7 = vector.shape_cast %4 : vector<32x128xf32> to vector<1x32x128xf32>
    tpu.vector_store %arg4[%c0_5, %c0_6, %c0_7], %7 {strides = array<i32>} : memref<1x32x128xf32, #tpu.memory_space<vmem>>, vector<1x32x128xf32>,
    %cst_8 = arith.constant dense<0.000000e+00> : vector<128xf32>
    %8 = vector.multi_reduction <add>, %4, %cst_8 [0] : vector<32x128xf32> to vector<128xf32>
    %9 = vector.shape_cast %8 : vector<128xf32> to vector<1x128xf32>
    %c0_9 = arith.constant 0 : index
    %c0_10 = arith.constant 0 : index
    %c0_11 = arith.constant 0 : index
    %c0_12 = arith.constant 0 : index
    %10 = vector.load %arg5[%c0_9, %c0_10, %c0_11, %c0_12] : memref<1x1x2x128xf32, #tpu.memory_space<vmem>>, vector<1x1x1x128xf32>
    %11 = vector.shape_cast %10 : vector<1x1x1x128xf32> to vector<1x128xf32>
    %12 = vector.shape_cast %9 : vector<1x128xf32> to vector<1x1x1x128xf32>
    tpu.vector_store %arg5[%c0_9, %c0_10, %c0_11, %c0_12], %12 {strides = array<i32>} : memref<1x1x2x128xf32, #tpu.memory_space<vmem>>, vector<1x1x1x128xf32>,
    %13 = arith.mulf %4, %4 : vector<32x128xf32>
    %cst_13 = arith.constant dense<0.000000e+00> : vector<128xf32>
    %14 = vector.multi_reduction <add>, %13, %cst_13 [0] : vector<32x128xf32> to vector<128xf32>
    %15 = vector.shape_cast %14 : vector<128xf32> to vector<1x128xf32>
    %c0_14 = arith.constant 0 : index
    %c0_15 = arith.constant 0 : index
    %c1 = arith.constant 1 : index
    %c0_16 = arith.constant 0 : index
    %16 = vector.load %arg5[%c0_14, %c0_15, %c1, %c0_16] : memref<1x1x2x128xf32, #tpu.memory_space<vmem>>, vector<1x1x1x128xf32>
    %17 = vector.shape_cast %16 : vector<1x1x1x128xf32> to vector<1x128xf32>
    %18 = vector.shape_cast %15 : vector<1x128xf32> to vector<1x1x1x128xf32>
    tpu.vector_store %arg5[%c0_14, %c0_15, %c1, %c0_16], %18 {strides = array<i32>} : memref<1x1x2x128xf32, #tpu.memory_space<vmem>>, vector<1x1x1x128xf32>,
    return
  }
  func.func @transform_0(%arg0: i32, %arg1: i32) -> (i32, i32, i32) {
    %c0_i32 = arith.constant 0 : i32
    %c0_i32_0 = arith.constant 0 : i32
    return %arg0, %arg1, %c0_i32 : i32, i32, i32
  }
  func.func @transform_1(%arg0: i32, %arg1: i32) -> (i32, i32, i32) {
    %c0_i32 = arith.constant 0 : i32
    %c0_i32_0 = arith.constant 0 : i32
    %c0_i32_1 = arith.constant 0 : i32
    return %arg0, %c0_i32, %c0_i32_0 : i32, i32, i32
  }
  func.func @transform_2(%arg0: i32, %arg1: i32) -> (i32, i32, i32) {
    %c0_i32 = arith.constant 0 : i32
    %c0_i32_0 = arith.constant 0 : i32
    return %arg0, %arg1, %c0_i32 : i32, i32, i32
  }
  func.func @transform_3(%arg0: i32, %arg1: i32) -> (i32, i32, i32, i32) {
    %c0_i32 = arith.constant 0 : i32
    %c0_i32_0 = arith.constant 0 : i32
    %c0_i32_1 = arith.constant 0 : i32
    return %arg0, %arg1, %c0_i32, %c0_i32_0 : i32, i32, i32, i32
  }
}

module attributes {stable_mosaic.version = 11 : i64} {
  func.func @_matmul_stats_kernel(%arg0: i32, %arg1: i32, %arg2: memref<1x32x256xbf16, #tpu.memory_space<vmem>>, %arg3: memref<1x256x128xbf16, #tpu.memory_space<vmem>>, %arg4: memref<1x32x128xf32, #tpu.memory_space<vmem>>, %arg5: memref<1x1x2x128xf32, #tpu.memory_space<vmem>>) attributes {dimension_semantics = [#tpu.dimension_semantics<parallel>, #tpu.dimension_semantics<parallel>], iteration_bounds = array<i64: 4, 1>, scalar_prefetch = 0 : i64, scratch_operands = 0 : i64, tpu.core_type = #tpu.core_type<tc>, window_params = [{transform_indices = @transform_0, window_bounds = array<i64: 1, 32, 256>}, {transform_indices = @transform_1, window_bounds = array<i64: 1, 256, 128>}, {transform_indices = @transform_2, window_bounds = array<i64: 1, 32, 128>}, {transform_indices = @transform_3, window_bounds = array<i64: 1, 1, 2, 128>}]} {
    %c0 = arith.constant 0 : index
    %c0_0 = arith.constant 0 : index
    %c0_1 = arith.constant 0 : index
    %0 = vector.load %arg2[%c0, %c0_0, %c0_1] : memref<1x32x256xbf16, #tpu.memory_space<vmem>>, vector<1x32x256xbf16>
    %1 = vector.shape_cast %0 : vector<1x32x256xbf16> to vector<32x256xbf16>
    %c0_2 = arith.constant 0 : index
    %c0_3 = arith.constant 0 : index
    %c0_4 = arith.constant 0 : index
    %2 = vector.load %arg3[%c0_2, %c0_3, %c0_4] : memref<1x256x128xbf16, #tpu.memory_space<vmem>>, vector<1x256x128xbf16>
    %3 = vector.shape_cast %2 : vector<1x256x128xbf16> to vector<256x128xbf16>
    %cst = arith.constant dense<0.000000e+00> : vector<32x128xf32>
    %4 = tpu.matmul %1, %3, %cst {dimension_numbers = #tpu.dot_dimension_numbers<[1], [0], [0], [1], [0, 0, 1, 1], [], []>} : vector<32x256xbf16>, vector<256x128xbf16>, vector<32x128xf32> -> vector<32x128xf32>
    %c0_5 = arith.constant 0 : index
    %c0_6 = arith.constant 0 : index
    %c0_7 = arith.constant 0 : index
    %5 = vector.load %arg4[%c0_5, %c0_6, %c0_7] : memref<1x32x128xf32, #tpu.memory_space<vmem>>, vector<1x32x128xf32>
    %6 = vector.shape_cast %5 : vector<1x32x128xf32> to vector<32x128xf32>
    %7 = vector.shape_cast %4 : vector<32x128xf32> to vector<1x32x128xf32>
    tpu.vector_store %arg4[%c0_5, %c0_6, %c0_7], %7 {strides = array<i32>} : memref<1x32x128xf32, #tpu.memory_space<vmem>>, vector<1x32x128xf32>,
    %cst_8 = arith.constant dense<0.000000e+00> : vector<128xf32>
    %8 = vector.multi_reduction <add>, %4, %cst_8 [0] : vector<32x128xf32> to vector<128xf32>
    %9 = vector.shape_cast %8 : vector<128xf32> to vector<1x128xf32>
    %c0_9 = arith.constant 0 : index
    %c0_10 = arith.constant 0 : index
    %c0_11 = arith.constant 0 : index
    %c0_12 = arith.constant 0 : index
    %10 = vector.load %arg5[%c0_9, %c0_10, %c0_11, %c0_12] : memref<1x1x2x128xf32, #tpu.memory_space<vmem>>, vector<1x1x1x128xf32>
    %11 = vector.shape_cast %10 : vector<1x1x1x128xf32> to vector<1x128xf32>
    %12 = vector.shape_cast %9 : vector<1x128xf32> to vector<1x1x1x128xf32>
    tpu.vector_store %arg5[%c0_9, %c0_10, %c0_11, %c0_12], %12 {strides = array<i32>} : memref<1x1x2x128xf32, #tpu.memory_space<vmem>>, vector<1x1x1x128xf32>,
    %13 = arith.mulf %4, %4 : vector<32x128xf32>
    %cst_13 = arith.constant dense<0.000000e+00> : vector<128xf32>
    %14 = vector.multi_reduction <add>, %13, %cst_13 [0] : vector<32x128xf32> to vector<128xf32>
    %15 = vector.shape_cast %14 : vector<128xf32> to vector<1x128xf32>
    %c0_14 = arith.constant 0 : index
    %c0_15 = arith.constant 0 : index
    %c1 = arith.constant 1 : index
    %c0_16 = arith.constant 0 : index
    %16 = vector.load %arg5[%c0_14, %c0_15, %c1, %c0_16] : memref<1x1x2x128xf32, #tpu.memory_space<vmem>>, vector<1x1x1x128xf32>
    %17 = vector.shape_cast %16 : vector<1x1x1x128xf32> to vector<1x128xf32>
    %18 = vector.shape_cast %15 : vector<1x128xf32> to vector<1x1x1x128xf32>
    tpu.vector_store %arg5[%c0_14, %c0_15, %c1, %c0_16], %18 {strides = array<i32>} : memref<1x1x2x128xf32, #tpu.memory_space<vmem>>, vector<1x1x1x128xf32>,
    return
  }
  func.func @transform_0(%arg0: i32, %arg1: i32) -> (i32, i32, i32) {
    %c0_i32 = arith.constant 0 : i32
    %c0_i32_0 = arith.constant 0 : i32
    return %arg0, %arg1, %c0_i32 : i32, i32, i32
  }
  func.func @transform_1(%arg0: i32, %arg1: i32) -> (i32, i32, i32) {
    %c0_i32 = arith.constant 0 : i32
    %c0_i32_0 = arith.constant 0 : i32
    %c0_i32_1 = arith.constant 0 : i32
    return %arg0, %c0_i32, %c0_i32_0 : i32, i32, i32
  }
  func.func @transform_2(%arg0: i32, %arg1: i32) -> (i32, i32, i32) {
    %c0_i32 = arith.constant 0 : i32
    %c0_i32_0 = arith.constant 0 : i32
    return %arg0, %arg1, %c0_i32 : i32, i32, i32
  }
  func.func @transform_3(%arg0: i32, %arg1: i32) -> (i32, i32, i32, i32) {
    %c0_i32 = arith.constant 0 : i32
    %c0_i32_0 = arith.constant 0 : i32
    %c0_i32_1 = arith.constant 0 : i32
    return %arg0, %arg1, %c0_i32, %c0_i32_0 : i32, i32, i32, i32
  }
}

module attributes {stable_mosaic.version = 11 : i64} {
  func.func @_scale_shift_relu_kernel(%arg0: i32, %arg1: i32, %arg2: memref<1x32x128xf32, #tpu.memory_space<vmem>>, %arg3: memref<1x128xf32, #tpu.memory_space<vmem>>, %arg4: memref<1x128xf32, #tpu.memory_space<vmem>>, %arg5: memref<1x32x128xbf16, #tpu.memory_space<vmem>>) attributes {dimension_semantics = [#tpu.dimension_semantics<parallel>, #tpu.dimension_semantics<parallel>], iteration_bounds = array<i64: 4, 1>, scalar_prefetch = 0 : i64, scratch_operands = 0 : i64, tpu.core_type = #tpu.core_type<tc>, window_params = [{transform_indices = @transform_0, window_bounds = array<i64: 1, 32, 128>}, {pipeline_mode = #tpu.pipeline_mode<synchronous>, transform_indices = @transform_1, window_bounds = array<i64: 1, 128>}, {pipeline_mode = #tpu.pipeline_mode<synchronous>, transform_indices = @transform_2, window_bounds = array<i64: 1, 128>}, {transform_indices = @transform_3, window_bounds = array<i64: 1, 32, 128>}]} {
    %c0 = arith.constant 0 : index
    %c0_0 = arith.constant 0 : index
    %c0_1 = arith.constant 0 : index
    %0 = vector.load %arg2[%c0, %c0_0, %c0_1] : memref<1x32x128xf32, #tpu.memory_space<vmem>>, vector<1x32x128xf32>
    %1 = vector.shape_cast %0 : vector<1x32x128xf32> to vector<32x128xf32>
    %c0_2 = arith.constant 0 : index
    %c0_3 = arith.constant 0 : index
    %2 = vector.load %arg3[%c0_2, %c0_3] : memref<1x128xf32, #tpu.memory_space<vmem>>, vector<1x128xf32>
    %3 = vector.broadcast %2 : vector<1x128xf32> to vector<32x128xf32>
    %4 = arith.mulf %1, %3 : vector<32x128xf32>
    %c0_4 = arith.constant 0 : index
    %c0_5 = arith.constant 0 : index
    %5 = vector.load %arg4[%c0_4, %c0_5] : memref<1x128xf32, #tpu.memory_space<vmem>>, vector<1x128xf32>
    %6 = vector.broadcast %5 : vector<1x128xf32> to vector<32x128xf32>
    %7 = arith.addf %4, %6 : vector<32x128xf32>
    %cst = arith.constant 0.000000e+00 : f32
    %8 = vector.broadcast %cst : f32 to vector<32x128xf32>
    %9 = arith.maximumf %7, %8 : vector<32x128xf32>
    %10 = arith.truncf %9 : vector<32x128xf32> to vector<32x128xbf16>
    %c0_6 = arith.constant 0 : index
    %c0_7 = arith.constant 0 : index
    %c0_8 = arith.constant 0 : index
    %11 = vector.load %arg5[%c0_6, %c0_7, %c0_8] : memref<1x32x128xbf16, #tpu.memory_space<vmem>>, vector<1x32x128xbf16>
    %12 = vector.shape_cast %11 : vector<1x32x128xbf16> to vector<32x128xbf16>
    %13 = vector.shape_cast %10 : vector<32x128xbf16> to vector<1x32x128xbf16>
    tpu.vector_store %arg5[%c0_6, %c0_7, %c0_8], %13 {strides = array<i32>} : memref<1x32x128xbf16, #tpu.memory_space<vmem>>, vector<1x32x128xbf16>,
    return
  }
  func.func @transform_0(%arg0: i32, %arg1: i32) -> (i32, i32, i32) {
    %c0_i32 = arith.constant 0 : i32
    %c0_i32_0 = arith.constant 0 : i32
    return %arg0, %arg1, %c0_i32 : i32, i32, i32
  }
  func.func @transform_1(%arg0: i32, %arg1: i32) -> (i32, i32) {
    %c0_i32 = arith.constant 0 : i32
    %c0_i32_0 = arith.constant 0 : i32
    %c0_i32_1 = arith.constant 0 : i32
    return %c0_i32, %c0_i32_0 : i32, i32
  }
  func.func @transform_2(%arg0: i32, %arg1: i32) -> (i32, i32) {
    %c0_i32 = arith.constant 0 : i32
    %c0_i32_0 = arith.constant 0 : i32
    %c0_i32_1 = arith.constant 0 : i32
    return %c0_i32, %c0_i32_0 : i32, i32
  }
  func.func @transform_3(%arg0: i32, %arg1: i32) -> (i32, i32, i32) {
    %c0_i32 = arith.constant 0 : i32
    %c0_i32_0 = arith.constant 0 : i32
    return %arg0, %arg1, %c0_i32 : i32, i32, i32
  }
}

module attributes {stable_mosaic.version = 11 : i64} {
  func.func @_matmul_stats_kernel(%arg0: i32, %arg1: i32, %arg2: memref<1x128x128xbf16, #tpu.memory_space<vmem>>, %arg3: memref<1x128x128xbf16, #tpu.memory_space<vmem>>, %arg4: memref<1x128x128xf32, #tpu.memory_space<vmem>>, %arg5: memref<1x1x2x128xf32, #tpu.memory_space<vmem>>) attributes {dimension_semantics = [#tpu.dimension_semantics<parallel>, #tpu.dimension_semantics<parallel>], iteration_bounds = array<i64: 4, 1>, scalar_prefetch = 0 : i64, scratch_operands = 0 : i64, tpu.core_type = #tpu.core_type<tc>, window_params = [{transform_indices = @transform_0, window_bounds = array<i64: 1, 128, 128>}, {transform_indices = @transform_1, window_bounds = array<i64: 1, 128, 128>}, {transform_indices = @transform_2, window_bounds = array<i64: 1, 128, 128>}, {transform_indices = @transform_3, window_bounds = array<i64: 1, 1, 2, 128>}]} {
    %c0 = arith.constant 0 : index
    %c0_0 = arith.constant 0 : index
    %c0_1 = arith.constant 0 : index
    %0 = vector.load %arg2[%c0, %c0_0, %c0_1] : memref<1x128x128xbf16, #tpu.memory_space<vmem>>, vector<1x128x128xbf16>
    %1 = vector.shape_cast %0 : vector<1x128x128xbf16> to vector<128x128xbf16>
    %c0_2 = arith.constant 0 : index
    %c0_3 = arith.constant 0 : index
    %c0_4 = arith.constant 0 : index
    %2 = vector.load %arg3[%c0_2, %c0_3, %c0_4] : memref<1x128x128xbf16, #tpu.memory_space<vmem>>, vector<1x128x128xbf16>
    %3 = vector.shape_cast %2 : vector<1x128x128xbf16> to vector<128x128xbf16>
    %cst = arith.constant dense<0.000000e+00> : vector<128x128xf32>
    %4 = tpu.matmul %1, %3, %cst {dimension_numbers = #tpu.dot_dimension_numbers<[1], [0], [0], [1], [0, 0, 1, 1], [], []>} : vector<128x128xbf16>, vector<128x128xbf16>, vector<128x128xf32> -> vector<128x128xf32>
    %c0_5 = arith.constant 0 : index
    %c0_6 = arith.constant 0 : index
    %c0_7 = arith.constant 0 : index
    %5 = vector.load %arg4[%c0_5, %c0_6, %c0_7] : memref<1x128x128xf32, #tpu.memory_space<vmem>>, vector<1x128x128xf32>
    %6 = vector.shape_cast %5 : vector<1x128x128xf32> to vector<128x128xf32>
    %7 = vector.shape_cast %4 : vector<128x128xf32> to vector<1x128x128xf32>
    tpu.vector_store %arg4[%c0_5, %c0_6, %c0_7], %7 {strides = array<i32>} : memref<1x128x128xf32, #tpu.memory_space<vmem>>, vector<1x128x128xf32>,
    %cst_8 = arith.constant dense<0.000000e+00> : vector<128xf32>
    %8 = vector.multi_reduction <add>, %4, %cst_8 [0] : vector<128x128xf32> to vector<128xf32>
    %9 = vector.shape_cast %8 : vector<128xf32> to vector<1x128xf32>
    %c0_9 = arith.constant 0 : index
    %c0_10 = arith.constant 0 : index
    %c0_11 = arith.constant 0 : index
    %c0_12 = arith.constant 0 : index
    %10 = vector.load %arg5[%c0_9, %c0_10, %c0_11, %c0_12] : memref<1x1x2x128xf32, #tpu.memory_space<vmem>>, vector<1x1x1x128xf32>
    %11 = vector.shape_cast %10 : vector<1x1x1x128xf32> to vector<1x128xf32>
    %12 = vector.shape_cast %9 : vector<1x128xf32> to vector<1x1x1x128xf32>
    tpu.vector_store %arg5[%c0_9, %c0_10, %c0_11, %c0_12], %12 {strides = array<i32>} : memref<1x1x2x128xf32, #tpu.memory_space<vmem>>, vector<1x1x1x128xf32>,
    %13 = arith.mulf %4, %4 : vector<128x128xf32>
    %cst_13 = arith.constant dense<0.000000e+00> : vector<128xf32>
    %14 = vector.multi_reduction <add>, %13, %cst_13 [0] : vector<128x128xf32> to vector<128xf32>
    %15 = vector.shape_cast %14 : vector<128xf32> to vector<1x128xf32>
    %c0_14 = arith.constant 0 : index
    %c0_15 = arith.constant 0 : index
    %c1 = arith.constant 1 : index
    %c0_16 = arith.constant 0 : index
    %16 = vector.load %arg5[%c0_14, %c0_15, %c1, %c0_16] : memref<1x1x2x128xf32, #tpu.memory_space<vmem>>, vector<1x1x1x128xf32>
    %17 = vector.shape_cast %16 : vector<1x1x1x128xf32> to vector<1x128xf32>
    %18 = vector.shape_cast %15 : vector<1x128xf32> to vector<1x1x1x128xf32>
    tpu.vector_store %arg5[%c0_14, %c0_15, %c1, %c0_16], %18 {strides = array<i32>} : memref<1x1x2x128xf32, #tpu.memory_space<vmem>>, vector<1x1x1x128xf32>,
    return
  }
  func.func @transform_0(%arg0: i32, %arg1: i32) -> (i32, i32, i32) {
    %c0_i32 = arith.constant 0 : i32
    %c0_i32_0 = arith.constant 0 : i32
    return %arg0, %arg1, %c0_i32 : i32, i32, i32
  }
  func.func @transform_1(%arg0: i32, %arg1: i32) -> (i32, i32, i32) {
    %c0_i32 = arith.constant 0 : i32
    %c0_i32_0 = arith.constant 0 : i32
    %c0_i32_1 = arith.constant 0 : i32
    return %arg0, %c0_i32, %c0_i32_0 : i32, i32, i32
  }
  func.func @transform_2(%arg0: i32, %arg1: i32) -> (i32, i32, i32) {
    %c0_i32 = arith.constant 0 : i32
    %c0_i32_0 = arith.constant 0 : i32
    return %arg0, %arg1, %c0_i32 : i32, i32, i32
  }
  func.func @transform_3(%arg0: i32, %arg1: i32) -> (i32, i32, i32, i32) {
    %c0_i32 = arith.constant 0 : i32
    %c0_i32_0 = arith.constant 0 : i32
    %c0_i32_1 = arith.constant 0 : i32
    return %arg0, %arg1, %c0_i32, %c0_i32_0 : i32, i32, i32, i32
  }
}

module attributes {stable_mosaic.version = 11 : i64} {
  func.func @_scale_shift_relu_kernel(%arg0: i32, %arg1: i32, %arg2: memref<1x128x128xf32, #tpu.memory_space<vmem>>, %arg3: memref<1x128xf32, #tpu.memory_space<vmem>>, %arg4: memref<1x128xf32, #tpu.memory_space<vmem>>, %arg5: memref<1x128x128xbf16, #tpu.memory_space<vmem>>) attributes {dimension_semantics = [#tpu.dimension_semantics<parallel>, #tpu.dimension_semantics<parallel>], iteration_bounds = array<i64: 4, 1>, scalar_prefetch = 0 : i64, scratch_operands = 0 : i64, tpu.core_type = #tpu.core_type<tc>, window_params = [{transform_indices = @transform_0, window_bounds = array<i64: 1, 128, 128>}, {pipeline_mode = #tpu.pipeline_mode<synchronous>, transform_indices = @transform_1, window_bounds = array<i64: 1, 128>}, {pipeline_mode = #tpu.pipeline_mode<synchronous>, transform_indices = @transform_2, window_bounds = array<i64: 1, 128>}, {transform_indices = @transform_3, window_bounds = array<i64: 1, 128, 128>}]} {
    %c0 = arith.constant 0 : index
    %c0_0 = arith.constant 0 : index
    %c0_1 = arith.constant 0 : index
    %0 = vector.load %arg2[%c0, %c0_0, %c0_1] : memref<1x128x128xf32, #tpu.memory_space<vmem>>, vector<1x128x128xf32>
    %1 = vector.shape_cast %0 : vector<1x128x128xf32> to vector<128x128xf32>
    %c0_2 = arith.constant 0 : index
    %c0_3 = arith.constant 0 : index
    %2 = vector.load %arg3[%c0_2, %c0_3] : memref<1x128xf32, #tpu.memory_space<vmem>>, vector<1x128xf32>
    %3 = vector.broadcast %2 : vector<1x128xf32> to vector<128x128xf32>
    %4 = arith.mulf %1, %3 : vector<128x128xf32>
    %c0_4 = arith.constant 0 : index
    %c0_5 = arith.constant 0 : index
    %5 = vector.load %arg4[%c0_4, %c0_5] : memref<1x128xf32, #tpu.memory_space<vmem>>, vector<1x128xf32>
    %6 = vector.broadcast %5 : vector<1x128xf32> to vector<128x128xf32>
    %7 = arith.addf %4, %6 : vector<128x128xf32>
    %cst = arith.constant 0.000000e+00 : f32
    %8 = vector.broadcast %cst : f32 to vector<128x128xf32>
    %9 = arith.maximumf %7, %8 : vector<128x128xf32>
    %10 = arith.truncf %9 : vector<128x128xf32> to vector<128x128xbf16>
    %c0_6 = arith.constant 0 : index
    %c0_7 = arith.constant 0 : index
    %c0_8 = arith.constant 0 : index
    %11 = vector.load %arg5[%c0_6, %c0_7, %c0_8] : memref<1x128x128xbf16, #tpu.memory_space<vmem>>, vector<1x128x128xbf16>
    %12 = vector.shape_cast %11 : vector<1x128x128xbf16> to vector<128x128xbf16>
    %13 = vector.shape_cast %10 : vector<128x128xbf16> to vector<1x128x128xbf16>
    tpu.vector_store %arg5[%c0_6, %c0_7, %c0_8], %13 {strides = array<i32>} : memref<1x128x128xbf16, #tpu.memory_space<vmem>>, vector<1x128x128xbf16>,
    return
  }
  func.func @transform_0(%arg0: i32, %arg1: i32) -> (i32, i32, i32) {
    %c0_i32 = arith.constant 0 : i32
    %c0_i32_0 = arith.constant 0 : i32
    return %arg0, %arg1, %c0_i32 : i32, i32, i32
  }
  func.func @transform_1(%arg0: i32, %arg1: i32) -> (i32, i32) {
    %c0_i32 = arith.constant 0 : i32
    %c0_i32_0 = arith.constant 0 : i32
    %c0_i32_1 = arith.constant 0 : i32
    return %c0_i32, %c0_i32_0 : i32, i32
  }
  func.func @transform_2(%arg0: i32, %arg1: i32) -> (i32, i32) {
    %c0_i32 = arith.constant 0 : i32
    %c0_i32_0 = arith.constant 0 : i32
    %c0_i32_1 = arith.constant 0 : i32
    return %c0_i32, %c0_i32_0 : i32, i32
  }
  func.func @transform_3(%arg0: i32, %arg1: i32) -> (i32, i32, i32) {
    %c0_i32 = arith.constant 0 : i32
    %c0_i32_0 = arith.constant 0 : i32
    return %arg0, %arg1, %c0_i32 : i32, i32, i32
  }
}

module attributes {stable_mosaic.version = 11 : i64} {
  func.func @_scale_shift_relu_kernel(%arg0: i32, %arg1: i32, %arg2: memref<1x512x128xf32, #tpu.memory_space<vmem>>, %arg3: memref<1x128xf32, #tpu.memory_space<vmem>>, %arg4: memref<1x128xf32, #tpu.memory_space<vmem>>, %arg5: memref<1x512x128xbf16, #tpu.memory_space<vmem>>) attributes {dimension_semantics = [#tpu.dimension_semantics<parallel>, #tpu.dimension_semantics<parallel>], iteration_bounds = array<i64: 4, 1>, scalar_prefetch = 0 : i64, scratch_operands = 0 : i64, tpu.core_type = #tpu.core_type<tc>, window_params = [{transform_indices = @transform_0, window_bounds = array<i64: 1, 512, 128>}, {pipeline_mode = #tpu.pipeline_mode<synchronous>, transform_indices = @transform_1, window_bounds = array<i64: 1, 128>}, {pipeline_mode = #tpu.pipeline_mode<synchronous>, transform_indices = @transform_2, window_bounds = array<i64: 1, 128>}, {transform_indices = @transform_3, window_bounds = array<i64: 1, 512, 128>}]} {
    %c0 = arith.constant 0 : index
    %c0_0 = arith.constant 0 : index
    %c0_1 = arith.constant 0 : index
    %0 = vector.load %arg2[%c0, %c0_0, %c0_1] : memref<1x512x128xf32, #tpu.memory_space<vmem>>, vector<1x512x128xf32>
    %1 = vector.shape_cast %0 : vector<1x512x128xf32> to vector<512x128xf32>
    %c0_2 = arith.constant 0 : index
    %c0_3 = arith.constant 0 : index
    %2 = vector.load %arg3[%c0_2, %c0_3] : memref<1x128xf32, #tpu.memory_space<vmem>>, vector<1x128xf32>
    %3 = vector.broadcast %2 : vector<1x128xf32> to vector<512x128xf32>
    %4 = arith.mulf %1, %3 : vector<512x128xf32>
    %c0_4 = arith.constant 0 : index
    %c0_5 = arith.constant 0 : index
    %5 = vector.load %arg4[%c0_4, %c0_5] : memref<1x128xf32, #tpu.memory_space<vmem>>, vector<1x128xf32>
    %6 = vector.broadcast %5 : vector<1x128xf32> to vector<512x128xf32>
    %7 = arith.addf %4, %6 : vector<512x128xf32>
    %cst = arith.constant 0.000000e+00 : f32
    %8 = vector.broadcast %cst : f32 to vector<512x128xf32>
    %9 = arith.maximumf %7, %8 : vector<512x128xf32>
    %10 = arith.truncf %9 : vector<512x128xf32> to vector<512x128xbf16>
    %c0_6 = arith.constant 0 : index
    %c0_7 = arith.constant 0 : index
    %c0_8 = arith.constant 0 : index
    %11 = vector.load %arg5[%c0_6, %c0_7, %c0_8] : memref<1x512x128xbf16, #tpu.memory_space<vmem>>, vector<1x512x128xbf16>
    %12 = vector.shape_cast %11 : vector<1x512x128xbf16> to vector<512x128xbf16>
    %13 = vector.shape_cast %10 : vector<512x128xbf16> to vector<1x512x128xbf16>
    tpu.vector_store %arg5[%c0_6, %c0_7, %c0_8], %13 {strides = array<i32>} : memref<1x512x128xbf16, #tpu.memory_space<vmem>>, vector<1x512x128xbf16>,
    return
  }
  func.func @transform_0(%arg0: i32, %arg1: i32) -> (i32, i32, i32) {
    %c0_i32 = arith.constant 0 : i32
    %c0_i32_0 = arith.constant 0 : i32
    return %arg0, %arg1, %c0_i32 : i32, i32, i32
  }
  func.func @transform_1(%arg0: i32, %arg1: i32) -> (i32, i32) {
    %c0_i32 = arith.constant 0 : i32
    %c0_i32_0 = arith.constant 0 : i32
    %c0_i32_1 = arith.constant 0 : i32
    return %c0_i32, %c0_i32_0 : i32, i32
  }
  func.func @transform_2(%arg0: i32, %arg1: i32) -> (i32, i32) {
    %c0_i32 = arith.constant 0 : i32
    %c0_i32_0 = arith.constant 0 : i32
    %c0_i32_1 = arith.constant 0 : i32
    return %c0_i32, %c0_i32_0 : i32, i32
  }
  func.func @transform_3(%arg0: i32, %arg1: i32) -> (i32, i32, i32) {
    %c0_i32 = arith.constant 0 : i32
    %c0_i32_0 = arith.constant 0 : i32
    return %arg0, %arg1, %c0_i32 : i32, i32, i32
  }
}

module attributes {stable_mosaic.version = 11 : i64} {
  func.func @_matmul_stats_kernel(%arg0: i32, %arg1: i32, %arg2: memref<1x512x128xbf16, #tpu.memory_space<vmem>>, %arg3: memref<1x128x128xbf16, #tpu.memory_space<vmem>>, %arg4: memref<1x512x128xf32, #tpu.memory_space<vmem>>, %arg5: memref<1x1x2x128xf32, #tpu.memory_space<vmem>>) attributes {dimension_semantics = [#tpu.dimension_semantics<parallel>, #tpu.dimension_semantics<parallel>], iteration_bounds = array<i64: 4, 1>, scalar_prefetch = 0 : i64, scratch_operands = 0 : i64, tpu.core_type = #tpu.core_type<tc>, window_params = [{transform_indices = @transform_0, window_bounds = array<i64: 1, 512, 128>}, {transform_indices = @transform_1, window_bounds = array<i64: 1, 128, 128>}, {transform_indices = @transform_2, window_bounds = array<i64: 1, 512, 128>}, {transform_indices = @transform_3, window_bounds = array<i64: 1, 1, 2, 128>}]} {
    %c0 = arith.constant 0 : index
    %c0_0 = arith.constant 0 : index
    %c0_1 = arith.constant 0 : index
    %0 = vector.load %arg2[%c0, %c0_0, %c0_1] : memref<1x512x128xbf16, #tpu.memory_space<vmem>>, vector<1x512x128xbf16>
    %1 = vector.shape_cast %0 : vector<1x512x128xbf16> to vector<512x128xbf16>
    %c0_2 = arith.constant 0 : index
    %c0_3 = arith.constant 0 : index
    %c0_4 = arith.constant 0 : index
    %2 = vector.load %arg3[%c0_2, %c0_3, %c0_4] : memref<1x128x128xbf16, #tpu.memory_space<vmem>>, vector<1x128x128xbf16>
    %3 = vector.shape_cast %2 : vector<1x128x128xbf16> to vector<128x128xbf16>
    %cst = arith.constant dense<0.000000e+00> : vector<512x128xf32>
    %4 = tpu.matmul %1, %3, %cst {dimension_numbers = #tpu.dot_dimension_numbers<[1], [0], [0], [1], [0, 0, 1, 1], [], []>} : vector<512x128xbf16>, vector<128x128xbf16>, vector<512x128xf32> -> vector<512x128xf32>
    %c0_5 = arith.constant 0 : index
    %c0_6 = arith.constant 0 : index
    %c0_7 = arith.constant 0 : index
    %5 = vector.load %arg4[%c0_5, %c0_6, %c0_7] : memref<1x512x128xf32, #tpu.memory_space<vmem>>, vector<1x512x128xf32>
    %6 = vector.shape_cast %5 : vector<1x512x128xf32> to vector<512x128xf32>
    %7 = vector.shape_cast %4 : vector<512x128xf32> to vector<1x512x128xf32>
    tpu.vector_store %arg4[%c0_5, %c0_6, %c0_7], %7 {strides = array<i32>} : memref<1x512x128xf32, #tpu.memory_space<vmem>>, vector<1x512x128xf32>,
    %cst_8 = arith.constant dense<0.000000e+00> : vector<128xf32>
    %8 = vector.multi_reduction <add>, %4, %cst_8 [0] : vector<512x128xf32> to vector<128xf32>
    %9 = vector.shape_cast %8 : vector<128xf32> to vector<1x128xf32>
    %c0_9 = arith.constant 0 : index
    %c0_10 = arith.constant 0 : index
    %c0_11 = arith.constant 0 : index
    %c0_12 = arith.constant 0 : index
    %10 = vector.load %arg5[%c0_9, %c0_10, %c0_11, %c0_12] : memref<1x1x2x128xf32, #tpu.memory_space<vmem>>, vector<1x1x1x128xf32>
    %11 = vector.shape_cast %10 : vector<1x1x1x128xf32> to vector<1x128xf32>
    %12 = vector.shape_cast %9 : vector<1x128xf32> to vector<1x1x1x128xf32>
    tpu.vector_store %arg5[%c0_9, %c0_10, %c0_11, %c0_12], %12 {strides = array<i32>} : memref<1x1x2x128xf32, #tpu.memory_space<vmem>>, vector<1x1x1x128xf32>,
    %13 = arith.mulf %4, %4 : vector<512x128xf32>
    %cst_13 = arith.constant dense<0.000000e+00> : vector<128xf32>
    %14 = vector.multi_reduction <add>, %13, %cst_13 [0] : vector<512x128xf32> to vector<128xf32>
    %15 = vector.shape_cast %14 : vector<128xf32> to vector<1x128xf32>
    %c0_14 = arith.constant 0 : index
    %c0_15 = arith.constant 0 : index
    %c1 = arith.constant 1 : index
    %c0_16 = arith.constant 0 : index
    %16 = vector.load %arg5[%c0_14, %c0_15, %c1, %c0_16] : memref<1x1x2x128xf32, #tpu.memory_space<vmem>>, vector<1x1x1x128xf32>
    %17 = vector.shape_cast %16 : vector<1x1x1x128xf32> to vector<1x128xf32>
    %18 = vector.shape_cast %15 : vector<1x128xf32> to vector<1x1x1x128xf32>
    tpu.vector_store %arg5[%c0_14, %c0_15, %c1, %c0_16], %18 {strides = array<i32>} : memref<1x1x2x128xf32, #tpu.memory_space<vmem>>, vector<1x1x1x128xf32>,
    return
  }
  func.func @transform_0(%arg0: i32, %arg1: i32) -> (i32, i32, i32) {
    %c0_i32 = arith.constant 0 : i32
    %c0_i32_0 = arith.constant 0 : i32
    return %arg0, %arg1, %c0_i32 : i32, i32, i32
  }
  func.func @transform_1(%arg0: i32, %arg1: i32) -> (i32, i32, i32) {
    %c0_i32 = arith.constant 0 : i32
    %c0_i32_0 = arith.constant 0 : i32
    %c0_i32_1 = arith.constant 0 : i32
    return %arg0, %c0_i32, %c0_i32_0 : i32, i32, i32
  }
  func.func @transform_2(%arg0: i32, %arg1: i32) -> (i32, i32, i32) {
    %c0_i32 = arith.constant 0 : i32
    %c0_i32_0 = arith.constant 0 : i32
    return %arg0, %arg1, %c0_i32 : i32, i32, i32
  }
  func.func @transform_3(%arg0: i32, %arg1: i32) -> (i32, i32, i32, i32) {
    %c0_i32 = arith.constant 0 : i32
    %c0_i32_0 = arith.constant 0 : i32
    %c0_i32_1 = arith.constant 0 : i32
    return %arg0, %arg1, %c0_i32, %c0_i32_0 : i32, i32, i32, i32
  }
}

module attributes {stable_mosaic.version = 11 : i64} {
  func.func @_matmul_tanh_kernel(%arg0: i32, %arg1: i32, %arg2: memref<1x1024x128xbf16, #tpu.memory_space<vmem>>, %arg3: memref<1x128x128xbf16, #tpu.memory_space<vmem>>, %arg4: memref<1x1024x128xf32, #tpu.memory_space<vmem>>) attributes {dimension_semantics = [#tpu.dimension_semantics<parallel>, #tpu.dimension_semantics<parallel>], iteration_bounds = array<i64: 4, 2>, scalar_prefetch = 0 : i64, scratch_operands = 0 : i64, tpu.core_type = #tpu.core_type<tc>, window_params = [{transform_indices = @transform_0, window_bounds = array<i64: 1, 1024, 128>}, {transform_indices = @transform_1, window_bounds = array<i64: 1, 128, 128>}, {transform_indices = @transform_2, window_bounds = array<i64: 1, 1024, 128>}]} {
    %c0 = arith.constant 0 : index
    %c0_0 = arith.constant 0 : index
    %c0_1 = arith.constant 0 : index
    %0 = vector.load %arg2[%c0, %c0_0, %c0_1] : memref<1x1024x128xbf16, #tpu.memory_space<vmem>>, vector<1x1024x128xbf16>
    %1 = vector.shape_cast %0 : vector<1x1024x128xbf16> to vector<1024x128xbf16>
    %c0_2 = arith.constant 0 : index
    %c0_3 = arith.constant 0 : index
    %c0_4 = arith.constant 0 : index
    %2 = vector.load %arg3[%c0_2, %c0_3, %c0_4] : memref<1x128x128xbf16, #tpu.memory_space<vmem>>, vector<1x128x128xbf16>
    %3 = vector.shape_cast %2 : vector<1x128x128xbf16> to vector<128x128xbf16>
    %cst = arith.constant dense<0.000000e+00> : vector<1024x128xf32>
    %4 = tpu.matmul %1, %3, %cst {dimension_numbers = #tpu.dot_dimension_numbers<[1], [0], [0], [1], [0, 0, 1, 1], [], []>} : vector<1024x128xbf16>, vector<128x128xbf16>, vector<1024x128xf32> -> vector<1024x128xf32>
    %5 = math.tanh %4 : vector<1024x128xf32>
    %c0_5 = arith.constant 0 : index
    %c0_6 = arith.constant 0 : index
    %c0_7 = arith.constant 0 : index
    %6 = vector.load %arg4[%c0_5, %c0_6, %c0_7] : memref<1x1024x128xf32, #tpu.memory_space<vmem>>, vector<1x1024x128xf32>
    %7 = vector.shape_cast %6 : vector<1x1024x128xf32> to vector<1024x128xf32>
    %8 = vector.shape_cast %5 : vector<1024x128xf32> to vector<1x1024x128xf32>
    tpu.vector_store %arg4[%c0_5, %c0_6, %c0_7], %8 {strides = array<i32>} : memref<1x1024x128xf32, #tpu.memory_space<vmem>>, vector<1x1024x128xf32>,
    return
  }
  func.func @transform_0(%arg0: i32, %arg1: i32) -> (i32, i32, i32) {
    %c0_i32 = arith.constant 0 : i32
    %c0_i32_0 = arith.constant 0 : i32
    return %arg0, %arg1, %c0_i32 : i32, i32, i32
  }
  func.func @transform_1(%arg0: i32, %arg1: i32) -> (i32, i32, i32) {
    %c0_i32 = arith.constant 0 : i32
    %c0_i32_0 = arith.constant 0 : i32
    %c0_i32_1 = arith.constant 0 : i32
    return %arg0, %c0_i32, %c0_i32_0 : i32, i32, i32
  }
  func.func @transform_2(%arg0: i32, %arg1: i32) -> (i32, i32, i32) {
    %c0_i32 = arith.constant 0 : i32
    %c0_i32_0 = arith.constant 0 : i32
    return %arg0, %arg1, %c0_i32 : i32, i32, i32
  }
}

</mosaic_0001>

<llo_original>
// kernel: generator_forward.12
$region0: #{generator_forward.12}
  #allocation0 [shape = 'u32[]', space=smem, size = 0x4, offset = 0x4, fixed_abs, tag = 'smem constant byte address 0x4 - core index']
  #allocation1 [shape = 'u32[144,128]{1,0:T(1,128)}', space=vmem, size = 0x12000, scoped, tag = 'internal scratch']
  %s0 = inlined_call_operand.vmem [shape: f32[1,32,128], index: 0, kind: input, shape index: {}]
  %s1 = inlined_call_operand.vmem [shape: f32[1,128], index: 1, kind: input, shape index: {}]
  %s2 = inlined_call_operand.vmem [shape: f32[1,128], index: 2, kind: input, shape index: {}]
  %s3 = inlined_call_operand.vmem [shape: bf16[1,32,128], index: 3, kind: output, shape index: {}]
  %s4 = sld [smem:[#allocation0]]
  $region22: #{generator_forward.12} parent=0
    _
  %s6 = ssub.s32 1, %s4
  %s7 = scalar_select 0, %s6, %s4
  // Predicated region
  $region2: #{generator_forward.12} parent=0 // pred_check
    _
  $region3: #{generator_forward.12} parent=0 // pred_check_branch
    %9 = sbr.rel (0) target = $region5
  $region4: #{generator_forward.12} parent=0 // pred_region
    _
  $region5: #{generator_forward.12} parent=0 // pred_fallthru
    _
  // Predicated region
  $region6: #{generator_forward.12} parent=0 // pred_check
    _
  $region7: #{generator_forward.12} parent=0 // pred_check_branch
    %11 = sbr.rel (0) target = $region9
  $region8: #{generator_forward.12} parent=0 // pred_region
    _
  $region9: #{generator_forward.12} parent=0 // pred_fallthru
    _
  // Predicated region
  $region10: #{generator_forward.12} parent=0 // pred_check
    _
  $region11: #{generator_forward.12} parent=0 // pred_check_branch
    %13 = sbr.rel (0) target = $region13
  $region12: #{generator_forward.12} parent=0 // pred_region
    _
  $region13: #{generator_forward.12} parent=0 // pred_fallthru
    _
  %v14 = vld [vmem:[%s0] sm:$0xff]
  %v15 = vld [vmem:[%s0 + $0x8] sm:$0xff]
  %v16 = vld [vmem:[%s0 + $0x10] sm:$0xff]
  %v17 = vld [vmem:[%s0 + $0x18] sm:$0xff]
  %v18 = vld [vmem:[%s1] sm:$0x1]
  %v20 = vlaneseq
  %v21 = vshrl.u32 %v20, 7
  %v22 = vsub.s32 0, %v21
  %v23 = vrot.slane %v18, %v22
  %v25 = vmul.f32 %v14, %v23
  %v26 = vmul.f32 %v15, %v23
  %v27 = vmul.f32 %v16, %v23
  %v28 = vmul.f32 %v17, %v23
  %v29 = vld [vmem:[%s2] sm:$0x1]
  %v31 = vlaneseq
  %v32 = vshrl.u32 %v31, 7
  %v33 = vsub.s32 0, %v32
  %v34 = vrot.slane %v29, %v33
  %v36 = vadd.f32 %v25, %v34
  %v37 = vadd.f32 %v26, %v34
  %v38 = vadd.f32 %v27, %v34
  %v39 = vadd.f32 %v28, %v34
  %v40 = vmax.f32 %v36, 0.0
  %v41 = vmax.f32 %v37, 0.0
  %v42 = vmax.f32 %v38, 0.0
  %v43 = vmax.f32 %v39, 0.0
  %v44 = vpack.c.bf16 %v41, %v40
  %v45 = vpack.c.bf16 %v43, %v42
  %v48 = vunpack.c.l.b16 %v44
  %v49 = vunpack.c.h.b16 %v44
  %v50 = vunpack.c.l.b16 %v45
  %v51 = vunpack.c.h.b16 %v45
  %v52 = vpack.c.b16 %v48, %v48
  %v53 = vpack.c.b16 %v49, %v49
  %v54 = vpack.c.b16 %v50, %v50
  %v55 = vpack.c.b16 %v51, %v51
  %60 = vst [vmem:[%s3] sm:$0xf] %v52
  %61 = vst [vmem:[%s3 + $0x4] sm:$0xf] %v53
  %62 = vst [vmem:[%s3 + $0x8] sm:$0xf] %v54
  %63 = vst [vmem:[%s3 + $0xc] sm:$0xf] %v55
  // Predicated region
  $region14: #{generator_forward.12} parent=0 // pred_check
    _
  $region15: #{generator_forward.12} parent=0 // pred_check_branch
    %65 = sbr.rel (0) target = $region17
  $region16: #{generator_forward.12} parent=0 // pred_region
    _
  $region17: #{generator_forward.12} parent=0 // pred_fallthru
    _
  // Predicated region
  $region18: #{generator_forward.12} parent=0 // pred_check
    _
  $region19: #{generator_forward.12} parent=0 // pred_check_branch
    %67 = sbr.rel (0) target = $region21
  $region20: #{generator_forward.12} parent=0 // pred_region
    _
  $region21: #{generator_forward.12} parent=0 // pred_fallthru
    _

// kernel: generator_forward.11
$region0: #{generator_forward.11}
  #allocation0 [shape = 'u32[]', space=smem, size = 0x4, offset = 0x4, fixed_abs, tag = 'smem constant byte address 0x4 - core index']
  #allocation1 [shape = 'u32[144,128]{1,0:T(1,128)}', space=vmem, size = 0x12000, scoped, tag = 'internal scratch']
  %s0 = inlined_call_operand.vmem [shape: bf16[1,32,256], index: 0, kind: input, shape index: {}]
  %s1 = inlined_call_operand.vmem [shape: bf16[1,256,128], index: 1, kind: input, shape index: {}]
  %s2 = inlined_call_operand.vmem [shape: f32[1,32,128], index: 2, kind: output, shape index: {0}]
  %s3 = inlined_call_operand.vmem [shape: f32[1,1,2,128], index: 3, kind: output, shape index: {1}]
  %4 = xla_tuple %s2, %s3
  %s5 = sld [smem:[#allocation0]]
  $region26: #{generator_forward.11} parent=0
    _
  %s7 = ssub.s32 1, %s5
  %s8 = scalar_select 0, %s7, %s5
  // Predicated region
  $region2: #{generator_forward.11} parent=0 // pred_check
    _
  $region3: #{generator_forward.11} parent=0 // pred_check_branch
    %10 = sbr.rel (0) target = $region5
  $region4: #{generator_forward.11} parent=0 // pred_region
    _
  $region5: #{generator_forward.11} parent=0 // pred_fallthru
    _
  // Predicated region
  $region6: #{generator_forward.11} parent=0 // pred_check
    _
  $region7: #{generator_forward.11} parent=0 // pred_check_branch
    %12 = sbr.rel (0) target = $region9
  $region8: #{generator_forward.11} parent=0 // pred_region
    _
  $region9: #{generator_forward.11} parent=0 // pred_fallthru
    _
  %v14 = vld [vmem:[%s0] sm:$0xff]
  %v15 = vld [vmem:[%s0 + $0x8] sm:$0xff]
  %v16 = vld [vmem:[%s0 + $0x10] sm:$0xff]
  %v17 = vld [vmem:[%s0 + $0x18] sm:$0xff]
  %v18 = vld [vmem:[%s1] sm:$0xf]
  %v19 = vld [vmem:[%s1 + $0x4] sm:$0xf]
  %v20 = vld [vmem:[%s1 + $0x8] sm:$0xf]
  %v21 = vld [vmem:[%s1 + $0xc] sm:$0xf]
  %v22 = vld [vmem:[%s1 + $0x10] sm:$0xf]
  %v23 = vld [vmem:[%s1 + $0x14] sm:$0xf]
  %v24 = vld [vmem:[%s1 + $0x18] sm:$0xf]
  %v25 = vld [vmem:[%s1 + $0x1c] sm:$0xf]
  %v26 = vld [vmem:[%s1 + $0x20] sm:$0xf]
  %v27 = vld [vmem:[%s1 + $0x24] sm:$0xf]
  %v28 = vld [vmem:[%s1 + $0x28] sm:$0xf]
  %v29 = vld [vmem:[%s1 + $0x2c] sm:$0xf]
  %v30 = vld [vmem:[%s1 + $0x30] sm:$0xf]
  %v31 = vld [vmem:[%s1 + $0x34] sm:$0xf]
  %v32 = vld [vmem:[%s1 + $0x38] sm:$0xf]
  %v33 = vld [vmem:[%s1 + $0x3c] sm:$0xf]
  %v34 = vld [vmem:[%s1 + $0x40] sm:$0xf]
  %v35 = vld [vmem:[%s1 + $0x44] sm:$0xf]
  %v36 = vld [vmem:[%s1 + $0x48] sm:$0xf]
  %v37 = vld [vmem:[%s1 + $0x4c] sm:$0xf]
  %v38 = vld [vmem:[%s1 + $0x50] sm:$0xf]
  %v39 = vld [vmem:[%s1 + $0x54] sm:$0xf]
  %v40 = vld [vmem:[%s1 + $0x58] sm:$0xf]
  %v41 = vld [vmem:[%s1 + $0x5c] sm:$0xf]
  %v42 = vld [vmem:[%s1 + $0x60] sm:$0xf]
  %v43 = vld [vmem:[%s1 + $0x64] sm:$0xf]
  %v44 = vld [vmem:[%s1 + $0x68] sm:$0xf]
  %v45 = vld [vmem:[%s1 + $0x6c] sm:$0xf]
  %v46 = vld [vmem:[%s1 + $0x70] sm:$0xf]
  %v47 = vld [vmem:[%s1 + $0x74] sm:$0xf]
  %v48 = vld [vmem:[%s1 + $0x78] sm:$0xf]
  %v49 = vld [vmem:[%s1 + $0x7c] sm:$0xf]
  %v54 = vunpack.c.l.b16 %v14
  %v55 = vunpack.c.h.b16 %v14
  %v56 = vunpack.c.l.b16 %v15
  %v57 = vunpack.c.h.b16 %v15
  %v58 = vunpack.c.l.b16 %v16
  %v59 = vunpack.c.h.b16 %v16
  %v60 = vunpack.c.l.b16 %v17
  %v61 = vunpack.c.h.b16 %v17
  %v62 = vpack.c.b16 %v56, %v54
  %v63 = vpack.c.b16 %v57, %v55
  %v64 = vpack.c.b16 %v60, %v58
  %v65 = vpack.c.b16 %v61, %v59
  %v102 = vunpack.c.l.b16 %v18
  %v103 = vunpack.c.l.b16 %v19
  %v104 = vunpack.c.l.b16 %v20
  %v105 = vunpack.c.l.b16 %v21
  %v106 = vunpack.c.l.b16 %v22
  %v107 = vunpack.c.l.b16 %v23
  %v108 = vunpack.c.l.b16 %v24
  %v109 = vunpack.c.l.b16 %v25
  %v110 = vunpack.c.l.b16 %v26
  %v111 = vunpack.c.l.b16 %v27
  %v112 = vunpack.c.l.b16 %v28
  %v113 = vunpack.c.l.b16 %v29
  %v114 = vunpack.c.l.b16 %v30
  %v115 = vunpack.c.l.b16 %v31
  %v116 = vunpack.c.l.b16 %v32
  %v117 = vunpack.c.l.b16 %v33
  %v118 = vunpack.c.l.b16 %v34
  %v119 = vunpack.c.l.b16 %v35
  %v120 = vunpack.c.l.b16 %v36
  %v121 = vunpack.c.l.b16 %v37
  %v122 = vunpack.c.l.b16 %v38
  %v123 = vunpack.c.l.b16 %v39
  %v124 = vunpack.c.l.b16 %v40
  %v125 = vunpack.c.l.b16 %v41
  %v126 = vunpack.c.l.b16 %v42
  %v127 = vunpack.c.l.b16 %v43
  %v128 = vunpack.c.l.b16 %v44
  %v129 = vunpack.c.l.b16 %v45
  %v130 = vunpack.c.l.b16 %v46
  %v131 = vunpack.c.l.b16 %v47
  %v132 = vunpack.c.l.b16 %v48
  %v133 = vunpack.c.l.b16 %v49
  %v134 = vpack.c.b16 %v103, %v102
  %v135 = vpack.c.b16 %v105, %v104
  %v136 = vpack.c.b16 %v107, %v106
  %v137 = vpack.c.b16 %v109, %v108
  %v138 = vpack.c.b16 %v111, %v110
  %v139 = vpack.c.b16 %v113, %v112
  %v140 = vpack.c.b16 %v115, %v114
  %v141 = vpack.c.b16 %v117, %v116
  %v142 = vpack.c.b16 %v119, %v118
  %v143 = vpack.c.b16 %v121, %v120
  %v144 = vpack.c.b16 %v123, %v122
  %v145 = vpack.c.b16 %v125, %v124
  %v146 = vpack.c.b16 %v127, %v126
  %v147 = vpack.c.b16 %v129, %v128
  %v148 = vpack.c.b16 %v131, %v130
  %v149 = vpack.c.b16 %v133, %v132
  %166 = vmatprep.subr.bf16.mxu0 0
  %167 = vmatpush1.bf16.msra.mxu0 %v141
  %168 = vmatprep.subr.bf16.mxu0 0
  %169 = vmatpush1.bf16.msra.mxu0 %v140
  %170 = vmatprep.subr.bf16.mxu0 0
  %171 = vmatpush1.bf16.msra.mxu0 %v139
  %172 = vmatprep.subr.bf16.mxu0 0
  %173 = vmatpush1.bf16.msra.mxu0 %v138
  %174 = vmatprep.subr.bf16.mxu0 0
  %175 = vmatpush1.bf16.msra.mxu0 %v137
  %176 = vmatprep.subr.bf16.mxu0 0
  %177 = vmatpush1.bf16.msra.mxu0 %v136
  %178 = vmatprep.subr.bf16.mxu0 0
  %179 = vmatpush1.bf16.msra.mxu0 %v135
  %180 = vmatprep.subr.bf16.mxu0 0
  %181 = vmatpush1.bf16.msra.mxu0 %v134
  %182 = vmatprep.subr.bf16.mxu0 0
  %183 = vmatpush2.bf16.msra.mxu0 %v149
  %184 = vmatprep.subr.bf16.mxu0 0
  %185 = vmatpush2.bf16.msra.mxu0 %v148
  %186 = vmatprep.subr.bf16.mxu0 0
  %187 = vmatpush2.bf16.msra.mxu0 %v147
  %188 = vmatprep.subr.bf16.mxu0 0
  %189 = vmatpush2.bf16.msra.mxu0 %v146
  %190 = vmatprep.subr.bf16.mxu0 0
  %191 = vmatpush2.bf16.msra.mxu0 %v145
  %192 = vmatprep.subr.bf16.mxu0 0
  %193 = vmatpush2.bf16.msra.mxu0 %v144
  %194 = vmatprep.subr.bf16.mxu0 0
  %195 = vmatpush2.bf16.msra.mxu0 %v143
  %196 = vmatprep.subr.bf16.mxu0 0
  %197 = vmatpush2.bf16.msra.mxu0 %v142
  %198 = vmatprep.mubr.bf16.mxu0 %v63
  %199 = vmatmul.mubr.bf16.gmra.mxu0 %v62
  %v200 = vpop.f32.mrf.mxu0
  %v201 = vadd.f32 0.0, %v200
  %v202 = vpop.f32.mrf.mxu0
  %v203 = vpop.f32.mrf.mxu0
  %v204 = vadd.f32 0.0, %v203
  %v205 = vpop.f32.mrf.mxu0
  %206 = vmatprep.mubr.bf16.mxu0 %v65
  %207 = vmatmul.mubr.bf16.gmra.mxu0 %v64
  %v208 = vpop.f32.mrf.mxu0
  %v209 = vadd.f32 0.0, %v208
  %v210 = vpop.f32.mrf.mxu0
  %v211 = vpop.f32.mrf.mxu0
  %v212 = vadd.f32 0.0, %v211
  %v213 = vpop.f32.mrf.mxu0
  %214 = vdwg.mxu0
  %215 = vst [vmem:[%s2] sm:$0xff] %v201
  %216 = vst [vmem:[%s2 + $0x8] sm:$0xff] %v204
  %217 = vst [vmem:[%s2 + $0x10] sm:$0xff] %v209
  %218 = vst [vmem:[%s2 + $0x18] sm:$0xff] %v212
  %v219 = vadd.f32 %v201, %v204
  %v220 = vadd.f32 %v219, %v209
  %v221 = vadd.f32 %v220, %v212
  %v222 = vrot.slane %v221, 4
  %v223 = vadd.f32 %v221, %v222
  %v224 = vrot.slane %v223, 2
  %v225 = vadd.f32 %v223, %v224
  %v226 = vrot.slane %v225, 1
  %v227 = vadd.f32 %v225, %v226
  %228 = vst [vmem:[%s3] sm:$0x1] %v227
  %v229 = vmul.f32 %v201, %v201
  %v230 = vmul.f32 %v204, %v204
  %v231 = vmul.f32 %v209, %v209
  %v232 = vmul.f32 %v212, %v212
  %v233 = vadd.f32 %v229, %v230
  %v234 = vadd.f32 %v233, %v231
  %v235 = vadd.f32 %v234, %v232
  %v236 = vrot.slane %v235, 4
  %v237 = vadd.f32 %v235, %v236
  %v238 = vrot.slane %v237, 2
  %v239 = vadd.f32 %v237, %v238
  %v240 = vrot.slane %v239, 1
  %v241 = vadd.f32 %v239, %v240
  %242 = vst [vmem:[%s3 + $0x1] sm:$0x1] %v241
  // Predicated region
  $region10: #{generator_forward.11} parent=0 // pred_check
    _
  $region11: #{generator_forward.11} parent=0 // pred_check_branch
    %244 = sbr.rel (0) target = $region13
  $region12: #{generator_forward.11} parent=0 // pred_region
    _
  $region13: #{generator_forward.11} parent=0 // pred_fallthru
    _
  // Predicated region
  $region14: #{generator_forward.11} parent=0 // pred_check
    _
  $region15: #{generator_forward.11} parent=0 // pred_check_branch
    %246 = sbr.rel (0) target = $region17
  $region16: #{generator_forward.11} parent=0 // pred_region
    _
  $region17: #{generator_forward.11} parent=0 // pred_fallthru
    _
  // Predicated region
  $region18: #{generator_forward.11} parent=0 // pred_check
    _
  $region19: #{generator_forward.11} parent=0 // pred_check_branch
    %248 = sbr.rel (0) target = $region21
  $region20: #{generator_forward.11} parent=0 // pred_region
    _
  $region21: #{generator_forward.11} parent=0 // pred_fallthru
    _
  // Predicated region
  $region22: #{generator_forward.11} parent=0 // pred_check
    _
  $region23: #{generator_forward.11} parent=0 // pred_check_branch
    %250 = sbr.rel (0) target = $region25
  $region24: #{generator_forward.11} parent=0 // pred_region
    _
  $region25: #{generator_forward.11} parent=0 // pred_fallthru
    _

// kernel: generator_forward.13
$region0: #{generator_forward.13}
  #allocation0 [shape = 'u32[]', space=smem, size = 0x4, offset = 0x4, fixed_abs, tag = 'smem constant byte address 0x4 - core index']
  #allocation1 [shape = 'u32[144,128]{1,0:T(1,128)}', space=vmem, size = 0x12000, scoped, tag = 'internal scratch']
  %s0 = inlined_call_operand.vmem [shape: bf16[1,32,128], index: 0, kind: input, shape index: {}]
  %s1 = inlined_call_operand.vmem [shape: bf16[1,128,128], index: 1, kind: input, shape index: {}]
  %s2 = inlined_call_operand.vmem [shape: f32[1,32,128], index: 2, kind: output, shape index: {0}]
  %s3 = inlined_call_operand.vmem [shape: f32[1,1,2,128], index: 3, kind: output, shape index: {1}]
  %4 = xla_tuple %s2, %s3
  %s5 = sld [smem:[#allocation0]]
  $region26: #{generator_forward.13} parent=0
    _
  %s7 = ssub.s32 1, %s5
  %s8 = scalar_select 0, %s7, %s5
  // Predicated region
  $region2: #{generator_forward.13} parent=0 // pred_check
    _
  $region3: #{generator_forward.13} parent=0 // pred_check_branch
    %10 = sbr.rel (0) target = $region5
  $region4: #{generator_forward.13} parent=0 // pred_region
    _
  $region5: #{generator_forward.13} parent=0 // pred_fallthru
    _
  // Predicated region
  $region6: #{generator_forward.13} parent=0 // pred_check
    _
  $region7: #{generator_forward.13} parent=0 // pred_check_branch
    %12 = sbr.rel (0) target = $region9
  $region8: #{generator_forward.13} parent=0 // pred_region
    _
  $region9: #{generator_forward.13} parent=0 // pred_fallthru
    _
  %v14 = vld [vmem:[%s0] sm:$0xf]
  %v15 = vld [vmem:[%s0 + $0x4] sm:$0xf]
  %v16 = vld [vmem:[%s0 + $0x8] sm:$0xf]
  %v17 = vld [vmem:[%s0 + $0xc] sm:$0xf]
  %v18 = vld [vmem:[%s1] sm:$0xf]
  %v19 = vld [vmem:[%s1 + $0x4] sm:$0xf]
  %v20 = vld [vmem:[%s1 + $0x8] sm:$0xf]
  %v21 = vld [vmem:[%s1 + $0xc] sm:$0xf]
  %v22 = vld [vmem:[%s1 + $0x10] sm:$0xf]
  %v23 = vld [vmem:[%s1 + $0x14] sm:$0xf]
  %v24 = vld [vmem:[%s1 + $0x18] sm:$0xf]
  %v25 = vld [vmem:[%s1 + $0x1c] sm:$0xf]
  %v26 = vld [vmem:[%s1 + $0x20] sm:$0xf]
  %v27 = vld [vmem:[%s1 + $0x24] sm:$0xf]
  %v28 = vld [vmem:[%s1 + $0x28] sm:$0xf]
  %v29 = vld [vmem:[%s1 + $0x2c] sm:$0xf]
  %v30 = vld [vmem:[%s1 + $0x30] sm:$0xf]
  %v31 = vld [vmem:[%s1 + $0x34] sm:$0xf]
  %v32 = vld [vmem:[%s1 + $0x38] sm:$0xf]
  %v33 = vld [vmem:[%s1 + $0x3c] sm:$0xf]
  %v38 = vunpack.c.l.b16 %v14
  %v39 = vunpack.c.l.b16 %v15
  %v40 = vunpack.c.l.b16 %v16
  %v41 = vunpack.c.l.b16 %v17
  %v42 = vpack.c.b16 %v39, %v38
  %v43 = vpack.c.b16 %v41, %v40
  %v62 = vunpack.c.l.b16 %v18
  %v63 = vunpack.c.l.b16 %v19
  %v64 = vunpack.c.l.b16 %v20
  %v65 = vunpack.c.l.b16 %v21
  %v66 = vunpack.c.l.b16 %v22
  %v67 = vunpack.c.l.b16 %v23
  %v68 = vunpack.c.l.b16 %v24
  %v69 = vunpack.c.l.b16 %v25
  %v70 = vunpack.c.l.b16 %v26
  %v71 = vunpack.c.l.b16 %v27
  %v72 = vunpack.c.l.b16 %v28
  %v73 = vunpack.c.l.b16 %v29
  %v74 = vunpack.c.l.b16 %v30
  %v75 = vunpack.c.l.b16 %v31
  %v76 = vunpack.c.l.b16 %v32
  %v77 = vunpack.c.l.b16 %v33
  %v78 = vpack.c.b16 %v63, %v62
  %v79 = vpack.c.b16 %v65, %v64
  %v80 = vpack.c.b16 %v67, %v66
  %v81 = vpack.c.b16 %v69, %v68
  %v82 = vpack.c.b16 %v71, %v70
  %v83 = vpack.c.b16 %v73, %v72
  %v84 = vpack.c.b16 %v75, %v74
  %v85 = vpack.c.b16 %v77, %v76
  %94 = vmatprep.subr.bf16.mxu0 0
  %95 = vmatpush1.bf16.msra.mxu0 %v85
  %96 = vmatprep.subr.bf16.mxu0 0
  %97 = vmatpush1.bf16.msra.mxu0 %v84
  %98 = vmatprep.subr.bf16.mxu0 0
  %99 = vmatpush1.bf16.msra.mxu0 %v83
  %100 = vmatprep.subr.bf16.mxu0 0
  %101 = vmatpush1.bf16.msra.mxu0 %v82
  %102 = vmatprep.subr.bf16.mxu0 0
  %103 = vmatpush1.bf16.msra.mxu0 %v81
  %104 = vmatprep.subr.bf16.mxu0 0
  %105 = vmatpush1.bf16.msra.mxu0 %v80
  %106 = vmatprep.subr.bf16.mxu0 0
  %107 = vmatpush1.bf16.msra.mxu0 %v79
  %108 = vmatprep.subr.bf16.mxu0 0
  %109 = vmatpush1.bf16.msra.mxu0 %v78
  %110 = vmatprep.subr.bf16.mxu0 0
  %111 = vmatpush2.bf16.msra.mxu0 0
  %112 = vmatprep.subr.bf16.mxu0 0
  %113 = vmatpush2.bf16.msra.mxu0 0
  %114 = vmatprep.subr.bf16.mxu0 0
  %115 = vmatpush2.bf16.msra.mxu0 0
  %116 = vmatprep.subr.bf16.mxu0 0
  %117 = vmatpush2.bf16.msra.mxu0 0
  %118 = vmatprep.subr.bf16.mxu0 0
  %119 = vmatpush2.bf16.msra.mxu0 0
  %120 = vmatprep.subr.bf16.mxu0 0
  %121 = vmatpush2.bf16.msra.mxu0 0
  %122 = vmatprep.subr.bf16.mxu0 0
  %123 = vmatpush2.bf16.msra.mxu0 0
  %124 = vmatprep.subr.bf16.mxu0 0
  %125 = vmatpush2.bf16.msra.mxu0 0
  %126 = vmatprep.mubr.bf16.mxu0 0
  %127 = vmatmul.mubr.bf16.gmra.mxu0 %v42
  %v128 = vpop.f32.mrf.mxu0
  %v129 = vadd.f32 0.0, %v128
  %v130 = vpop.f32.mrf.mxu0
  %v131 = vpop.f32.mrf.mxu0
  %v132 = vadd.f32 0.0, %v131
  %v133 = vpop.f32.mrf.mxu0
  %134 = vmatprep.mubr.bf16.mxu0 0
  %135 = vmatmul.mubr.bf16.gmra.mxu0 %v43
  %v136 = vpop.f32.mrf.mxu0
  %v137 = vadd.f32 0.0, %v136
  %v138 = vpop.f32.mrf.mxu0
  %v139 = vpop.f32.mrf.mxu0
  %v140 = vadd.f32 0.0, %v139
  %v141 = vpop.f32.mrf.mxu0
  %142 = vdwg.mxu0
  %143 = vst [vmem:[%s2] sm:$0xff] %v129
  %144 = vst [vmem:[%s2 + $0x8] sm:$0xff] %v132
  %145 = vst [vmem:[%s2 + $0x10] sm:$0xff] %v137
  %146 = vst [vmem:[%s2 + $0x18] sm:$0xff] %v140
  %v147 = vadd.f32 %v129, %v132
  %v148 = vadd.f32 %v147, %v137
  %v149 = vadd.f32 %v148, %v140
  %v150 = vrot.slane %v149, 4
  %v151 = vadd.f32 %v149, %v150
  %v152 = vrot.slane %v151, 2
  %v153 = vadd.f32 %v151, %v152
  %v154 = vrot.slane %v153, 1
  %v155 = vadd.f32 %v153, %v154
  %156 = vst [vmem:[%s3] sm:$0x1] %v155
  %v157 = vmul.f32 %v129, %v129
  %v158 = vmul.f32 %v132, %v132
  %v159 = vmul.f32 %v137, %v137
  %v160 = vmul.f32 %v140, %v140
  %v161 = vadd.f32 %v157, %v158
  %v162 = vadd.f32 %v161, %v159
  %v163 = vadd.f32 %v162, %v160
  %v164 = vrot.slane %v163, 4
  %v165 = vadd.f32 %v163, %v164
  %v166 = vrot.slane %v165, 2
  %v167 = vadd.f32 %v165, %v166
  %v168 = vrot.slane %v167, 1
  %v169 = vadd.f32 %v167, %v168
  %170 = vst [vmem:[%s3 + $0x1] sm:$0x1] %v169
  // Predicated region
  $region10: #{generator_forward.13} parent=0 // pred_check
    _
  $region11: #{generator_forward.13} parent=0 // pred_check_branch
    %172 = sbr.rel (0) target = $region13
  $region12: #{generator_forward.13} parent=0 // pred_region
    _
  $region13: #{generator_forward.13} parent=0 // pred_fallthru
    _
  // Predicated region
  $region14: #{generator_forward.13} parent=0 // pred_check
    _
  $region15: #{generator_forward.13} parent=0 // pred_check_branch
    %174 = sbr.rel (0) target = $region17
  $region16: #{generator_forward.13} parent=0 // pred_region
    _
  $region17: #{generator_forward.13} parent=0 // pred_fallthru
    _
  // Predicated region
  $region18: #{generator_forward.13} parent=0 // pred_check
    _
  $region19: #{generator_forward.13} parent=0 // pred_check_branch
    %176 = sbr.rel (0) target = $region21
  $region20: #{generator_forward.13} parent=0 // pred_region
    _
  $region21: #{generator_forward.13} parent=0 // pred_fallthru
    _
  // Predicated region
  $region22: #{generator_forward.13} parent=0 // pred_check
    _
  $region23: #{generator_forward.13} parent=0 // pred_check_branch
    %178 = sbr.rel (0) target = $region25
  $region24: #{generator_forward.13} parent=0 // pred_region
    _
  $region25: #{generator_forward.13} parent=0 // pred_fallthru
    _

// kernel: generator_forward.15
$region0: #{generator_forward.15}
  #allocation0 [shape = 'u32[]', space=smem, size = 0x4, offset = 0x4, fixed_abs, tag = 'smem constant byte address 0x4 - core index']
  #allocation1 [shape = 'u32[144,128]{1,0:T(1,128)}', space=vmem, size = 0x12000, scoped, tag = 'internal scratch']
  %s0 = inlined_call_operand.vmem [shape: bf16[4,32,256], index: 0, kind: input, shape index: {}]
  %s1 = inlined_call_operand.vmem [shape: bf16[4,256,128], index: 1, kind: input, shape index: {}]
  %s2 = inlined_call_operand.vmem [shape: f32[4,32,128], index: 2, kind: output, shape index: {0}]
  %s3 = inlined_call_operand.vmem [shape: f32[4,1,2,128], index: 3, kind: output, shape index: {1}]
  %4 = xla_tuple %s2, %s3
  %s5 = sld [smem:[#allocation0]]
  $region49: #{generator_forward.15} parent=0
    _
  %s7 = ssub.s32 1, %s5
  %s8 = scalar_select 0, %s7, %s5
  loop: start=0, step=1, limit=6
  $region2: #{generator_forward.15} parent=0 // loop_pre_header
    _
  $region3: #{generator_forward.15} parent=0 // loop_header
    %s10 = sphi 0, %s14
    %p11 = scmp.ge.s32.totalorder %s10, 6
    %s17 = sphi 0, %s29
    %s18 = sphi 0, %s25
    %s19 = sphi 0, %s17
    %s20 = sphi 0, %s18
    %s21 = sphi 0, %s19
    %s22 = sphi 0, %s20
    %s34 = sphi 0, %s36
    %s37 = sphi 0, %s34
    %s38 = sphi 0, %s37
    %s54 = sphi 0, %s38
    %s60 = sphi 0, %s62
    %s63 = sphi 0, %s60
    %s64 = sphi 0, %s63
    %s80 = sphi 0, %s64
    %s88 = sphi 0, %s90
    %s91 = sphi 0, %s88
    %s92 = sphi 0, %s91
    %s108 = sphi 0, %s92
    %s116 = sphi 0, %s118
    %s119 = sphi 0, %s116
    %s120 = sphi 0, %s119
    %s136 = sphi 0, %s120
  $region4: #{generator_forward.15} parent=0 // loop_header_branch
    %13 = sbr.rel (%p11) target = $region8
  $region5: #{generator_forward.15} parent=0 // loop_body
    %s15 = ssub.s32 %s10, 1
    %s16 = ssub.s32 %s10, 2
    %s23 = sadd.s32 1, %s18
    %p24 = scmp.ge.s32.totalorder %s23, 1
    %s25 = scalar_select %p24, 0, %s23
    %s26 = sadd.s32 1, %s17
    %s27 = scalar_select %p24, %s26, %s17
    %p28 = scmp.ge.s32.totalorder %s27, 4
    %s29 = scalar_select %p28, 0, %s27
    %s30 = ssub.s32 %s17, %s29
    %s31 = ssub.s32 %s18, %s25
    %s32 = sor.u32 %s30, %s31
    %p33 = scmp.eq.s32.totalorder %s32, 0
    %s35 = sadd.s32 %s34, 1
    %s36 = scalar_select %p33, %s34, %s35
    %p39 = pneg %p33
    %p40 = scmp.eq.s32.totalorder %s10, 3
    %p41 = por %p39, %p40
    %p42 = scmp.ne.s32.totalorder %s34, %s37
    %p43 = scmp.eq.s32.totalorder %s10, 0
    %p44 = por %p42, %p43
    %p45 = scmp.ne.s32.totalorder %s34, %s37
    %p46 = scmp.eq.s32.totalorder %s15, 3
    %p47 = por %p45, %p46
    %p48 = scmp.ne.s32.totalorder %s37, %s38
    %p49 = scmp.eq.s32.totalorder %s15, 0
    %p50 = por %p48, %p49
    %p51 = scmp.ne.s32.totalorder %s37, %s38
    %p52 = scmp.eq.s32.totalorder %s16, 3
    %p53 = por %p51, %p52
    %p55 = scmp.ne.s32.totalorder %s38, %s54
    %p56 = scmp.eq.s32.totalorder %s16, 0
    %p57 = por %p55, %p56
    %s58 = ssub.s32 %s17, %s29
    %p59 = scmp.eq.s32.totalorder %s58, 0
    %s61 = sadd.s32 %s60, 1
    %s62 = scalar_select %p59, %s60, %s61
    %p65 = pneg %p59
    %p66 = scmp.eq.s32.totalorder %s10, 3
    %p67 = por %p65, %p66
    %p68 = scmp.ne.s32.totalorder %s60, %s63
    %p69 = scmp.eq.s32.totalorder %s10, 0
    %p70 = por %p68, %p69
    %p71 = scmp.ne.s32.totalorder %s60, %s63
    %p72 = scmp.eq.s32.totalorder %s15, 3
    %p73 = por %p71, %p72
    %p74 = scmp.ne.s32.totalorder %s63, %s64
    %p75 = scmp.eq.s32.totalorder %s15, 0
    %p76 = por %p74, %p75
    %p77 = scmp.ne.s32.totalorder %s63, %s64
    %p78 = scmp.eq.s32.totalorder %s16, 3
    %p79 = por %p77, %p78
    %p81 = scmp.ne.s32.totalorder %s64, %s80
    %p82 = scmp.eq.s32.totalorder %s16, 0
    %p83 = por %p81, %p82
    %s84 = ssub.s32 %s17, %s29
    %s85 = ssub.s32 %s18, %s25
    %s86 = sor.u32 %s84, %s85
    %p87 = scmp.eq.s32.totalorder %s86, 0
    %s89 = sadd.s32 %s88, 1
    %s90 = scalar_select %p87, %s88, %s89
    %p93 = pneg %p87
    %p94 = scmp.eq.s32.totalorder %s10, 3
    %p95 = por %p93, %p94
    %p96 = scmp.ne.s32.totalorder %s88, %s91
    %p97 = scmp.eq.s32.totalorder %s10, 0
    %p98 = por %p96, %p97
    %p99 = scmp.ne.s32.totalorder %s88, %s91
    %p100 = scmp.eq.s32.totalorder %s15, 3
    %p101 = por %p99, %p100
    %p102 = scmp.ne.s32.totalorder %s91, %s92
    %p103 = scmp.eq.s32.totalorder %s15, 0
    %p104 = por %p102, %p103
    %p105 = scmp.ne.s32.totalorder %s91, %s92
    %p106 = scmp.eq.s32.totalorder %s16, 3
    %p107 = por %p105, %p106
    %p109 = scmp.ne.s32.totalorder %s92, %s108
    %p110 = scmp.eq.s32.totalorder %s16, 0
    %p111 = por %p109, %p110
    %s112 = ssub.s32 %s17, %s29
    %s113 = ssub.s32 %s18, %s25
    %s114 = sor.u32 %s112, %s113
    %p115 = scmp.eq.s32.totalorder %s114, 0
    %s117 = sadd.s32 %s116, 1
    %s118 = scalar_select %p115, %s116, %s117
    %p121 = pneg %p115
    %p122 = scmp.eq.s32.totalorder %s10, 3
    %p123 = por %p121, %p122
    %p124 = scmp.ne.s32.totalorder %s116, %s119
    %p125 = scmp.eq.s32.totalorder %s10, 0
    %p126 = por %p124, %p125
    %p127 = scmp.ne.s32.totalorder %s116, %s119
    %p128 = scmp.eq.s32.totalorder %s15, 3
    %p129 = por %p127, %p128
    %p130 = scmp.ne.s32.totalorder %s119, %s120
    %p131 = scmp.eq.s32.totalorder %s15, 0
    %p132 = por %p130, %p131
    %p133 = scmp.ne.s32.totalorder %s119, %s120
    %p134 = scmp.eq.s32.totalorder %s16, 3
    %p135 = por %p133, %p134
    %p137 = scmp.ne.s32.totalorder %s120, %s136
    %p138 = scmp.eq.s32.totalorder %s16, 0
    %p139 = por %p137, %p138
    %p140 = scmp.le.s32.totalorder 1, %s10
    %p141 = scmp.lt.s32.totalorder %s10, 5
    %p142 = pnand %p140, %p141
    %p143 = pneg %p142
    // Predicated region
    $region9: #{generator_forward.15} parent=5 // pred_check
      _
    $region10: #{generator_forward.15} parent=5 // pred_check_branch
      %145 = sbr.rel (%p142) target = $region12
    $region11: #{generator_forward.15} parent=5 // pred_region
      %s146 = ssub.s32 %s10, 1
    $region12: #{generator_forward.15} parent=5 // pred_fallthru
      _
    %p147 = scmp.lt.s32.totalorder %s10, 4
    // Predicated region
    $region13: #{generator_forward.15} parent=5 // pred_check
      %p148 = pneg %p147
    $region14: #{generator_forward.15} parent=5 // pred_check_branch
      %150 = sbr.rel (%p148) target = $region16
    $region15: #{generator_forward.15} parent=5 // pred_region
      // Predicated region
      $region17: #{generator_forward.15} parent=15 // pred_check
        %p151 = pneg %p44
      $region18: #{generator_forward.15} parent=15 // pred_check_branch
        %153 = sbr.rel (%p151) target = $region20
      $region19: #{generator_forward.15} parent=15 // pred_region
        %s154 = smul.u32 4, %s18
        %p155 = scmp.lt.s32.totalorder %s17, 3
        %s156 = scalar_select %p155, %s17, 3
        %p157 = scmp.lt.s32.totalorder %s154, 3
        %s158 = scalar_select %p157, %s154, 3
        %s159 = smul.addr %s158, 2
        %s160 = smul.addr %s156, 8
        %s161 = sadd.s32 %s159, %s160
        %s162 = smul.addr %s161, 4
        %s163 = scalar_lea.vmem %s0, %s162
        %s164 = smul.u32 4, %s18
      $region20: #{generator_forward.15} parent=15 // pred_fallthru
        _
      // Predicated region
      $region21: #{generator_forward.15} parent=15 // pred_check
        %p165 = pneg %p70
      $region22: #{generator_forward.15} parent=15 // pred_check_branch
        %167 = sbr.rel (%p165) target = $region24
      $region23: #{generator_forward.15} parent=15 // pred_region
        %p168 = scmp.lt.s32.totalorder %s17, 3
        %s169 = scalar_select %p168, %s17, 3
        %s170 = smul.addr %s169, 32
        %s171 = smul.addr %s170, 4
        %s172 = scalar_lea.vmem %s1, %s171
      $region24: #{generator_forward.15} parent=15 // pred_fallthru
        _
    $region16: #{generator_forward.15} parent=5 // pred_fallthru
      _
    %p173 = scmp.le.s32.totalorder 1, %s10
    %p174 = scmp.lt.s32.totalorder %s10, 5
    %p175 = pnand %p173, %p174
    %p176 = pneg %p175
    // Predicated region
    $region25: #{generator_forward.15} parent=5 // pred_check
      _
    $region26: #{generator_forward.15} parent=5 // pred_check_branch
      %178 = sbr.rel (%p175) target = $region28
    $region27: #{generator_forward.15} parent=5 // pred_region
      %s179 = ssub.s32 %s10, 1
      %s180 = smul.u32 4, %s20
      %p181 = scmp.lt.s32.totalorder %s19, 3
      %s182 = scalar_select %p181, %s19, 3
      %p183 = scmp.lt.s32.totalorder %s180, 3
      %s184 = scalar_select %p183, %s180, 3
      %s185 = smul.addr %s184, 2
      %s186 = smul.addr %s182, 8
      %s187 = sadd.s32 %s185, %s186
      %s188 = smul.addr %s187, 4
      %s189 = scalar_lea.vmem %s0, %s188
      %p190 = pneg %p50
      %p191 = pneg %p47
      %p192 = scmp.lt.s32.totalorder %s19, 3
      %s193 = scalar_select %p192, %s19, 3
      %s194 = smul.addr %s193, 32
      %s195 = smul.addr %s194, 4
      %s196 = scalar_lea.vmem %s1, %s195
      %p197 = pneg %p76
      %p198 = pneg %p73
      %p199 = pneg %p104
      %p200 = pneg %p101
      %s201 = smul.u32 4, %s20
      %p202 = scmp.lt.s32.totalorder %s19, 3
      %s203 = scalar_select %p202, %s19, 3
      %p204 = scmp.lt.s32.totalorder %s201, 3
      %s205 = scalar_select %p204, %s201, 3
      %s206 = smul.addr %s203, 4
      %s207 = sadd.s32 %s205, %s206
      %s208 = smul.addr %s207, 8
      %s209 = scalar_lea.vmem %s2, %s208
      %p210 = pneg %p132
      %p211 = pneg %p129
      %p212 = scmp.lt.s32.totalorder %s19, 3
      %s213 = scalar_select %p212, %s19, 3
      %p214 = scmp.lt.s32.totalorder %s20, 0
      %s215 = scalar_select %p214, %s20, 0
      %s216 = sadd.s32 %s215, %s213
      %s217 = smul.addr %s216, 2
      %s218 = scalar_lea.vmem %s3, %s217
      %s219 = smul.u32 4, %s20
      %p220 = scmp.lt.s32.totalorder %s19, 3
      %s221 = scalar_select %p220, %s19, 3
      %p222 = scmp.lt.s32.totalorder %s219, 3
      %s223 = scalar_select %p222, %s219, 3
      %s224 = smul.addr %s223, 2
      %s225 = smul.addr %s221, 8
      %s226 = sadd.s32 %s224, %s225
      %s227 = smul.addr %s226, 4
      %s228 = scalar_lea.vmem %s0, %s227
      %s229 = smul.u32 4, %s20
      %p230 = scmp.lt.s32.totalorder %s19, 3
      %s231 = scalar_select %p230, %s19, 3
      %s232 = smul.addr %s231, 32
      %s233 = smul.addr %s232, 4
      %s234 = scalar_lea.vmem %s1, %s233
      %s235 = smul.u32 4, %s20
      %p236 = scmp.lt.s32.totalorder %s19, 3
      %s237 = scalar_select %p236, %s19, 3
      %p238 = scmp.lt.s32.totalorder %s235, 3
      %s239 = scalar_select %p238, %s235, 3
      %s240 = smul.addr %s237, 4
      %s241 = sadd.s32 %s239, %s240
      %s242 = smul.addr %s241, 8
      %s243 = scalar_lea.vmem %s2, %s242
      %s244 = smul.u32 4, %s20
      %p245 = scmp.lt.s32.totalorder %s19, 3
      %s246 = scalar_select %p245, %s19, 3
      %p247 = scmp.lt.s32.totalorder %s20, 0
      %s248 = scalar_select %p247, %s20, 0
      %s249 = sadd.s32 %s248, %s246
      %s250 = smul.addr %s249, 2
      %s251 = scalar_lea.vmem %s3, %s250
      %v253 = vld [vmem:[%s228] sm:$0xff]
      %v254 = vld [vmem:[%s228 + $0x8] sm:$0xff]
      %v255 = vld [vmem:[%s228 + $0x10] sm:$0xff]
      %v256 = vld [vmem:[%s228 + $0x18] sm:$0xff]
      %v257 = vld [vmem:[%s234] sm:$0xf]
      %v258 = vld [vmem:[%s234 + $0x4] sm:$0xf]
      %v259 = vld [vmem:[%s234 + $0x8] sm:$0xf]
      %v260 = vld [vmem:[%s234 + $0xc] sm:$0xf]
      %v261 = vld [vmem:[%s234 + $0x10] sm:$0xf]
      %v262 = vld [vmem:[%s234 + $0x14] sm:$0xf]
      %v263 = vld [vmem:[%s234 + $0x18] sm:$0xf]
      %v264 = vld [vmem:[%s234 + $0x1c] sm:$0xf]
      %v265 = vld [vmem:[%s234 + $0x20] sm:$0xf]
      %v266 = vld [vmem:[%s234 + $0x24] sm:$0xf]
      %v267 = vld [vmem:[%s234 + $0x28] sm:$0xf]
      %v268 = vld [vmem:[%s234 + $0x2c] sm:$0xf]
      %v269 = vld [vmem:[%s234 + $0x30] sm:$0xf]
      %v270 = vld [vmem:[%s234 + $0x34] sm:$0xf]
      %v271 = vld [vmem:[%s234 + $0x38] sm:$0xf]
      %v272 = vld [vmem:[%s234 + $0x3c] sm:$0xf]
      %v273 = vld [vmem:[%s234 + $0x40] sm:$0xf]
      %v274 = vld [vmem:[%s234 + $0x44] sm:$0xf]
      %v275 = vld [vmem:[%s234 + $0x48] sm:$0xf]
      %v276 = vld [vmem:[%s234 + $0x4c] sm:$0xf]
      %v277 = vld [vmem:[%s234 + $0x50] sm:$0xf]
      %v278 = vld [vmem:[%s234 + $0x54] sm:$0xf]
      %v279 = vld [vmem:[%s234 + $0x58] sm:$0xf]
      %v280 = vld [vmem:[%s234 + $0x5c] sm:$0xf]
      %v281 = vld [vmem:[%s234 + $0x60] sm:$0xf]
      %v282 = vld [vmem:[%s234 + $0x64] sm:$0xf]
      %v283 = vld [vmem:[%s234 + $0x68] sm:$0xf]
      %v284 = vld [vmem:[%s234 + $0x6c] sm:$0xf]
      %v285 = vld [vmem:[%s234 + $0x70] sm:$0xf]
      %v286 = vld [vmem:[%s234 + $0x74] sm:$0xf]
      %v287 = vld [vmem:[%s234 + $0x78] sm:$0xf]
      %v288 = vld [vmem:[%s234 + $0x7c] sm:$0xf]
      %v293 = vunpack.c.l.b16 %v253
      %v294 = vunpack.c.h.b16 %v253
      %v295 = vunpack.c.l.b16 %v254
      %v296 = vunpack.c.h.b16 %v254
      %v297 = vunpack.c.l.b16 %v255
      %v298 = vunpack.c.h.b16 %v255
      %v299 = vunpack.c.l.b16 %v256
      %v300 = vunpack.c.h.b16 %v256
      %v301 = vpack.c.b16 %v295, %v293
      %v302 = vpack.c.b16 %v296, %v294
      %v303 = vpack.c.b16 %v299, %v297
      %v304 = vpack.c.b16 %v300, %v298
      %v341 = vunpack.c.l.b16 %v257
      %v342 = vunpack.c.l.b16 %v258
      %v343 = vunpack.c.l.b16 %v259
      %v344 = vunpack.c.l.b16 %v260
      %v345 = vunpack.c.l.b16 %v261
      %v346 = vunpack.c.l.b16 %v262
      %v347 = vunpack.c.l.b16 %v263
      %v348 = vunpack.c.l.b16 %v264
      %v349 = vunpack.c.l.b16 %v265
      %v350 = vunpack.c.l.b16 %v266
      %v351 = vunpack.c.l.b16 %v267
      %v352 = vunpack.c.l.b16 %v268
      %v353 = vunpack.c.l.b16 %v269
      %v354 = vunpack.c.l.b16 %v270
      %v355 = vunpack.c.l.b16 %v271
      %v356 = vunpack.c.l.b16 %v272
      %v357 = vunpack.c.l.b16 %v273
      %v358 = vunpack.c.l.b16 %v274
      %v359 = vunpack.c.l.b16 %v275
      %v360 = vunpack.c.l.b16 %v276
      %v361 = vunpack.c.l.b16 %v277
      %v362 = vunpack.c.l.b16 %v278
      %v363 = vunpack.c.l.b16 %v279
      %v364 = vunpack.c.l.b16 %v280
      %v365 = vunpack.c.l.b16 %v281
      %v366 = vunpack.c.l.b16 %v282
      %v367 = vunpack.c.l.b16 %v283
      %v368 = vunpack.c.l.b16 %v284
      %v369 = vunpack.c.l.b16 %v285
      %v370 = vunpack.c.l.b16 %v286
      %v371 = vunpack.c.l.b16 %v287
      %v372 = vunpack.c.l.b16 %v288
      %v373 = vpack.c.b16 %v342, %v341
      %v374 = vpack.c.b16 %v344, %v343
      %v375 = vpack.c.b16 %v346, %v345
      %v376 = vpack.c.b16 %v348, %v347
      %v377 = vpack.c.b16 %v350, %v349
      %v378 = vpack.c.b16 %v352, %v351
      %v379 = vpack.c.b16 %v354, %v353
      %v380 = vpack.c.b16 %v356, %v355
      %v381 = vpack.c.b16 %v358, %v357
      %v382 = vpack.c.b16 %v360, %v359
      %v383 = vpack.c.b16 %v362, %v361
      %v384 = vpack.c.b16 %v364, %v363
      %v385 = vpack.c.b16 %v366, %v365
      %v386 = vpack.c.b16 %v368, %v367
      %v387 = vpack.c.b16 %v370, %v369
      %v388 = vpack.c.b16 %v372, %v371
      %405 = vmatprep.subr.bf16.mxu0 0
      %406 = vmatpush1.bf16.msra.mxu0 %v380
      %407 = vmatprep.subr.bf16.mxu0 0
      %408 = vmatpush1.bf16.msra.mxu0 %v379
      %409 = vmatprep.subr.bf16.mxu0 0
      %410 = vmatpush1.bf16.msra.mxu0 %v378
      %411 = vmatprep.subr.bf16.mxu0 0
      %412 = vmatpush1.bf16.msra.mxu0 %v377
      %413 = vmatprep.subr.bf16.mxu0 0
      %414 = vmatpush1.bf16.msra.mxu0 %v376
      %415 = vmatprep.subr.bf16.mxu0 0
      %416 = vmatpush1.bf16.msra.mxu0 %v375
      %417 = vmatprep.subr.bf16.mxu0 0
      %418 = vmatpush1.bf16.msra.mxu0 %v374
      %419 = vmatprep.subr.bf16.mxu0 0
      %420 = vmatpush1.bf16.msra.mxu0 %v373
      %421 = vmatprep.subr.bf16.mxu0 0
      %422 = vmatpush2.bf16.msra.mxu0 %v388
      %423 = vmatprep.subr.bf16.mxu0 0
      %424 = vmatpush2.bf16.msra.mxu0 %v387
      %425 = vmatprep.subr.bf16.mxu0 0
      %426 = vmatpush2.bf16.msra.mxu0 %v386
      %427 = vmatprep.subr.bf16.mxu0 0
      %428 = vmatpush2.bf16.msra.mxu0 %v385
      %429 = vmatprep.subr.bf16.mxu0 0
      %430 = vmatpush2.bf16.msra.mxu0 %v384
      %431 = vmatprep.subr.bf16.mxu0 0
      %432 = vmatpush2.bf16.msra.mxu0 %v383
      %433 = vmatprep.subr.bf16.mxu0 0
      %434 = vmatpush2.bf16.msra.mxu0 %v382
      %435 = vmatprep.subr.bf16.mxu0 0
      %436 = vmatpush2.bf16.msra.mxu0 %v381
      %437 = vmatprep.mubr.bf16.mxu0 %v302
      %438 = vmatmul.mubr.bf16.gmra.mxu0 %v301
      %v439 = vpop.f32.mrf.mxu0
      %v440 = vadd.f32 0.0, %v439
      %v441 = vpop.f32.mrf.mxu0
      %v442 = vpop.f32.mrf.mxu0
      %v443 = vadd.f32 0.0, %v442
      %v444 = vpop.f32.mrf.mxu0
      %445 = vmatprep.mubr.bf16.mxu0 %v304
      %446 = vmatmul.mubr.bf16.gmra.mxu0 %v303
      %v447 = vpop.f32.mrf.mxu0
      %v448 = vadd.f32 0.0, %v447
      %v449 = vpop.f32.mrf.mxu0
      %v450 = vpop.f32.mrf.mxu0
      %v451 = vadd.f32 0.0, %v450
      %v452 = vpop.f32.mrf.mxu0
      %453 = vdwg.mxu0
      %454 = vst [vmem:[%s243] sm:$0xff] %v440
      %455 = vst [vmem:[%s243 + $0x8] sm:$0xff] %v443
      %456 = vst [vmem:[%s243 + $0x10] sm:$0xff] %v448
      %457 = vst [vmem:[%s243 + $0x18] sm:$0xff] %v451
      %v458 = vadd.f32 %v440, %v443
      %v459 = vadd.f32 %v458, %v448
      %v460 = vadd.f32 %v459, %v451
      %v461 = vrot.slane %v460, 4
      %v462 = vadd.f32 %v460, %v461
      %v463 = vrot.slane %v462, 2
      %v464 = vadd.f32 %v462, %v463
      %v465 = vrot.slane %v464, 1
      %v466 = vadd.f32 %v464, %v465
      %467 = vst [vmem:[%s251] sm:$0x1] %v466
      %v468 = vmul.f32 %v440, %v440
      %v469 = vmul.f32 %v443, %v443
      %v470 = vmul.f32 %v448, %v448
      %v471 = vmul.f32 %v451, %v451
      %v472 = vadd.f32 %v468, %v469
      %v473 = vadd.f32 %v472, %v470
      %v474 = vadd.f32 %v473, %v471
      %v475 = vrot.slane %v474, 4
      %v476 = vadd.f32 %v474, %v475
      %v477 = vrot.slane %v476, 2
      %v478 = vadd.f32 %v476, %v477
      %v479 = vrot.slane %v478, 1
      %v480 = vadd.f32 %v478, %v479
      %481 = vst [vmem:[%s251 + $0x1] sm:$0x1] %v480
      %s482 = smul.u32 4, %s20
      %p483 = scmp.lt.s32.totalorder %s19, 3
      %s484 = scalar_select %p483, %s19, 3
      %p485 = scmp.lt.s32.totalorder %s482, 3
      %s486 = scalar_select %p485, %s482, 3
      %s487 = smul.addr %s484, 4
      %s488 = sadd.s32 %s486, %s487
      %s489 = smul.addr %s488, 8
      %s490 = scalar_lea.vmem %s2, %s489
      %p491 = scmp.lt.s32.totalorder %s19, 3
      %s492 = scalar_select %p491, %s19, 3
      %p493 = scmp.lt.s32.totalorder %s20, 0
      %s494 = scalar_select %p493, %s20, 0
      %s495 = sadd.s32 %s494, %s492
      %s496 = smul.addr %s495, 2
      %s497 = scalar_lea.vmem %s3, %s496
      // Predicated region
      $region29: #{generator_forward.15} parent=27 // pred_check
        %p498 = pneg %p101
      $region30: #{generator_forward.15} parent=27 // pred_check_branch
        %500 = sbr.rel (%p498) target = $region32
      $region31: #{generator_forward.15} parent=27 // pred_region
        %s501 = smul.u32 4, %s20
      $region32: #{generator_forward.15} parent=27 // pred_fallthru
        _
      // Predicated region
      $region33: #{generator_forward.15} parent=27 // pred_check
        %p502 = pneg %p129
      $region34: #{generator_forward.15} parent=27 // pred_check_branch
        %504 = sbr.rel (%p502) target = $region36
      $region35: #{generator_forward.15} parent=27 // pred_region
        _
      $region36: #{generator_forward.15} parent=27 // pred_fallthru
        _
    $region28: #{generator_forward.15} parent=5 // pred_fallthru
      _
    %p505 = scmp.le.s32.totalorder 2, %s10
    // Predicated region
    $region37: #{generator_forward.15} parent=5 // pred_check
      %p506 = pneg %p505
    $region38: #{generator_forward.15} parent=5 // pred_check_branch
      %508 = sbr.rel (%p506) target = $region40
    $region39: #{generator_forward.15} parent=5 // pred_region
      %s509 = ssub.s32 %s10, 2
      // Predicated region
      $region41: #{generator_forward.15} parent=39 // pred_check
        %p510 = pneg %p107
      $region42: #{generator_forward.15} parent=39 // pred_check_branch
        %512 = sbr.rel (%p510) target = $region44
      $region43: #{generator_forward.15} parent=39 // pred_region
        %s513 = smul.u32 4, %s22
        %p514 = scmp.lt.s32.totalorder %s21, 3
        %s515 = scalar_select %p514, %s21, 3
        %p516 = scmp.lt.s32.totalorder %s513, 3
        %s517 = scalar_select %p516, %s513, 3
        %s518 = smul.addr %s515, 4
        %s519 = sadd.s32 %s517, %s518
        %s520 = smul.addr %s519, 8
        %s521 = scalar_lea.vmem %s2, %s520
      $region44: #{generator_forward.15} parent=39 // pred_fallthru
        _
      // Predicated region
      $region45: #{generator_forward.15} parent=39 // pred_check
        %p522 = pneg %p135
      $region46: #{generator_forward.15} parent=39 // pred_check_branch
        %524 = sbr.rel (%p522) target = $region48
      $region47: #{generator_forward.15} parent=39 // pred_region
        %p525 = scmp.lt.s32.totalorder %s21, 3
        %s526 = scalar_select %p525, %s21, 3
        %p527 = scmp.lt.s32.totalorder %s22, 0
        %s528 = scalar_select %p527, %s22, 0
        %s529 = sadd.s32 %s528, %s526
        %s530 = smul.addr %s529, 2
        %s531 = scalar_lea.vmem %s3, %s530
      $region48: #{generator_forward.15} parent=39 // pred_fallthru
        _
    $region40: #{generator_forward.15} parent=5 // pred_fallthru
      _
  $region6: #{generator_forward.15} parent=0 // loop_footer
    %s14 = sadd.s32 1, %s10
  $region7: #{generator_forward.15} parent=0 // loop_footer_branch
    %9 = sbr.rel target = $region3
  $region8: #{generator_forward.15} parent=0 // loop_exit
    _

// kernel: generator_forward.16
$region0: #{generator_forward.16}
  #allocation0 [shape = 'u32[]', space=smem, size = 0x4, offset = 0x4, fixed_abs, tag = 'smem constant byte address 0x4 - core index']
  #allocation1 [shape = 'u32[144,128]{1,0:T(1,128)}', space=vmem, size = 0x12000, scoped, tag = 'internal scratch']
  %s0 = inlined_call_operand.vmem [shape: f32[4,32,128], index: 0, kind: input, shape index: {}]
  %s1 = inlined_call_operand.vmem [shape: f32[1,128], index: 1, kind: input, shape index: {}]
  %s2 = inlined_call_operand.vmem [shape: f32[1,128], index: 2, kind: input, shape index: {}]
  %s3 = inlined_call_operand.vmem [shape: bf16[4,32,128], index: 3, kind: output, shape index: {}]
  %s4 = sld [smem:[#allocation0]]
  $region45: #{generator_forward.16} parent=0
    _
  %s6 = ssub.s32 1, %s4
  %s7 = scalar_select 0, %s6, %s4
  loop: start=0, step=1, limit=6
  $region2: #{generator_forward.16} parent=0 // loop_pre_header
    _
  $region3: #{generator_forward.16} parent=0 // loop_header
    %s9 = sphi 0, %s13
    %p10 = scmp.ge.s32.totalorder %s9, 6
    %s16 = sphi 0, %s28
    %s17 = sphi 0, %s24
    %s18 = sphi 0, %s16
    %s19 = sphi 0, %s17
    %s20 = sphi 0, %s18
    %s21 = sphi 0, %s19
    %s33 = sphi 0, %s35
    %s36 = sphi 0, %s33
    %s37 = sphi 0, %s36
    %s53 = sphi 0, %s37
    %s57 = sphi 0, %s57
    %s59 = sphi 0, %s57
    %s60 = sphi 0, %s59
    %s74 = sphi 0, %s60
    %s78 = sphi 0, %s78
    %s80 = sphi 0, %s78
    %s81 = sphi 0, %s80
    %s95 = sphi 0, %s81
    %s103 = sphi 0, %s105
    %s106 = sphi 0, %s103
    %s107 = sphi 0, %s106
    %s123 = sphi 0, %s107
  $region4: #{generator_forward.16} parent=0 // loop_header_branch
    %12 = sbr.rel (%p10) target = $region8
  $region5: #{generator_forward.16} parent=0 // loop_body
    %s14 = ssub.s32 %s9, 1
    %s15 = ssub.s32 %s9, 2
    %s22 = sadd.s32 1, %s17
    %p23 = scmp.ge.s32.totalorder %s22, 1
    %s24 = scalar_select %p23, 0, %s22
    %s25 = sadd.s32 1, %s16
    %s26 = scalar_select %p23, %s25, %s16
    %p27 = scmp.ge.s32.totalorder %s26, 4
    %s28 = scalar_select %p27, 0, %s26
    %s29 = ssub.s32 %s16, %s28
    %s30 = ssub.s32 %s17, %s24
    %s31 = sor.u32 %s29, %s30
    %p32 = scmp.eq.s32.totalorder %s31, 0
    %s34 = sadd.s32 %s33, 1
    %s35 = scalar_select %p32, %s33, %s34
    %p38 = pneg %p32
    %p39 = scmp.eq.s32.totalorder %s9, 3
    %p40 = por %p38, %p39
    %p41 = scmp.ne.s32.totalorder %s33, %s36
    %p42 = scmp.eq.s32.totalorder %s9, 0
    %p43 = por %p41, %p42
    %p44 = scmp.ne.s32.totalorder %s33, %s36
    %p45 = scmp.eq.s32.totalorder %s14, 3
    %p46 = por %p44, %p45
    %p47 = scmp.ne.s32.totalorder %s36, %s37
    %p48 = scmp.eq.s32.totalorder %s14, 0
    %p49 = por %p47, %p48
    %p50 = scmp.ne.s32.totalorder %s36, %s37
    %p51 = scmp.eq.s32.totalorder %s15, 3
    %p52 = por %p50, %p51
    %p54 = scmp.ne.s32.totalorder %s37, %s53
    %p55 = scmp.eq.s32.totalorder %s15, 0
    %p56 = por %p54, %p55
    %s58 = sadd.s32 %s57, 1
    %p61 = scmp.eq.s32.totalorder %s9, 3
    %p62 = scmp.ne.s32.totalorder %s57, %s59
    %p63 = scmp.eq.s32.totalorder %s9, 0
    %p64 = por %p62, %p63
    %p65 = scmp.ne.s32.totalorder %s57, %s59
    %p66 = scmp.eq.s32.totalorder %s14, 3
    %p67 = por %p65, %p66
    %p68 = scmp.ne.s32.totalorder %s59, %s60
    %p69 = scmp.eq.s32.totalorder %s14, 0
    %p70 = por %p68, %p69
    %p71 = scmp.ne.s32.totalorder %s59, %s60
    %p72 = scmp.eq.s32.totalorder %s15, 3
    %p73 = por %p71, %p72
    %p75 = scmp.ne.s32.totalorder %s60, %s74
    %p76 = scmp.eq.s32.totalorder %s15, 0
    %p77 = por %p75, %p76
    %s79 = sadd.s32 %s78, 1
    %p82 = scmp.eq.s32.totalorder %s9, 3
    %p83 = scmp.ne.s32.totalorder %s78, %s80
    %p84 = scmp.eq.s32.totalorder %s9, 0
    %p85 = por %p83, %p84
    %p86 = scmp.ne.s32.totalorder %s78, %s80
    %p87 = scmp.eq.s32.totalorder %s14, 3
    %p88 = por %p86, %p87
    %p89 = scmp.ne.s32.totalorder %s80, %s81
    %p90 = scmp.eq.s32.totalorder %s14, 0
    %p91 = por %p89, %p90
    %p92 = scmp.ne.s32.totalorder %s80, %s81
    %p93 = scmp.eq.s32.totalorder %s15, 3
    %p94 = por %p92, %p93
    %p96 = scmp.ne.s32.totalorder %s81, %s95
    %p97 = scmp.eq.s32.totalorder %s15, 0
    %p98 = por %p96, %p97
    %s99 = ssub.s32 %s16, %s28
    %s100 = ssub.s32 %s17, %s24
    %s101 = sor.u32 %s99, %s100
    %p102 = scmp.eq.s32.totalorder %s101, 0
    %s104 = sadd.s32 %s103, 1
    %s105 = scalar_select %p102, %s103, %s104
    %p108 = pneg %p102
    %p109 = scmp.eq.s32.totalorder %s9, 3
    %p110 = por %p108, %p109
    %p111 = scmp.ne.s32.totalorder %s103, %s106
    %p112 = scmp.eq.s32.totalorder %s9, 0
    %p113 = por %p111, %p112
    %p114 = scmp.ne.s32.totalorder %s103, %s106
    %p115 = scmp.eq.s32.totalorder %s14, 3
    %p116 = por %p114, %p115
    %p117 = scmp.ne.s32.totalorder %s106, %s107
    %p118 = scmp.eq.s32.totalorder %s14, 0
    %p119 = por %p117, %p118
    %p120 = scmp.ne.s32.totalorder %s106, %s107
    %p121 = scmp.eq.s32.totalorder %s15, 3
    %p122 = por %p120, %p121
    %p124 = scmp.ne.s32.totalorder %s107, %s123
    %p125 = scmp.eq.s32.totalorder %s15, 0
    %p126 = por %p124, %p125
    %p127 = scmp.le.s32.totalorder 1, %s9
    %p128 = scmp.lt.s32.totalorder %s9, 5
    %p129 = pnand %p127, %p128
    %p130 = pneg %p129
    // Predicated region
    $region9: #{generator_forward.16} parent=5 // pred_check
      _
    $region10: #{generator_forward.16} parent=5 // pred_check_branch
      %132 = sbr.rel (%p129) target = $region12
    $region11: #{generator_forward.16} parent=5 // pred_region
      %s133 = ssub.s32 %s9, 1
      // Predicated region
      $region13: #{generator_forward.16} parent=11 // pred_check
        %p134 = pneg %p70
      $region14: #{generator_forward.16} parent=11 // pred_check_branch
        %136 = sbr.rel (%p134) target = $region16
      $region15: #{generator_forward.16} parent=11 // pred_region
        _
      $region16: #{generator_forward.16} parent=11 // pred_fallthru
        _
      // Predicated region
      $region17: #{generator_forward.16} parent=11 // pred_check
        %p137 = pneg %p91
      $region18: #{generator_forward.16} parent=11 // pred_check_branch
        %139 = sbr.rel (%p137) target = $region20
      $region19: #{generator_forward.16} parent=11 // pred_region
        _
      $region20: #{generator_forward.16} parent=11 // pred_fallthru
        _
    $region12: #{generator_forward.16} parent=5 // pred_fallthru
      _
    %p140 = scmp.lt.s32.totalorder %s9, 4
    // Predicated region
    $region21: #{generator_forward.16} parent=5 // pred_check
      %p141 = pneg %p140
    $region22: #{generator_forward.16} parent=5 // pred_check_branch
      %143 = sbr.rel (%p141) target = $region24
    $region23: #{generator_forward.16} parent=5 // pred_region
      // Predicated region
      $region25: #{generator_forward.16} parent=23 // pred_check
        %p144 = pneg %p43
      $region26: #{generator_forward.16} parent=23 // pred_check_branch
        %146 = sbr.rel (%p144) target = $region28
      $region27: #{generator_forward.16} parent=23 // pred_region
        %s147 = smul.u32 4, %s17
        %p148 = scmp.lt.s32.totalorder %s16, 3
        %s149 = scalar_select %p148, %s16, 3
        %p150 = scmp.lt.s32.totalorder %s147, 3
        %s151 = scalar_select %p150, %s147, 3
        %s152 = smul.addr %s149, 4
        %s153 = sadd.s32 %s151, %s152
        %s154 = smul.addr %s153, 8
        %s155 = scalar_lea.vmem %s0, %s154
        %s156 = smul.u32 4, %s17
      $region28: #{generator_forward.16} parent=23 // pred_fallthru
        _
    $region24: #{generator_forward.16} parent=5 // pred_fallthru
      _
    %p157 = scmp.le.s32.totalorder 1, %s9
    %p158 = scmp.lt.s32.totalorder %s9, 5
    %p159 = pnand %p157, %p158
    %p160 = pneg %p159
    // Predicated region
    $region29: #{generator_forward.16} parent=5 // pred_check
      _
    $region30: #{generator_forward.16} parent=5 // pred_check_branch
      %162 = sbr.rel (%p159) target = $region32
    $region31: #{generator_forward.16} parent=5 // pred_region
      %s163 = ssub.s32 %s9, 1
      %s164 = smul.u32 4, %s19
      %p165 = scmp.lt.s32.totalorder %s18, 3
      %s166 = scalar_select %p165, %s18, 3
      %p167 = scmp.lt.s32.totalorder %s164, 3
      %s168 = scalar_select %p167, %s164, 3
      %s169 = smul.addr %s166, 4
      %s170 = sadd.s32 %s168, %s169
      %s171 = smul.addr %s170, 8
      %s172 = scalar_lea.vmem %s0, %s171
      %p173 = pneg %p49
      %p174 = pneg %p46
      %p175 = pneg %p70
      %p176 = pneg %p67
      %p177 = pneg %p91
      %p178 = pneg %p88
      %p179 = pneg %p119
      %p180 = pneg %p116
      %s181 = smul.u32 4, %s19
      %p182 = scmp.lt.s32.totalorder %s18, 3
      %s183 = scalar_select %p182, %s18, 3
      %p184 = scmp.lt.s32.totalorder %s181, 3
      %s185 = scalar_select %p184, %s181, 3
      %s186 = smul.addr %s183, 4
      %s187 = sadd.s32 %s185, %s186
      %s188 = smul.addr %s187, 4
      %s189 = scalar_lea.vmem %s3, %s188
      %s190 = smul.u32 4, %s19
      %p191 = scmp.lt.s32.totalorder %s18, 3
      %s192 = scalar_select %p191, %s18, 3
      %p193 = scmp.lt.s32.totalorder %s190, 3
      %s194 = scalar_select %p193, %s190, 3
      %s195 = smul.addr %s192, 4
      %s196 = sadd.s32 %s194, %s195
      %s197 = smul.addr %s196, 8
      %s198 = scalar_lea.vmem %s0, %s197
      %s199 = smul.u32 4, %s19
      %s200 = smul.u32 4, %s19
      %p201 = scmp.lt.s32.totalorder %s18, 3
      %s202 = scalar_select %p201, %s18, 3
      %p203 = scmp.lt.s32.totalorder %s200, 3
      %s204 = scalar_select %p203, %s200, 3
      %s205 = smul.addr %s202, 4
      %s206 = sadd.s32 %s204, %s205
      %s207 = smul.addr %s206, 4
      %s208 = scalar_lea.vmem %s3, %s207
      %s209 = smul.u32 4, %s19
      %v210 = vld [vmem:[%s198] sm:$0xff]
      %v211 = vld [vmem:[%s198 + $0x8] sm:$0xff]
      %v212 = vld [vmem:[%s198 + $0x10] sm:$0xff]
      %v213 = vld [vmem:[%s198 + $0x18] sm:$0xff]
      %v214 = vld [vmem:[%s1] sm:$0x1]
      %v216 = vlaneseq
      %v217 = vshrl.u32 %v216, 7
      %v218 = vsub.s32 0, %v217
      %v219 = vrot.slane %v214, %v218
      %v221 = vmul.f32 %v210, %v219
      %v222 = vmul.f32 %v211, %v219
      %v223 = vmul.f32 %v212, %v219
      %v224 = vmul.f32 %v213, %v219
      %v225 = vld [vmem:[%s2] sm:$0x1]
      %v227 = vlaneseq
      %v228 = vshrl.u32 %v227, 7
      %v229 = vsub.s32 0, %v228
      %v230 = vrot.slane %v225, %v229
      %v232 = vadd.f32 %v221, %v230
      %v233 = vadd.f32 %v222, %v230
      %v234 = vadd.f32 %v223, %v230
      %v235 = vadd.f32 %v224, %v230
      %v236 = vmax.f32 %v232, 0.0
      %v237 = vmax.f32 %v233, 0.0
      %v238 = vmax.f32 %v234, 0.0
      %v239 = vmax.f32 %v235, 0.0
      %v240 = vpack.c.bf16 %v237, %v236
      %v241 = vpack.c.bf16 %v239, %v238
      %v244 = vunpack.c.l.b16 %v240
      %v245 = vunpack.c.h.b16 %v240
      %v246 = vunpack.c.l.b16 %v241
      %v247 = vunpack.c.h.b16 %v241
      %v248 = vpack.c.b16 %v244, %v244
      %v249 = vpack.c.b16 %v245, %v245
      %v250 = vpack.c.b16 %v246, %v246
      %v251 = vpack.c.b16 %v247, %v247
      %256 = vst [vmem:[%s208] sm:$0xf] %v248
      %257 = vst [vmem:[%s208 + $0x4] sm:$0xf] %v249
      %258 = vst [vmem:[%s208 + $0x8] sm:$0xf] %v250
      %259 = vst [vmem:[%s208 + $0xc] sm:$0xf] %v251
      %s260 = smul.u32 4, %s19
      %p261 = scmp.lt.s32.totalorder %s18, 3
      %s262 = scalar_select %p261, %s18, 3
      %p263 = scmp.lt.s32.totalorder %s260, 3
      %s264 = scalar_select %p263, %s260, 3
      %s265 = smul.addr %s262, 4
      %s266 = sadd.s32 %s264, %s265
      %s267 = smul.addr %s266, 4
      %s268 = scalar_lea.vmem %s3, %s267
      // Predicated region
      $region33: #{generator_forward.16} parent=31 // pred_check
        %p269 = pneg %p116
      $region34: #{generator_forward.16} parent=31 // pred_check_branch
        %271 = sbr.rel (%p269) target = $region36
      $region35: #{generator_forward.16} parent=31 // pred_region
        %s272 = smul.u32 4, %s19
      $region36: #{generator_forward.16} parent=31 // pred_fallthru
        _
    $region32: #{generator_forward.16} parent=5 // pred_fallthru
      _
    %p273 = scmp.le.s32.totalorder 2, %s9
    // Predicated region
    $region37: #{generator_forward.16} parent=5 // pred_check
      %p274 = pneg %p273
    $region38: #{generator_forward.16} parent=5 // pred_check_branch
      %276 = sbr.rel (%p274) target = $region40
    $region39: #{generator_forward.16} parent=5 // pred_region
      %s277 = ssub.s32 %s9, 2
      // Predicated region
      $region41: #{generator_forward.16} parent=39 // pred_check
        %p278 = pneg %p122
      $region42: #{generator_forward.16} parent=39 // pred_check_branch
        %280 = sbr.rel (%p278) target = $region44
      $region43: #{generator_forward.16} parent=39 // pred_region
        %s281 = smul.u32 4, %s21
        %p282 = scmp.lt.s32.totalorder %s20, 3
        %s283 = scalar_select %p282, %s20, 3
        %p284 = scmp.lt.s32.totalorder %s281, 3
        %s285 = scalar_select %p284, %s281, 3
        %s286 = smul.addr %s283, 4
        %s287 = sadd.s32 %s285, %s286
        %s288 = smul.addr %s287, 4
        %s289 = scalar_lea.vmem %s3, %s288
      $region44: #{generator_forward.16} parent=39 // pred_fallthru
        _
    $region40: #{generator_forward.16} parent=5 // pred_fallthru
      _
  $region6: #{generator_forward.16} parent=0 // loop_footer
    %s13 = sadd.s32 1, %s9
  $region7: #{generator_forward.16} parent=0 // loop_footer_branch
    %8 = sbr.rel target = $region3
  $region8: #{generator_forward.16} parent=0 // loop_exit
    _

// kernel: generator_forward.17
$region0: #{generator_forward.17}
  #allocation0 [shape = 'u32[]', space=smem, size = 0x4, offset = 0x4, fixed_abs, tag = 'smem constant byte address 0x4 - core index']
  #allocation1 [shape = 'u32[144,128]{1,0:T(1,128)}', space=vmem, size = 0x12000, scoped, tag = 'internal scratch']
  %s0 = inlined_call_operand.vmem [shape: bf16[4,128,128], index: 0, kind: input, shape index: {}]
  %s1 = inlined_call_operand.vmem [shape: bf16[4,128,128], index: 1, kind: input, shape index: {}]
  %s2 = inlined_call_operand.vmem [shape: f32[4,128,128], index: 2, kind: output, shape index: {0}]
  %s3 = inlined_call_operand.vmem [shape: f32[4,1,2,128], index: 3, kind: output, shape index: {1}]
  %4 = xla_tuple %s2, %s3
  %s5 = sld [smem:[#allocation0]]
  $region49: #{generator_forward.17} parent=0
    _
  %s7 = ssub.s32 1, %s5
  %s8 = scalar_select 0, %s7, %s5
  loop: start=0, step=1, limit=6
  $region2: #{generator_forward.17} parent=0 // loop_pre_header
    _
  $region3: #{generator_forward.17} parent=0 // loop_header
    %s10 = sphi 0, %s14
    %p11 = scmp.ge.s32.totalorder %s10, 6
    %s17 = sphi 0, %s29
    %s18 = sphi 0, %s25
    %s19 = sphi 0, %s17
    %s20 = sphi 0, %s18
    %s21 = sphi 0, %s19
    %s22 = sphi 0, %s20
    %s34 = sphi 0, %s36
    %s37 = sphi 0, %s34
    %s38 = sphi 0, %s37
    %s54 = sphi 0, %s38
    %s60 = sphi 0, %s62
    %s63 = sphi 0, %s60
    %s64 = sphi 0, %s63
    %s80 = sphi 0, %s64
    %s88 = sphi 0, %s90
    %s91 = sphi 0, %s88
    %s92 = sphi 0, %s91
    %s108 = sphi 0, %s92
    %s116 = sphi 0, %s118
    %s119 = sphi 0, %s116
    %s120 = sphi 0, %s119
    %s136 = sphi 0, %s120
  $region4: #{generator_forward.17} parent=0 // loop_header_branch
    %13 = sbr.rel (%p11) target = $region8
  $region5: #{generator_forward.17} parent=0 // loop_body
    %s15 = ssub.s32 %s10, 1
    %s16 = ssub.s32 %s10, 2
    %s23 = sadd.s32 1, %s18
    %p24 = scmp.ge.s32.totalorder %s23, 1
    %s25 = scalar_select %p24, 0, %s23
    %s26 = sadd.s32 1, %s17
    %s27 = scalar_select %p24, %s26, %s17
    %p28 = scmp.ge.s32.totalorder %s27, 4
    %s29 = scalar_select %p28, 0, %s27
    %s30 = ssub.s32 %s17, %s29
    %s31 = ssub.s32 %s18, %s25
    %s32 = sor.u32 %s30, %s31
    %p33 = scmp.eq.s32.totalorder %s32, 0
    %s35 = sadd.s32 %s34, 1
    %s36 = scalar_select %p33, %s34, %s35
    %p39 = pneg %p33
    %p40 = scmp.eq.s32.totalorder %s10, 3
    %p41 = por %p39, %p40
    %p42 = scmp.ne.s32.totalorder %s34, %s37
    %p43 = scmp.eq.s32.totalorder %s10, 0
    %p44 = por %p42, %p43
    %p45 = scmp.ne.s32.totalorder %s34, %s37
    %p46 = scmp.eq.s32.totalorder %s15, 3
    %p47 = por %p45, %p46
    %p48 = scmp.ne.s32.totalorder %s37, %s38
    %p49 = scmp.eq.s32.totalorder %s15, 0
    %p50 = por %p48, %p49
    %p51 = scmp.ne.s32.totalorder %s37, %s38
    %p52 = scmp.eq.s32.totalorder %s16, 3
    %p53 = por %p51, %p52
    %p55 = scmp.ne.s32.totalorder %s38, %s54
    %p56 = scmp.eq.s32.totalorder %s16, 0
    %p57 = por %p55, %p56
    %s58 = ssub.s32 %s17, %s29
    %p59 = scmp.eq.s32.totalorder %s58, 0
    %s61 = sadd.s32 %s60, 1
    %s62 = scalar_select %p59, %s60, %s61
    %p65 = pneg %p59
    %p66 = scmp.eq.s32.totalorder %s10, 3
    %p67 = por %p65, %p66
    %p68 = scmp.ne.s32.totalorder %s60, %s63
    %p69 = scmp.eq.s32.totalorder %s10, 0
    %p70 = por %p68, %p69
    %p71 = scmp.ne.s32.totalorder %s60, %s63
    %p72 = scmp.eq.s32.totalorder %s15, 3
    %p73 = por %p71, %p72
    %p74 = scmp.ne.s32.totalorder %s63, %s64
    %p75 = scmp.eq.s32.totalorder %s15, 0
    %p76 = por %p74, %p75
    %p77 = scmp.ne.s32.totalorder %s63, %s64
    %p78 = scmp.eq.s32.totalorder %s16, 3
    %p79 = por %p77, %p78
    %p81 = scmp.ne.s32.totalorder %s64, %s80
    %p82 = scmp.eq.s32.totalorder %s16, 0
    %p83 = por %p81, %p82
    %s84 = ssub.s32 %s17, %s29
    %s85 = ssub.s32 %s18, %s25
    %s86 = sor.u32 %s84, %s85
    %p87 = scmp.eq.s32.totalorder %s86, 0
    %s89 = sadd.s32 %s88, 1
    %s90 = scalar_select %p87, %s88, %s89
    %p93 = pneg %p87
    %p94 = scmp.eq.s32.totalorder %s10, 3
    %p95 = por %p93, %p94
    %p96 = scmp.ne.s32.totalorder %s88, %s91
    %p97 = scmp.eq.s32.totalorder %s10, 0
    %p98 = por %p96, %p97
    %p99 = scmp.ne.s32.totalorder %s88, %s91
    %p100 = scmp.eq.s32.totalorder %s15, 3
    %p101 = por %p99, %p100
    %p102 = scmp.ne.s32.totalorder %s91, %s92
    %p103 = scmp.eq.s32.totalorder %s15, 0
    %p104 = por %p102, %p103
    %p105 = scmp.ne.s32.totalorder %s91, %s92
    %p106 = scmp.eq.s32.totalorder %s16, 3
    %p107 = por %p105, %p106
    %p109 = scmp.ne.s32.totalorder %s92, %s108
    %p110 = scmp.eq.s32.totalorder %s16, 0
    %p111 = por %p109, %p110
    %s112 = ssub.s32 %s17, %s29
    %s113 = ssub.s32 %s18, %s25
    %s114 = sor.u32 %s112, %s113
    %p115 = scmp.eq.s32.totalorder %s114, 0
    %s117 = sadd.s32 %s116, 1
    %s118 = scalar_select %p115, %s116, %s117
    %p121 = pneg %p115
    %p122 = scmp.eq.s32.totalorder %s10, 3
    %p123 = por %p121, %p122
    %p124 = scmp.ne.s32.totalorder %s116, %s119
    %p125 = scmp.eq.s32.totalorder %s10, 0
    %p126 = por %p124, %p125
    %p127 = scmp.ne.s32.totalorder %s116, %s119
    %p128 = scmp.eq.s32.totalorder %s15, 3
    %p129 = por %p127, %p128
    %p130 = scmp.ne.s32.totalorder %s119, %s120
    %p131 = scmp.eq.s32.totalorder %s15, 0
    %p132 = por %p130, %p131
    %p133 = scmp.ne.s32.totalorder %s119, %s120
    %p134 = scmp.eq.s32.totalorder %s16, 3
    %p135 = por %p133, %p134
    %p137 = scmp.ne.s32.totalorder %s120, %s136
    %p138 = scmp.eq.s32.totalorder %s16, 0
    %p139 = por %p137, %p138
    %p140 = scmp.le.s32.totalorder 1, %s10
    %p141 = scmp.lt.s32.totalorder %s10, 5
    %p142 = pnand %p140, %p141
    %p143 = pneg %p142
    // Predicated region
    $region9: #{generator_forward.17} parent=5 // pred_check
      _
    $region10: #{generator_forward.17} parent=5 // pred_check_branch
      %145 = sbr.rel (%p142) target = $region12
    $region11: #{generator_forward.17} parent=5 // pred_region
      %s146 = ssub.s32 %s10, 1
    $region12: #{generator_forward.17} parent=5 // pred_fallthru
      _
    %p147 = scmp.lt.s32.totalorder %s10, 4
    // Predicated region
    $region13: #{generator_forward.17} parent=5 // pred_check
      %p148 = pneg %p147
    $region14: #{generator_forward.17} parent=5 // pred_check_branch
      %150 = sbr.rel (%p148) target = $region16
    $region15: #{generator_forward.17} parent=5 // pred_region
      // Predicated region
      $region17: #{generator_forward.17} parent=15 // pred_check
        %p151 = pneg %p44
      $region18: #{generator_forward.17} parent=15 // pred_check_branch
        %153 = sbr.rel (%p151) target = $region20
      $region19: #{generator_forward.17} parent=15 // pred_region
        %s154 = smul.u32 16, %s18
        %p155 = scmp.lt.s32.totalorder %s17, 3
        %s156 = scalar_select %p155, %s17, 3
        %p157 = scmp.lt.s32.totalorder %s154, 15
        %s158 = scalar_select %p157, %s154, 15
        %s159 = smul.addr %s156, 16
        %s160 = sadd.s32 %s158, %s159
        %s161 = smul.addr %s160, 4
        %s162 = scalar_lea.vmem %s0, %s161
        %s163 = smul.u32 16, %s18
      $region20: #{generator_forward.17} parent=15 // pred_fallthru
        _
      // Predicated region
      $region21: #{generator_forward.17} parent=15 // pred_check
        %p164 = pneg %p70
      $region22: #{generator_forward.17} parent=15 // pred_check_branch
        %166 = sbr.rel (%p164) target = $region24
      $region23: #{generator_forward.17} parent=15 // pred_region
        %p167 = scmp.lt.s32.totalorder %s17, 3
        %s168 = scalar_select %p167, %s17, 3
        %s169 = smul.addr %s168, 16
        %s170 = smul.addr %s169, 4
        %s171 = scalar_lea.vmem %s1, %s170
      $region24: #{generator_forward.17} parent=15 // pred_fallthru
        _
    $region16: #{generator_forward.17} parent=5 // pred_fallthru
      _
    %p172 = scmp.le.s32.totalorder 1, %s10
    %p173 = scmp.lt.s32.totalorder %s10, 5
    %p174 = pnand %p172, %p173
    %p175 = pneg %p174
    // Predicated region
    $region25: #{generator_forward.17} parent=5 // pred_check
      _
    $region26: #{generator_forward.17} parent=5 // pred_check_branch
      %177 = sbr.rel (%p174) target = $region28
    $region27: #{generator_forward.17} parent=5 // pred_region
      %s178 = ssub.s32 %s10, 1
      %s179 = smul.u32 16, %s20
      %p180 = scmp.lt.s32.totalorder %s19, 3
      %s181 = scalar_select %p180, %s19, 3
      %p182 = scmp.lt.s32.totalorder %s179, 15
      %s183 = scalar_select %p182, %s179, 15
      %s184 = smul.addr %s181, 16
      %s185 = sadd.s32 %s183, %s184
      %s186 = smul.addr %s185, 4
      %s187 = scalar_lea.vmem %s0, %s186
      %p188 = pneg %p50
      %p189 = pneg %p47
      %p190 = scmp.lt.s32.totalorder %s19, 3
      %s191 = scalar_select %p190, %s19, 3
      %s192 = smul.addr %s191, 16
      %s193 = smul.addr %s192, 4
      %s194 = scalar_lea.vmem %s1, %s193
      %p195 = pneg %p76
      %p196 = pneg %p73
      %p197 = pneg %p104
      %p198 = pneg %p101
      %s199 = smul.u32 16, %s20
      %p200 = scmp.lt.s32.totalorder %s19, 3
      %s201 = scalar_select %p200, %s19, 3
      %p202 = scmp.lt.s32.totalorder %s199, 15
      %s203 = scalar_select %p202, %s199, 15
      %s204 = smul.addr %s201, 16
      %s205 = sadd.s32 %s203, %s204
      %s206 = smul.addr %s205, 8
      %s207 = scalar_lea.vmem %s2, %s206
      %p208 = pneg %p132
      %p209 = pneg %p129
      %p210 = scmp.lt.s32.totalorder %s19, 3
      %s211 = scalar_select %p210, %s19, 3
      %p212 = scmp.lt.s32.totalorder %s20, 0
      %s213 = scalar_select %p212, %s20, 0
      %s214 = sadd.s32 %s213, %s211
      %s215 = smul.addr %s214, 2
      %s216 = scalar_lea.vmem %s3, %s215
      %s217 = smul.u32 16, %s20
      %p218 = scmp.lt.s32.totalorder %s19, 3
      %s219 = scalar_select %p218, %s19, 3
      %p220 = scmp.lt.s32.totalorder %s217, 15
      %s221 = scalar_select %p220, %s217, 15
      %s222 = smul.addr %s219, 16
      %s223 = sadd.s32 %s221, %s222
      %s224 = smul.addr %s223, 4
      %s225 = scalar_lea.vmem %s0, %s224
      %s226 = smul.u32 16, %s20
      %p227 = scmp.lt.s32.totalorder %s19, 3
      %s228 = scalar_select %p227, %s19, 3
      %s229 = smul.addr %s228, 16
      %s230 = smul.addr %s229, 4
      %s231 = scalar_lea.vmem %s1, %s230
      %s232 = smul.u32 16, %s20
      %p233 = scmp.lt.s32.totalorder %s19, 3
      %s234 = scalar_select %p233, %s19, 3
      %p235 = scmp.lt.s32.totalorder %s232, 15
      %s236 = scalar_select %p235, %s232, 15
      %s237 = smul.addr %s234, 16
      %s238 = sadd.s32 %s236, %s237
      %s239 = smul.addr %s238, 8
      %s240 = scalar_lea.vmem %s2, %s239
      %s241 = smul.u32 16, %s20
      %p242 = scmp.lt.s32.totalorder %s19, 3
      %s243 = scalar_select %p242, %s19, 3
      %p244 = scmp.lt.s32.totalorder %s20, 0
      %s245 = scalar_select %p244, %s20, 0
      %s246 = sadd.s32 %s245, %s243
      %s247 = smul.addr %s246, 2
      %s248 = scalar_lea.vmem %s3, %s247
      %v250 = vld [vmem:[%s225] sm:$0xf]
      %v251 = vld [vmem:[%s225 + $0x4] sm:$0xf]
      %v252 = vld [vmem:[%s225 + $0x8] sm:$0xf]
      %v253 = vld [vmem:[%s225 + $0xc] sm:$0xf]
      %v254 = vld [vmem:[%s225 + $0x10] sm:$0xf]
      %v255 = vld [vmem:[%s225 + $0x14] sm:$0xf]
      %v256 = vld [vmem:[%s225 + $0x18] sm:$0xf]
      %v257 = vld [vmem:[%s225 + $0x1c] sm:$0xf]
      %v258 = vld [vmem:[%s225 + $0x20] sm:$0xf]
      %v259 = vld [vmem:[%s225 + $0x24] sm:$0xf]
      %v260 = vld [vmem:[%s225 + $0x28] sm:$0xf]
      %v261 = vld [vmem:[%s225 + $0x2c] sm:$0xf]
      %v262 = vld [vmem:[%s225 + $0x30] sm:$0xf]
      %v263 = vld [vmem:[%s225 + $0x34] sm:$0xf]
      %v264 = vld [vmem:[%s225 + $0x38] sm:$0xf]
      %v265 = vld [vmem:[%s225 + $0x3c] sm:$0xf]
      %v266 = vld [vmem:[%s231] sm:$0xf]
      %v267 = vld [vmem:[%s231 + $0x4] sm:$0xf]
      %v268 = vld [vmem:[%s231 + $0x8] sm:$0xf]
      %v269 = vld [vmem:[%s231 + $0xc] sm:$0xf]
      %v270 = vld [vmem:[%s231 + $0x10] sm:$0xf]
      %v271 = vld [vmem:[%s231 + $0x14] sm:$0xf]
      %v272 = vld [vmem:[%s231 + $0x18] sm:$0xf]
      %v273 = vld [vmem:[%s231 + $0x1c] sm:$0xf]
      %v274 = vld [vmem:[%s231 + $0x20] sm:$0xf]
      %v275 = vld [vmem:[%s231 + $0x24] sm:$0xf]
      %v276 = vld [vmem:[%s231 + $0x28] sm:$0xf]
      %v277 = vld [vmem:[%s231 + $0x2c] sm:$0xf]
      %v278 = vld [vmem:[%s231 + $0x30] sm:$0xf]
      %v279 = vld [vmem:[%s231 + $0x34] sm:$0xf]
      %v280 = vld [vmem:[%s231 + $0x38] sm:$0xf]
      %v281 = vld [vmem:[%s231 + $0x3c] sm:$0xf]
      %v298 = vunpack.c.l.b16 %v250
      %v299 = vunpack.c.l.b16 %v251
      %v300 = vunpack.c.l.b16 %v252
      %v301 = vunpack.c.l.b16 %v253
      %v302 = vunpack.c.l.b16 %v254
      %v303 = vunpack.c.l.b16 %v255
      %v304 = vunpack.c.l.b16 %v256
      %v305 = vunpack.c.l.b16 %v257
      %v306 = vunpack.c.l.b16 %v258
      %v307 = vunpack.c.l.b16 %v259
      %v308 = vunpack.c.l.b16 %v260
      %v309 = vunpack.c.l.b16 %v261
      %v310 = vunpack.c.l.b16 %v262
      %v311 = vunpack.c.l.b16 %v263
      %v312 = vunpack.c.l.b16 %v264
      %v313 = vunpack.c.l.b16 %v265
      %v314 = vpack.c.b16 %v299, %v298
      %v315 = vpack.c.b16 %v301, %v300
      %v316 = vpack.c.b16 %v303, %v302
      %v317 = vpack.c.b16 %v305, %v304
      %v318 = vpack.c.b16 %v307, %v306
      %v319 = vpack.c.b16 %v309, %v308
      %v320 = vpack.c.b16 %v311, %v310
      %v321 = vpack.c.b16 %v313, %v312
      %v346 = vunpack.c.l.b16 %v266
      %v347 = vunpack.c.l.b16 %v267
      %v348 = vunpack.c.l.b16 %v268
      %v349 = vunpack.c.l.b16 %v269
      %v350 = vunpack.c.l.b16 %v270
      %v351 = vunpack.c.l.b16 %v271
      %v352 = vunpack.c.l.b16 %v272
      %v353 = vunpack.c.l.b16 %v273
      %v354 = vunpack.c.l.b16 %v274
      %v355 = vunpack.c.l.b16 %v275
      %v356 = vunpack.c.l.b16 %v276
      %v357 = vunpack.c.l.b16 %v277
      %v358 = vunpack.c.l.b16 %v278
      %v359 = vunpack.c.l.b16 %v279
      %v360 = vunpack.c.l.b16 %v280
      %v361 = vunpack.c.l.b16 %v281
      %v362 = vpack.c.b16 %v347, %v346
      %v363 = vpack.c.b16 %v349, %v348
      %v364 = vpack.c.b16 %v351, %v350
      %v365 = vpack.c.b16 %v353, %v352
      %v366 = vpack.c.b16 %v355, %v354
      %v367 = vpack.c.b16 %v357, %v356
      %v368 = vpack.c.b16 %v359, %v358
      %v369 = vpack.c.b16 %v361, %v360
      %378 = vmatprep.subr.bf16.mxu0 0
      %379 = vmatpush1.bf16.msra.mxu0 %v369
      %380 = vmatprep.subr.bf16.mxu0 0
      %381 = vmatpush1.bf16.msra.mxu0 %v368
      %382 = vmatprep.subr.bf16.mxu0 0
      %383 = vmatpush1.bf16.msra.mxu0 %v367
      %384 = vmatprep.subr.bf16.mxu0 0
      %385 = vmatpush1.bf16.msra.mxu0 %v366
      %386 = vmatprep.subr.bf16.mxu0 0
      %387 = vmatpush1.bf16.msra.mxu0 %v365
      %388 = vmatprep.subr.bf16.mxu0 0
      %389 = vmatpush1.bf16.msra.mxu0 %v364
      %390 = vmatprep.subr.bf16.mxu0 0
      %391 = vmatpush1.bf16.msra.mxu0 %v363
      %392 = vmatprep.subr.bf16.mxu0 0
      %393 = vmatpush1.bf16.msra.mxu0 %v362
      %394 = vmatprep.subr.bf16.mxu0 0
      %395 = vmatpush2.bf16.msra.mxu0 0
      %396 = vmatprep.subr.bf16.mxu0 0
      %397 = vmatpush2.bf16.msra.mxu0 0
      %398 = vmatprep.subr.bf16.mxu0 0
      %399 = vmatpush2.bf16.msra.mxu0 0
      %400 = vmatprep.subr.bf16.mxu0 0
      %401 = vmatpush2.bf16.msra.mxu0 0
      %402 = vmatprep.subr.bf16.mxu0 0
      %403 = vmatpush2.bf16.msra.mxu0 0
      %404 = vmatprep.subr.bf16.mxu0 0
      %405 = vmatpush2.bf16.msra.mxu0 0
      %406 = vmatprep.subr.bf16.mxu0 0
      %407 = vmatpush2.bf16.msra.mxu0 0
      %408 = vmatprep.subr.bf16.mxu0 0
      %409 = vmatpush2.bf16.msra.mxu0 0
      %410 = vmatprep.mubr.bf16.mxu0 0
      %411 = vmatmul.mubr.bf16.gmra.mxu0 %v314
      %v412 = vpop.f32.mrf.mxu0
      %v413 = vadd.f32 0.0, %v412
      %v414 = vpop.f32.mrf.mxu0
      %v415 = vpop.f32.mrf.mxu0
      %v416 = vadd.f32 0.0, %v415
      %v417 = vpop.f32.mrf.mxu0
      %418 = vmatprep.mubr.bf16.mxu0 0
      %419 = vmatmul.mubr.bf16.gmra.mxu0 %v315
      %v420 = vpop.f32.mrf.mxu0
      %v421 = vadd.f32 0.0, %v420
      %v422 = vpop.f32.mrf.mxu0
      %v423 = vpop.f32.mrf.mxu0
      %v424 = vadd.f32 0.0, %v423
      %v425 = vpop.f32.mrf.mxu0
      %426 = vmatprep.mubr.bf16.mxu0 0
      %427 = vmatmul.mubr.bf16.gmra.mxu0 %v316
      %v428 = vpop.f32.mrf.mxu0
      %v429 = vadd.f32 0.0, %v428
      %v430 = vpop.f32.mrf.mxu0
      %v431 = vpop.f32.mrf.mxu0
      %v432 = vadd.f32 0.0, %v431
      %v433 = vpop.f32.mrf.mxu0
      %434 = vmatprep.mubr.bf16.mxu0 0
      %435 = vmatmul.mubr.bf16.gmra.mxu0 %v317
      %v436 = vpop.f32.mrf.mxu0
      %v437 = vadd.f32 0.0, %v436
      %v438 = vpop.f32.mrf.mxu0
      %v439 = vpop.f32.mrf.mxu0
      %v440 = vadd.f32 0.0, %v439
      %v441 = vpop.f32.mrf.mxu0
      %442 = vmatprep.mubr.bf16.mxu0 0
      %443 = vmatmul.mubr.bf16.gmra.mxu0 %v318
      %v444 = vpop.f32.mrf.mxu0
      %v445 = vadd.f32 0.0, %v444
      %v446 = vpop.f32.mrf.mxu0
      %v447 = vpop.f32.mrf.mxu0
      %v448 = vadd.f32 0.0, %v447
      %v449 = vpop.f32.mrf.mxu0
      %450 = vmatprep.mubr.bf16.mxu0 0
      %451 = vmatmul.mubr.bf16.gmra.mxu0 %v319
      %v452 = vpop.f32.mrf.mxu0
      %v453 = vadd.f32 0.0, %v452
      %v454 = vpop.f32.mrf.mxu0
      %v455 = vpop.f32.mrf.mxu0
      %v456 = vadd.f32 0.0, %v455
      %v457 = vpop.f32.mrf.mxu0
      %458 = vmatprep.mubr.bf16.mxu0 0
      %459 = vmatmul.mubr.bf16.gmra.mxu0 %v320
      %v460 = vpop.f32.mrf.mxu0
      %v461 = vadd.f32 0.0, %v460
      %v462 = vpop.f32.mrf.mxu0
      %v463 = vpop.f32.mrf.mxu0
      %v464 = vadd.f32 0.0, %v463
      %v465 = vpop.f32.mrf.mxu0
      %466 = vmatprep.mubr.bf16.mxu0 0
      %467 = vmatmul.mubr.bf16.gmra.mxu0 %v321
      %v468 = vpop.f32.mrf.mxu0
      %v469 = vadd.f32 0.0, %v468
      %v470 = vpop.f32.mrf.mxu0
      %v471 = vpop.f32.mrf.mxu0
      %v472 = vadd.f32 0.0, %v471
      %v473 = vpop.f32.mrf.mxu0
      %474 = vdwg.mxu0
      %475 = vst [vmem:[%s240] sm:$0xff] %v413
      %476 = vst [vmem:[%s240 + $0x8] sm:$0xff] %v416
      %477 = vst [vmem:[%s240 + $0x10] sm:$0xff] %v421
      %478 = vst [vmem:[%s240 + $0x18] sm:$0xff] %v424
      %479 = vst [vmem:[%s240 + $0x20] sm:$0xff] %v429
      %480 = vst [vmem:[%s240 + $0x28] sm:$0xff] %v432
      %481 = vst [vmem:[%s240 + $0x30] sm:$0xff] %v437
      %482 = vst [vmem:[%s240 + $0x38] sm:$0xff] %v440
      %483 = vst [vmem:[%s240 + $0x40] sm:$0xff] %v445
      %484 = vst [vmem:[%s240 + $0x48] sm:$0xff] %v448
      %485 = vst [vmem:[%s240 + $0x50] sm:$0xff] %v453
      %486 = vst [vmem:[%s240 + $0x58] sm:$0xff] %v456
      %487 = vst [vmem:[%s240 + $0x60] sm:$0xff] %v461
      %488 = vst [vmem:[%s240 + $0x68] sm:$0xff] %v464
      %489 = vst [vmem:[%s240 + $0x70] sm:$0xff] %v469
      %490 = vst [vmem:[%s240 + $0x78] sm:$0xff] %v472
      %v491 = vadd.f32 %v413, %v416
      %v492 = vadd.f32 %v491, %v421
      %v493 = vadd.f32 %v492, %v424
      %v494 = vadd.f32 %v493, %v429
      %v495 = vadd.f32 %v494, %v432
      %v496 = vadd.f32 %v495, %v437
      %v497 = vadd.f32 %v496, %v440
      %v498 = vadd.f32 %v497, %v445
      %v499 = vadd.f32 %v498, %v448
      %v500 = vadd.f32 %v499, %v453
      %v501 = vadd.f32 %v500, %v456
      %v502 = vadd.f32 %v501, %v461
      %v503 = vadd.f32 %v502, %v464
      %v504 = vadd.f32 %v503, %v469
      %v505 = vadd.f32 %v504, %v472
      %v506 = vrot.slane %v505, 4
      %v507 = vadd.f32 %v505, %v506
      %v508 = vrot.slane %v507, 2
      %v509 = vadd.f32 %v507, %v508
      %v510 = vrot.slane %v509, 1
      %v511 = vadd.f32 %v509, %v510
      %512 = vst [vmem:[%s248] sm:$0x1] %v511
      %v513 = vmul.f32 %v413, %v413
      %v514 = vmul.f32 %v416, %v416
      %v515 = vmul.f32 %v421, %v421
      %v516 = vmul.f32 %v424, %v424
      %v517 = vmul.f32 %v429, %v429
      %v518 = vmul.f32 %v432, %v432
      %v519 = vmul.f32 %v437, %v437
      %v520 = vmul.f32 %v440, %v440
      %v521 = vmul.f32 %v445, %v445
      %v522 = vmul.f32 %v448, %v448
      %v523 = vmul.f32 %v453, %v453
      %v524 = vmul.f32 %v456, %v456
      %v525 = vmul.f32 %v461, %v461
      %v526 = vmul.f32 %v464, %v464
      %v527 = vmul.f32 %v469, %v469
      %v528 = vmul.f32 %v472, %v472
      %v529 = vadd.f32 %v513, %v514
      %v530 = vadd.f32 %v529, %v515
      %v531 = vadd.f32 %v530, %v516
      %v532 = vadd.f32 %v531, %v517
      %v533 = vadd.f32 %v532, %v518
      %v534 = vadd.f32 %v533, %v519
      %v535 = vadd.f32 %v534, %v520
      %v536 = vadd.f32 %v535, %v521
      %v537 = vadd.f32 %v536, %v522
      %v538 = vadd.f32 %v537, %v523
      %v539 = vadd.f32 %v538, %v524
      %v540 = vadd.f32 %v539, %v525
      %v541 = vadd.f32 %v540, %v526
      %v542 = vadd.f32 %v541, %v527
      %v543 = vadd.f32 %v542, %v528
      %v544 = vrot.slane %v543, 4
      %v545 = vadd.f32 %v543, %v544
      %v546 = vrot.slane %v545, 2
      %v547 = vadd.f32 %v545, %v546
      %v548 = vrot.slane %v547, 1
      %v549 = vadd.f32 %v547, %v548
      %550 = vst [vmem:[%s248 + $0x1] sm:$0x1] %v549
      %s551 = smul.u32 16, %s20
      %p552 = scmp.lt.s32.totalorder %s19, 3
      %s553 = scalar_select %p552, %s19, 3
      %p554 = scmp.lt.s32.totalorder %s551, 15
      %s555 = scalar_select %p554, %s551, 15
      %s556 = smul.addr %s553, 16
      %s557 = sadd.s32 %s555, %s556
      %s558 = smul.addr %s557, 8
      %s559 = scalar_lea.vmem %s2, %s558
      %p560 = scmp.lt.s32.totalorder %s19, 3
      %s561 = scalar_select %p560, %s19, 3
      %p562 = scmp.lt.s32.totalorder %s20, 0
      %s563 = scalar_select %p562, %s20, 0
      %s564 = sadd.s32 %s563, %s561
      %s565 = smul.addr %s564, 2
      %s566 = scalar_lea.vmem %s3, %s565
      // Predicated region
      $region29: #{generator_forward.17} parent=27 // pred_check
        %p567 = pneg %p101
      $region30: #{generator_forward.17} parent=27 // pred_check_branch
        %569 = sbr.rel (%p567) target = $region32
      $region31: #{generator_forward.17} parent=27 // pred_region
        %s570 = smul.u32 16, %s20
      $region32: #{generator_forward.17} parent=27 // pred_fallthru
        _
      // Predicated region
      $region33: #{generator_forward.17} parent=27 // pred_check
        %p571 = pneg %p129
      $region34: #{generator_forward.17} parent=27 // pred_check_branch
        %573 = sbr.rel (%p571) target = $region36
      $region35: #{generator_forward.17} parent=27 // pred_region
        _
      $region36: #{generator_forward.17} parent=27 // pred_fallthru
        _
    $region28: #{generator_forward.17} parent=5 // pred_fallthru
      _
    %p574 = scmp.le.s32.totalorder 2, %s10
    // Predicated region
    $region37: #{generator_forward.17} parent=5 // pred_check
      %p575 = pneg %p574
    $region38: #{generator_forward.17} parent=5 // pred_check_branch
      %577 = sbr.rel (%p575) target = $region40
    $region39: #{generator_forward.17} parent=5 // pred_region
      %s578 = ssub.s32 %s10, 2
      // Predicated region
      $region41: #{generator_forward.17} parent=39 // pred_check
        %p579 = pneg %p107
      $region42: #{generator_forward.17} parent=39 // pred_check_branch
        %581 = sbr.rel (%p579) target = $region44
      $region43: #{generator_forward.17} parent=39 // pred_region
        %s582 = smul.u32 16, %s22
        %p583 = scmp.lt.s32.totalorder %s21, 3
        %s584 = scalar_select %p583, %s21, 3
        %p585 = scmp.lt.s32.totalorder %s582, 15
        %s586 = scalar_select %p585, %s582, 15
        %s587 = smul.addr %s584, 16
        %s588 = sadd.s32 %s586, %s587
        %s589 = smul.addr %s588, 8
        %s590 = scalar_lea.vmem %s2, %s589
      $region44: #{generator_forward.17} parent=39 // pred_fallthru
        _
      // Predicated region
      $region45: #{generator_forward.17} parent=39 // pred_check
        %p591 = pneg %p135
      $region46: #{generator_forward.17} parent=39 // pred_check_branch
        %593 = sbr.rel (%p591) target = $region48
      $region47: #{generator_forward.17} parent=39 // pred_region
        %p594 = scmp.lt.s32.totalorder %s21, 3
        %s595 = scalar_select %p594, %s21, 3
        %p596 = scmp.lt.s32.totalorder %s22, 0
        %s597 = scalar_select %p596, %s22, 0
        %s598 = sadd.s32 %s597, %s595
        %s599 = smul.addr %s598, 2
        %s600 = scalar_lea.vmem %s3, %s599
      $region48: #{generator_forward.17} parent=39 // pred_fallthru
        _
    $region40: #{generator_forward.17} parent=5 // pred_fallthru
      _
  $region6: #{generator_forward.17} parent=0 // loop_footer
    %s14 = sadd.s32 1, %s10
  $region7: #{generator_forward.17} parent=0 // loop_footer_branch
    %9 = sbr.rel target = $region3
  $region8: #{generator_forward.17} parent=0 // loop_exit
    _

// kernel: generator_forward.18
$region0: #{generator_forward.18}
  #allocation0 [shape = 'u32[]', space=smem, size = 0x4, offset = 0x4, fixed_abs, tag = 'smem constant byte address 0x4 - core index']
  #allocation1 [shape = 'u32[144,128]{1,0:T(1,128)}', space=vmem, size = 0x12000, scoped, tag = 'internal scratch']
  %s0 = inlined_call_operand.vmem [shape: f32[4,128,128], index: 0, kind: input, shape index: {}]
  %s1 = inlined_call_operand.vmem [shape: f32[1,128], index: 1, kind: input, shape index: {}]
  %s2 = inlined_call_operand.vmem [shape: f32[1,128], index: 2, kind: input, shape index: {}]
  %s3 = inlined_call_operand.vmem [shape: bf16[4,128,128], index: 3, kind: output, shape index: {}]
  %s4 = sld [smem:[#allocation0]]
  $region45: #{generator_forward.18} parent=0
    _
  %s6 = ssub.s32 1, %s4
  %s7 = scalar_select 0, %s6, %s4
  loop: start=0, step=1, limit=6
  $region2: #{generator_forward.18} parent=0 // loop_pre_header
    _
  $region3: #{generator_forward.18} parent=0 // loop_header
    %s9 = sphi 0, %s13
    %p10 = scmp.ge.s32.totalorder %s9, 6
    %s16 = sphi 0, %s28
    %s17 = sphi 0, %s24
    %s18 = sphi 0, %s16
    %s19 = sphi 0, %s17
    %s20 = sphi 0, %s18
    %s21 = sphi 0, %s19
    %s33 = sphi 0, %s35
    %s36 = sphi 0, %s33
    %s37 = sphi 0, %s36
    %s53 = sphi 0, %s37
    %s57 = sphi 0, %s57
    %s59 = sphi 0, %s57
    %s60 = sphi 0, %s59
    %s74 = sphi 0, %s60
    %s78 = sphi 0, %s78
    %s80 = sphi 0, %s78
    %s81 = sphi 0, %s80
    %s95 = sphi 0, %s81
    %s103 = sphi 0, %s105
    %s106 = sphi 0, %s103
    %s107 = sphi 0, %s106
    %s123 = sphi 0, %s107
  $region4: #{generator_forward.18} parent=0 // loop_header_branch
    %12 = sbr.rel (%p10) target = $region8
  $region5: #{generator_forward.18} parent=0 // loop_body
    %s14 = ssub.s32 %s9, 1
    %s15 = ssub.s32 %s9, 2
    %s22 = sadd.s32 1, %s17
    %p23 = scmp.ge.s32.totalorder %s22, 1
    %s24 = scalar_select %p23, 0, %s22
    %s25 = sadd.s32 1, %s16
    %s26 = scalar_select %p23, %s25, %s16
    %p27 = scmp.ge.s32.totalorder %s26, 4
    %s28 = scalar_select %p27, 0, %s26
    %s29 = ssub.s32 %s16, %s28
    %s30 = ssub.s32 %s17, %s24
    %s31 = sor.u32 %s29, %s30
    %p32 = scmp.eq.s32.totalorder %s31, 0
    %s34 = sadd.s32 %s33, 1
    %s35 = scalar_select %p32, %s33, %s34
    %p38 = pneg %p32
    %p39 = scmp.eq.s32.totalorder %s9, 3
    %p40 = por %p38, %p39
    %p41 = scmp.ne.s32.totalorder %s33, %s36
    %p42 = scmp.eq.s32.totalorder %s9, 0
    %p43 = por %p41, %p42
    %p44 = scmp.ne.s32.totalorder %s33, %s36
    %p45 = scmp.eq.s32.totalorder %s14, 3
    %p46 = por %p44, %p45
    %p47 = scmp.ne.s32.totalorder %s36, %s37
    %p48 = scmp.eq.s32.totalorder %s14, 0
    %p49 = por %p47, %p48
    %p50 = scmp.ne.s32.totalorder %s36, %s37
    %p51 = scmp.eq.s32.totalorder %s15, 3
    %p52 = por %p50, %p51
    %p54 = scmp.ne.s32.totalorder %s37, %s53
    %p55 = scmp.eq.s32.totalorder %s15, 0
    %p56 = por %p54, %p55
    %s58 = sadd.s32 %s57, 1
    %p61 = scmp.eq.s32.totalorder %s9, 3
    %p62 = scmp.ne.s32.totalorder %s57, %s59
    %p63 = scmp.eq.s32.totalorder %s9, 0
    %p64 = por %p62, %p63
    %p65 = scmp.ne.s32.totalorder %s57, %s59
    %p66 = scmp.eq.s32.totalorder %s14, 3
    %p67 = por %p65, %p66
    %p68 = scmp.ne.s32.totalorder %s59, %s60
    %p69 = scmp.eq.s32.totalorder %s14, 0
    %p70 = por %p68, %p69
    %p71 = scmp.ne.s32.totalorder %s59, %s60
    %p72 = scmp.eq.s32.totalorder %s15, 3
    %p73 = por %p71, %p72
    %p75 = scmp.ne.s32.totalorder %s60, %s74
    %p76 = scmp.eq.s32.totalorder %s15, 0
    %p77 = por %p75, %p76
    %s79 = sadd.s32 %s78, 1
    %p82 = scmp.eq.s32.totalorder %s9, 3
    %p83 = scmp.ne.s32.totalorder %s78, %s80
    %p84 = scmp.eq.s32.totalorder %s9, 0
    %p85 = por %p83, %p84
    %p86 = scmp.ne.s32.totalorder %s78, %s80
    %p87 = scmp.eq.s32.totalorder %s14, 3
    %p88 = por %p86, %p87
    %p89 = scmp.ne.s32.totalorder %s80, %s81
    %p90 = scmp.eq.s32.totalorder %s14, 0
    %p91 = por %p89, %p90
    %p92 = scmp.ne.s32.totalorder %s80, %s81
    %p93 = scmp.eq.s32.totalorder %s15, 3
    %p94 = por %p92, %p93
    %p96 = scmp.ne.s32.totalorder %s81, %s95
    %p97 = scmp.eq.s32.totalorder %s15, 0
    %p98 = por %p96, %p97
    %s99 = ssub.s32 %s16, %s28
    %s100 = ssub.s32 %s17, %s24
    %s101 = sor.u32 %s99, %s100
    %p102 = scmp.eq.s32.totalorder %s101, 0
    %s104 = sadd.s32 %s103, 1
    %s105 = scalar_select %p102, %s103, %s104
    %p108 = pneg %p102
    %p109 = scmp.eq.s32.totalorder %s9, 3
    %p110 = por %p108, %p109
    %p111 = scmp.ne.s32.totalorder %s103, %s106
    %p112 = scmp.eq.s32.totalorder %s9, 0
    %p113 = por %p111, %p112
    %p114 = scmp.ne.s32.totalorder %s103, %s106
    %p115 = scmp.eq.s32.totalorder %s14, 3
    %p116 = por %p114, %p115
    %p117 = scmp.ne.s32.totalorder %s106, %s107
    %p118 = scmp.eq.s32.totalorder %s14, 0
    %p119 = por %p117, %p118
    %p120 = scmp.ne.s32.totalorder %s106, %s107
    %p121 = scmp.eq.s32.totalorder %s15, 3
    %p122 = por %p120, %p121
    %p124 = scmp.ne.s32.totalorder %s107, %s123
    %p125 = scmp.eq.s32.totalorder %s15, 0
    %p126 = por %p124, %p125
    %p127 = scmp.le.s32.totalorder 1, %s9
    %p128 = scmp.lt.s32.totalorder %s9, 5
    %p129 = pnand %p127, %p128
    %p130 = pneg %p129
    // Predicated region
    $region9: #{generator_forward.18} parent=5 // pred_check
      _
    $region10: #{generator_forward.18} parent=5 // pred_check_branch
      %132 = sbr.rel (%p129) target = $region12
    $region11: #{generator_forward.18} parent=5 // pred_region
      %s133 = ssub.s32 %s9, 1
      // Predicated region
      $region13: #{generator_forward.18} parent=11 // pred_check
        %p134 = pneg %p70
      $region14: #{generator_forward.18} parent=11 // pred_check_branch
        %136 = sbr.rel (%p134) target = $region16
      $region15: #{generator_forward.18} parent=11 // pred_region
        _
      $region16: #{generator_forward.18} parent=11 // pred_fallthru
        _
      // Predicated region
      $region17: #{generator_forward.18} parent=11 // pred_check
        %p137 = pneg %p91
      $region18: #{generator_forward.18} parent=11 // pred_check_branch
        %139 = sbr.rel (%p137) target = $region20
      $region19: #{generator_forward.18} parent=11 // pred_region
        _
      $region20: #{generator_forward.18} parent=11 // pred_fallthru
        _
    $region12: #{generator_forward.18} parent=5 // pred_fallthru
      _
    %p140 = scmp.lt.s32.totalorder %s9, 4
    // Predicated region
    $region21: #{generator_forward.18} parent=5 // pred_check
      %p141 = pneg %p140
    $region22: #{generator_forward.18} parent=5 // pred_check_branch
      %143 = sbr.rel (%p141) target = $region24
    $region23: #{generator_forward.18} parent=5 // pred_region
      // Predicated region
      $region25: #{generator_forward.18} parent=23 // pred_check
        %p144 = pneg %p43
      $region26: #{generator_forward.18} parent=23 // pred_check_branch
        %146 = sbr.rel (%p144) target = $region28
      $region27: #{generator_forward.18} parent=23 // pred_region
        %s147 = smul.u32 16, %s17
        %p148 = scmp.lt.s32.totalorder %s16, 3
        %s149 = scalar_select %p148, %s16, 3
        %p150 = scmp.lt.s32.totalorder %s147, 15
        %s151 = scalar_select %p150, %s147, 15
        %s152 = smul.addr %s149, 16
        %s153 = sadd.s32 %s151, %s152
        %s154 = smul.addr %s153, 8
        %s155 = scalar_lea.vmem %s0, %s154
        %s156 = smul.u32 16, %s17
      $region28: #{generator_forward.18} parent=23 // pred_fallthru
        _
    $region24: #{generator_forward.18} parent=5 // pred_fallthru
      _
    %p157 = scmp.le.s32.totalorder 1, %s9
    %p158 = scmp.lt.s32.totalorder %s9, 5
    %p159 = pnand %p157, %p158
    %p160 = pneg %p159
    // Predicated region
    $region29: #{generator_forward.18} parent=5 // pred_check
      _
    $region30: #{generator_forward.18} parent=5 // pred_check_branch
      %162 = sbr.rel (%p159) target = $region32
    $region31: #{generator_forward.18} parent=5 // pred_region
      %s163 = ssub.s32 %s9, 1
      %s164 = smul.u32 16, %s19
      %p165 = scmp.lt.s32.totalorder %s18, 3
      %s166 = scalar_select %p165, %s18, 3
      %p167 = scmp.lt.s32.totalorder %s164, 15
      %s168 = scalar_select %p167, %s164, 15
      %s169 = smul.addr %s166, 16
      %s170 = sadd.s32 %s168, %s169
      %s171 = smul.addr %s170, 8
      %s172 = scalar_lea.vmem %s0, %s171
      %p173 = pneg %p49
      %p174 = pneg %p46
      %p175 = pneg %p70
      %p176 = pneg %p67
      %p177 = pneg %p91
      %p178 = pneg %p88
      %p179 = pneg %p119
      %p180 = pneg %p116
      %s181 = smul.u32 16, %s19
      %p182 = scmp.lt.s32.totalorder %s18, 3
      %s183 = scalar_select %p182, %s18, 3
      %p184 = scmp.lt.s32.totalorder %s181, 15
      %s185 = scalar_select %p184, %s181, 15
      %s186 = smul.addr %s183, 16
      %s187 = sadd.s32 %s185, %s186
      %s188 = smul.addr %s187, 4
      %s189 = scalar_lea.vmem %s3, %s188
      %s190 = smul.u32 16, %s19
      %p191 = scmp.lt.s32.totalorder %s18, 3
      %s192 = scalar_select %p191, %s18, 3
      %p193 = scmp.lt.s32.totalorder %s190, 15
      %s194 = scalar_select %p193, %s190, 15
      %s195 = smul.addr %s192, 16
      %s196 = sadd.s32 %s194, %s195
      %s197 = smul.addr %s196, 8
      %s198 = scalar_lea.vmem %s0, %s197
      %s199 = smul.u32 16, %s19
      %s200 = smul.u32 16, %s19
      %p201 = scmp.lt.s32.totalorder %s18, 3
      %s202 = scalar_select %p201, %s18, 3
      %p203 = scmp.lt.s32.totalorder %s200, 15
      %s204 = scalar_select %p203, %s200, 15
      %s205 = smul.addr %s202, 16
      %s206 = sadd.s32 %s204, %s205
      %s207 = smul.addr %s206, 4
      %s208 = scalar_lea.vmem %s3, %s207
      %s209 = smul.u32 16, %s19
      %v210 = vld [vmem:[%s198] sm:$0xff]
      %v211 = vld [vmem:[%s198 + $0x8] sm:$0xff]
      %v212 = vld [vmem:[%s198 + $0x10] sm:$0xff]
      %v213 = vld [vmem:[%s198 + $0x18] sm:$0xff]
      %v214 = vld [vmem:[%s198 + $0x20] sm:$0xff]
      %v215 = vld [vmem:[%s198 + $0x28] sm:$0xff]
      %v216 = vld [vmem:[%s198 + $0x30] sm:$0xff]
      %v217 = vld [vmem:[%s198 + $0x38] sm:$0xff]
      %v218 = vld [vmem:[%s198 + $0x40] sm:$0xff]
      %v219 = vld [vmem:[%s198 + $0x48] sm:$0xff]
      %v220 = vld [vmem:[%s198 + $0x50] sm:$0xff]
      %v221 = vld [vmem:[%s198 + $0x58] sm:$0xff]
      %v222 = vld [vmem:[%s198 + $0x60] sm:$0xff]
      %v223 = vld [vmem:[%s198 + $0x68] sm:$0xff]
      %v224 = vld [vmem:[%s198 + $0x70] sm:$0xff]
      %v225 = vld [vmem:[%s198 + $0x78] sm:$0xff]
      %v226 = vld [vmem:[%s1] sm:$0x1]
      %v228 = vlaneseq
      %v229 = vshrl.u32 %v228, 7
      %v230 = vsub.s32 0, %v229
      %v231 = vrot.slane %v226, %v230
      %v233 = vmul.f32 %v210, %v231
      %v234 = vmul.f32 %v211, %v231
      %v235 = vmul.f32 %v212, %v231
      %v236 = vmul.f32 %v213, %v231
      %v237 = vmul.f32 %v214, %v231
      %v238 = vmul.f32 %v215, %v231
      %v239 = vmul.f32 %v216, %v231
      %v240 = vmul.f32 %v217, %v231
      %v241 = vmul.f32 %v218, %v231
      %v242 = vmul.f32 %v219, %v231
      %v243 = vmul.f32 %v220, %v231
      %v244 = vmul.f32 %v221, %v231
      %v245 = vmul.f32 %v222, %v231
      %v246 = vmul.f32 %v223, %v231
      %v247 = vmul.f32 %v224, %v231
      %v248 = vmul.f32 %v225, %v231
      %v249 = vld [vmem:[%s2] sm:$0x1]
      %v251 = vlaneseq
      %v252 = vshrl.u32 %v251, 7
      %v253 = vsub.s32 0, %v252
      %v254 = vrot.slane %v249, %v253
      %v256 = vadd.f32 %v233, %v254
      %v257 = vadd.f32 %v234, %v254
      %v258 = vadd.f32 %v235, %v254
      %v259 = vadd.f32 %v236, %v254
      %v260 = vadd.f32 %v237, %v254
      %v261 = vadd.f32 %v238, %v254
      %v262 = vadd.f32 %v239, %v254
      %v263 = vadd.f32 %v240, %v254
      %v264 = vadd.f32 %v241, %v254
      %v265 = vadd.f32 %v242, %v254
      %v266 = vadd.f32 %v243, %v254
      %v267 = vadd.f32 %v244, %v254
      %v268 = vadd.f32 %v245, %v254
      %v269 = vadd.f32 %v246, %v254
      %v270 = vadd.f32 %v247, %v254
      %v271 = vadd.f32 %v248, %v254
      %v272 = vmax.f32 %v256, 0.0
      %v273 = vmax.f32 %v257, 0.0
      %v274 = vmax.f32 %v258, 0.0
      %v275 = vmax.f32 %v259, 0.0
      %v276 = vmax.f32 %v260, 0.0
      %v277 = vmax.f32 %v261, 0.0
      %v278 = vmax.f32 %v262, 0.0
      %v279 = vmax.f32 %v263, 0.0
      %v280 = vmax.f32 %v264, 0.0
      %v281 = vmax.f32 %v265, 0.0
      %v282 = vmax.f32 %v266, 0.0
      %v283 = vmax.f32 %v267, 0.0
      %v284 = vmax.f32 %v268, 0.0
      %v285 = vmax.f32 %v269, 0.0
      %v286 = vmax.f32 %v270, 0.0
      %v287 = vmax.f32 %v271, 0.0
      %v288 = vpack.c.bf16 %v273, %v272
      %v289 = vpack.c.bf16 %v275, %v274
      %v290 = vpack.c.bf16 %v277, %v276
      %v291 = vpack.c.bf16 %v279, %v278
      %v292 = vpack.c.bf16 %v281, %v280
      %v293 = vpack.c.bf16 %v283, %v282
      %v294 = vpack.c.bf16 %v285, %v284
      %v295 = vpack.c.bf16 %v287, %v286
      %v304 = vunpack.c.l.b16 %v288
      %v305 = vunpack.c.h.b16 %v288
      %v306 = vunpack.c.l.b16 %v289
      %v307 = vunpack.c.h.b16 %v289
      %v308 = vunpack.c.l.b16 %v290
      %v309 = vunpack.c.h.b16 %v290
      %v310 = vunpack.c.l.b16 %v291
      %v311 = vunpack.c.h.b16 %v291
      %v312 = vunpack.c.l.b16 %v292
      %v313 = vunpack.c.h.b16 %v292
      %v314 = vunpack.c.l.b16 %v293
      %v315 = vunpack.c.h.b16 %v293
      %v316 = vunpack.c.l.b16 %v294
      %v317 = vunpack.c.h.b16 %v294
      %v318 = vunpack.c.l.b16 %v295
      %v319 = vunpack.c.h.b16 %v295
      %v320 = vpack.c.b16 %v304, %v304
      %v321 = vpack.c.b16 %v305, %v305
      %v322 = vpack.c.b16 %v306, %v306
      %v323 = vpack.c.b16 %v307, %v307
      %v324 = vpack.c.b16 %v308, %v308
      %v325 = vpack.c.b16 %v309, %v309
      %v326 = vpack.c.b16 %v310, %v310
      %v327 = vpack.c.b16 %v311, %v311
      %v328 = vpack.c.b16 %v312, %v312
      %v329 = vpack.c.b16 %v313, %v313
      %v330 = vpack.c.b16 %v314, %v314
      %v331 = vpack.c.b16 %v315, %v315
      %v332 = vpack.c.b16 %v316, %v316
      %v333 = vpack.c.b16 %v317, %v317
      %v334 = vpack.c.b16 %v318, %v318
      %v335 = vpack.c.b16 %v319, %v319
      %352 = vst [vmem:[%s208] sm:$0xf] %v320
      %353 = vst [vmem:[%s208 + $0x4] sm:$0xf] %v321
      %354 = vst [vmem:[%s208 + $0x8] sm:$0xf] %v322
      %355 = vst [vmem:[%s208 + $0xc] sm:$0xf] %v323
      %356 = vst [vmem:[%s208 + $0x10] sm:$0xf] %v324
      %357 = vst [vmem:[%s208 + $0x14] sm:$0xf] %v325
      %358 = vst [vmem:[%s208 + $0x18] sm:$0xf] %v326
      %359 = vst [vmem:[%s208 + $0x1c] sm:$0xf] %v327
      %360 = vst [vmem:[%s208 + $0x20] sm:$0xf] %v328
      %361 = vst [vmem:[%s208 + $0x24] sm:$0xf] %v329
      %362 = vst [vmem:[%s208 + $0x28] sm:$0xf] %v330
      %363 = vst [vmem:[%s208 + $0x2c] sm:$0xf] %v331
      %364 = vst [vmem:[%s208 + $0x30] sm:$0xf] %v332
      %365 = vst [vmem:[%s208 + $0x34] sm:$0xf] %v333
      %366 = vst [vmem:[%s208 + $0x38] sm:$0xf] %v334
      %367 = vst [vmem:[%s208 + $0x3c] sm:$0xf] %v335
      %s368 = smul.u32 16, %s19
      %p369 = scmp.lt.s32.totalorder %s18, 3
      %s370 = scalar_select %p369, %s18, 3
      %p371 = scmp.lt.s32.totalorder %s368, 15
      %s372 = scalar_select %p371, %s368, 15
      %s373 = smul.addr %s370, 16
      %s374 = sadd.s32 %s372, %s373
      %s375 = smul.addr %s374, 4
      %s376 = scalar_lea.vmem %s3, %s375
      // Predicated region
      $region33: #{generator_forward.18} parent=31 // pred_check
        %p377 = pneg %p116
      $region34: #{generator_forward.18} parent=31 // pred_check_branch
        %379 = sbr.rel (%p377) target = $region36
      $region35: #{generator_forward.18} parent=31 // pred_region
        %s380 = smul.u32 16, %s19
      $region36: #{generator_forward.18} parent=31 // pred_fallthru
        _
    $region32: #{generator_forward.18} parent=5 // pred_fallthru
      _
    %p381 = scmp.le.s32.totalorder 2, %s9
    // Predicated region
    $region37: #{generator_forward.18} parent=5 // pred_check
      %p382 = pneg %p381
    $region38: #{generator_forward.18} parent=5 // pred_check_branch
      %384 = sbr.rel (%p382) target = $region40
    $region39: #{generator_forward.18} parent=5 // pred_region
      %s385 = ssub.s32 %s9, 2
      // Predicated region
      $region41: #{generator_forward.18} parent=39 // pred_check
        %p386 = pneg %p122
      $region42: #{generator_forward.18} parent=39 // pred_check_branch
        %388 = sbr.rel (%p386) target = $region44
      $region43: #{generator_forward.18} parent=39 // pred_region
        %s389 = smul.u32 16, %s21
        %p390 = scmp.lt.s32.totalorder %s20, 3
        %s391 = scalar_select %p390, %s20, 3
        %p392 = scmp.lt.s32.totalorder %s389, 15
        %s393 = scalar_select %p392, %s389, 15
        %s394 = smul.addr %s391, 16
        %s395 = sadd.s32 %s393, %s394
        %s396 = smul.addr %s395, 4
        %s397 = scalar_lea.vmem %s3, %s396
      $region44: #{generator_forward.18} parent=39 // pred_fallthru
        _
    $region40: #{generator_forward.18} parent=5 // pred_fallthru
      _
  $region6: #{generator_forward.18} parent=0 // loop_footer
    %s13 = sadd.s32 1, %s9
  $region7: #{generator_forward.18} parent=0 // loop_footer_branch
    %8 = sbr.rel target = $region3
  $region8: #{generator_forward.18} parent=0 // loop_exit
    _

// kernel: generator_forward.20
$region0: #{generator_forward.20}
  #allocation0 [shape = 'u32[]', space=smem, size = 0x4, offset = 0x4, fixed_abs, tag = 'smem constant byte address 0x4 - core index']
  #allocation1 [shape = 'u32[144,128]{1,0:T(1,128)}', space=vmem, size = 0x12000, scoped, tag = 'internal scratch']
  %s0 = inlined_call_operand.vmem [shape: f32[4,512,128], index: 0, kind: input, shape index: {}]
  %s1 = inlined_call_operand.vmem [shape: f32[1,128], index: 1, kind: input, shape index: {}]
  %s2 = inlined_call_operand.vmem [shape: f32[1,128], index: 2, kind: input, shape index: {}]
  %s3 = inlined_call_operand.vmem [shape: bf16[4,512,128], index: 3, kind: output, shape index: {}]
  %s4 = sld [smem:[#allocation0]]
  $region45: #{generator_forward.20} parent=0
    _
  %s6 = ssub.s32 1, %s4
  %s7 = scalar_select 0, %s6, %s4
  loop: start=0, step=1, limit=6
  $region2: #{generator_forward.20} parent=0 // loop_pre_header
    _
  $region3: #{generator_forward.20} parent=0 // loop_header
    %s9 = sphi 0, %s13
    %p10 = scmp.ge.s32.totalorder %s9, 6
    %s16 = sphi 0, %s28
    %s17 = sphi 0, %s24
    %s18 = sphi 0, %s16
    %s19 = sphi 0, %s17
    %s20 = sphi 0, %s18
    %s21 = sphi 0, %s19
    %s33 = sphi 0, %s35
    %s36 = sphi 0, %s33
    %s37 = sphi 0, %s36
    %s53 = sphi 0, %s37
    %s57 = sphi 0, %s57
    %s59 = sphi 0, %s57
    %s60 = sphi 0, %s59
    %s74 = sphi 0, %s60
    %s78 = sphi 0, %s78
    %s80 = sphi 0, %s78
    %s81 = sphi 0, %s80
    %s95 = sphi 0, %s81
    %s103 = sphi 0, %s105
    %s106 = sphi 0, %s103
    %s107 = sphi 0, %s106
    %s123 = sphi 0, %s107
  $region4: #{generator_forward.20} parent=0 // loop_header_branch
    %12 = sbr.rel (%p10) target = $region8
  $region5: #{generator_forward.20} parent=0 // loop_body
    %s14 = ssub.s32 %s9, 1
    %s15 = ssub.s32 %s9, 2
    %s22 = sadd.s32 1, %s17
    %p23 = scmp.ge.s32.totalorder %s22, 1
    %s24 = scalar_select %p23, 0, %s22
    %s25 = sadd.s32 1, %s16
    %s26 = scalar_select %p23, %s25, %s16
    %p27 = scmp.ge.s32.totalorder %s26, 4
    %s28 = scalar_select %p27, 0, %s26
    %s29 = ssub.s32 %s16, %s28
    %s30 = ssub.s32 %s17, %s24
    %s31 = sor.u32 %s29, %s30
    %p32 = scmp.eq.s32.totalorder %s31, 0
    %s34 = sadd.s32 %s33, 1
    %s35 = scalar_select %p32, %s33, %s34
    %p38 = pneg %p32
    %p39 = scmp.eq.s32.totalorder %s9, 3
    %p40 = por %p38, %p39
    %p41 = scmp.ne.s32.totalorder %s33, %s36
    %p42 = scmp.eq.s32.totalorder %s9, 0
    %p43 = por %p41, %p42
    %p44 = scmp.ne.s32.totalorder %s33, %s36
    %p45 = scmp.eq.s32.totalorder %s14, 3
    %p46 = por %p44, %p45
    %p47 = scmp.ne.s32.totalorder %s36, %s37
    %p48 = scmp.eq.s32.totalorder %s14, 0
    %p49 = por %p47, %p48
    %p50 = scmp.ne.s32.totalorder %s36, %s37
    %p51 = scmp.eq.s32.totalorder %s15, 3
    %p52 = por %p50, %p51
    %p54 = scmp.ne.s32.totalorder %s37, %s53
    %p55 = scmp.eq.s32.totalorder %s15, 0
    %p56 = por %p54, %p55
    %s58 = sadd.s32 %s57, 1
    %p61 = scmp.eq.s32.totalorder %s9, 3
    %p62 = scmp.ne.s32.totalorder %s57, %s59
    %p63 = scmp.eq.s32.totalorder %s9, 0
    %p64 = por %p62, %p63
    %p65 = scmp.ne.s32.totalorder %s57, %s59
    %p66 = scmp.eq.s32.totalorder %s14, 3
    %p67 = por %p65, %p66
    %p68 = scmp.ne.s32.totalorder %s59, %s60
    %p69 = scmp.eq.s32.totalorder %s14, 0
    %p70 = por %p68, %p69
    %p71 = scmp.ne.s32.totalorder %s59, %s60
    %p72 = scmp.eq.s32.totalorder %s15, 3
    %p73 = por %p71, %p72
    %p75 = scmp.ne.s32.totalorder %s60, %s74
    %p76 = scmp.eq.s32.totalorder %s15, 0
    %p77 = por %p75, %p76
    %s79 = sadd.s32 %s78, 1
    %p82 = scmp.eq.s32.totalorder %s9, 3
    %p83 = scmp.ne.s32.totalorder %s78, %s80
    %p84 = scmp.eq.s32.totalorder %s9, 0
    %p85 = por %p83, %p84
    %p86 = scmp.ne.s32.totalorder %s78, %s80
    %p87 = scmp.eq.s32.totalorder %s14, 3
    %p88 = por %p86, %p87
    %p89 = scmp.ne.s32.totalorder %s80, %s81
    %p90 = scmp.eq.s32.totalorder %s14, 0
    %p91 = por %p89, %p90
    %p92 = scmp.ne.s32.totalorder %s80, %s81
    %p93 = scmp.eq.s32.totalorder %s15, 3
    %p94 = por %p92, %p93
    %p96 = scmp.ne.s32.totalorder %s81, %s95
    %p97 = scmp.eq.s32.totalorder %s15, 0
    %p98 = por %p96, %p97
    %s99 = ssub.s32 %s16, %s28
    %s100 = ssub.s32 %s17, %s24
    %s101 = sor.u32 %s99, %s100
    %p102 = scmp.eq.s32.totalorder %s101, 0
    %s104 = sadd.s32 %s103, 1
    %s105 = scalar_select %p102, %s103, %s104
    %p108 = pneg %p102
    %p109 = scmp.eq.s32.totalorder %s9, 3
    %p110 = por %p108, %p109
    %p111 = scmp.ne.s32.totalorder %s103, %s106
    %p112 = scmp.eq.s32.totalorder %s9, 0
    %p113 = por %p111, %p112
    %p114 = scmp.ne.s32.totalorder %s103, %s106
    %p115 = scmp.eq.s32.totalorder %s14, 3
    %p116 = por %p114, %p115
    %p117 = scmp.ne.s32.totalorder %s106, %s107
    %p118 = scmp.eq.s32.totalorder %s14, 0
    %p119 = por %p117, %p118
    %p120 = scmp.ne.s32.totalorder %s106, %s107
    %p121 = scmp.eq.s32.totalorder %s15, 3
    %p122 = por %p120, %p121
    %p124 = scmp.ne.s32.totalorder %s107, %s123
    %p125 = scmp.eq.s32.totalorder %s15, 0
    %p126 = por %p124, %p125
    %p127 = scmp.le.s32.totalorder 1, %s9
    %p128 = scmp.lt.s32.totalorder %s9, 5
    %p129 = pnand %p127, %p128
    %p130 = pneg %p129
    // Predicated region
    $region9: #{generator_forward.20} parent=5 // pred_check
      _
    $region10: #{generator_forward.20} parent=5 // pred_check_branch
      %132 = sbr.rel (%p129) target = $region12
    $region11: #{generator_forward.20} parent=5 // pred_region
      %s133 = ssub.s32 %s9, 1
      // Predicated region
      $region13: #{generator_forward.20} parent=11 // pred_check
        %p134 = pneg %p70
      $region14: #{generator_forward.20} parent=11 // pred_check_branch
        %136 = sbr.rel (%p134) target = $region16
      $region15: #{generator_forward.20} parent=11 // pred_region
        _
      $region16: #{generator_forward.20} parent=11 // pred_fallthru
        _
      // Predicated region
      $region17: #{generator_forward.20} parent=11 // pred_check
        %p137 = pneg %p91
      $region18: #{generator_forward.20} parent=11 // pred_check_branch
        %139 = sbr.rel (%p137) target = $region20
      $region19: #{generator_forward.20} parent=11 // pred_region
        _
      $region20: #{generator_forward.20} parent=11 // pred_fallthru
        _
    $region12: #{generator_forward.20} parent=5 // pred_fallthru
      _
    %p140 = scmp.lt.s32.totalorder %s9, 4
    // Predicated region
    $region21: #{generator_forward.20} parent=5 // pred_check
      %p141 = pneg %p140
    $region22: #{generator_forward.20} parent=5 // pred_check_branch
      %143 = sbr.rel (%p141) target = $region24
    $region23: #{generator_forward.20} parent=5 // pred_region
      // Predicated region
      $region25: #{generator_forward.20} parent=23 // pred_check
        %p144 = pneg %p43
      $region26: #{generator_forward.20} parent=23 // pred_check_branch
        %146 = sbr.rel (%p144) target = $region28
      $region27: #{generator_forward.20} parent=23 // pred_region
        %s147 = smul.u32 64, %s17
        %p148 = scmp.lt.s32.totalorder %s16, 3
        %s149 = scalar_select %p148, %s16, 3
        %p150 = scmp.lt.s32.totalorder %s147, 63
        %s151 = scalar_select %p150, %s147, 63
        %s152 = smul.addr %s149, 64
        %s153 = sadd.s32 %s151, %s152
        %s154 = smul.addr %s153, 8
        %s155 = scalar_lea.vmem %s0, %s154
        %s156 = smul.u32 64, %s17
      $region28: #{generator_forward.20} parent=23 // pred_fallthru
        _
    $region24: #{generator_forward.20} parent=5 // pred_fallthru
      _
    %p157 = scmp.le.s32.totalorder 1, %s9
    %p158 = scmp.lt.s32.totalorder %s9, 5
    %p159 = pnand %p157, %p158
    %p160 = pneg %p159
    // Predicated region
    $region29: #{generator_forward.20} parent=5 // pred_check
      _
    $region30: #{generator_forward.20} parent=5 // pred_check_branch
      %162 = sbr.rel (%p159) target = $region32
    $region31: #{generator_forward.20} parent=5 // pred_region
      %s163 = ssub.s32 %s9, 1
      %s164 = smul.u32 64, %s19
      %p165 = scmp.lt.s32.totalorder %s18, 3
      %s166 = scalar_select %p165, %s18, 3
      %p167 = scmp.lt.s32.totalorder %s164, 63
      %s168 = scalar_select %p167, %s164, 63
      %s169 = smul.addr %s166, 64
      %s170 = sadd.s32 %s168, %s169
      %s171 = smul.addr %s170, 8
      %s172 = scalar_lea.vmem %s0, %s171
      %p173 = pneg %p49
      %p174 = pneg %p46
      %p175 = pneg %p70
      %p176 = pneg %p67
      %p177 = pneg %p91
      %p178 = pneg %p88
      %p179 = pneg %p119
      %p180 = pneg %p116
      %s181 = smul.u32 64, %s19
      %p182 = scmp.lt.s32.totalorder %s18, 3
      %s183 = scalar_select %p182, %s18, 3
      %p184 = scmp.lt.s32.totalorder %s181, 63
      %s185 = scalar_select %p184, %s181, 63
      %s186 = smul.addr %s183, 64
      %s187 = sadd.s32 %s185, %s186
      %s188 = smul.addr %s187, 4
      %s189 = scalar_lea.vmem %s3, %s188
      %s190 = smul.u32 64, %s19
      %p191 = scmp.lt.s32.totalorder %s18, 3
      %s192 = scalar_select %p191, %s18, 3
      %p193 = scmp.lt.s32.totalorder %s190, 63
      %s194 = scalar_select %p193, %s190, 63
      %s195 = smul.addr %s192, 64
      %s196 = sadd.s32 %s194, %s195
      %s197 = smul.addr %s196, 8
      %s198 = scalar_lea.vmem %s0, %s197
      %s199 = smul.u32 64, %s19
      %s200 = smul.u32 64, %s19
      %p201 = scmp.lt.s32.totalorder %s18, 3
      %s202 = scalar_select %p201, %s18, 3
      %p203 = scmp.lt.s32.totalorder %s200, 63
      %s204 = scalar_select %p203, %s200, 63
      %s205 = smul.addr %s202, 64
      %s206 = sadd.s32 %s204, %s205
      %s207 = smul.addr %s206, 4
      %s208 = scalar_lea.vmem %s3, %s207
      %s209 = smul.u32 64, %s19
      %v210 = vld [vmem:[%s198] sm:$0xff]
      %v211 = vld [vmem:[%s198 + $0x8] sm:$0xff]
      %v212 = vld [vmem:[%s198 + $0x10] sm:$0xff]
      %v213 = vld [vmem:[%s198 + $0x18] sm:$0xff]
      %v214 = vld [vmem:[%s198 + $0x20] sm:$0xff]
      %v215 = vld [vmem:[%s198 + $0x28] sm:$0xff]
      %v216 = vld [vmem:[%s198 + $0x30] sm:$0xff]
      %v217 = vld [vmem:[%s198 + $0x38] sm:$0xff]
      %v218 = vld [vmem:[%s198 + $0x40] sm:$0xff]
      %v219 = vld [vmem:[%s198 + $0x48] sm:$0xff]
      %v220 = vld [vmem:[%s198 + $0x50] sm:$0xff]
      %v221 = vld [vmem:[%s198 + $0x58] sm:$0xff]
      %v222 = vld [vmem:[%s198 + $0x60] sm:$0xff]
      %v223 = vld [vmem:[%s198 + $0x68] sm:$0xff]
      %v224 = vld [vmem:[%s198 + $0x70] sm:$0xff]
      %v225 = vld [vmem:[%s198 + $0x78] sm:$0xff]
      %v226 = vld [vmem:[%s198 + $0x80] sm:$0xff]
      %v227 = vld [vmem:[%s198 + $0x88] sm:$0xff]
      %v228 = vld [vmem:[%s198 + $0x90] sm:$0xff]
      %v229 = vld [vmem:[%s198 + $0x98] sm:$0xff]
      %v230 = vld [vmem:[%s198 + $0xa0] sm:$0xff]
      %v231 = vld [vmem:[%s198 + $0xa8] sm:$0xff]
      %v232 = vld [vmem:[%s198 + $0xb0] sm:$0xff]
      %v233 = vld [vmem:[%s198 + $0xb8] sm:$0xff]
      %v234 = vld [vmem:[%s198 + $0xc0] sm:$0xff]
      %v235 = vld [vmem:[%s198 + $0xc8] sm:$0xff]
      %v236 = vld [vmem:[%s198 + $0xd0] sm:$0xff]
      %v237 = vld [vmem:[%s198 + $0xd8] sm:$0xff]
      %v238 = vld [vmem:[%s198 + $0xe0] sm:$0xff]
      %v239 = vld [vmem:[%s198 + $0xe8] sm:$0xff]
      %v240 = vld [vmem:[%s198 + $0xf0] sm:$0xff]
      %v241 = vld [vmem:[%s198 + $0xf8] sm:$0xff]
      %v242 = vld [vmem:[%s198 + $0x100] sm:$0xff]
      %v243 = vld [vmem:[%s198 + $0x108] sm:$0xff]
      %v244 = vld [vmem:[%s198 + $0x110] sm:$0xff]
      %v245 = vld [vmem:[%s198 + $0x118] sm:$0xff]
      %v246 = vld [vmem:[%s198 + $0x120] sm:$0xff]
      %v247 = vld [vmem:[%s198 + $0x128] sm:$0xff]
      %v248 = vld [vmem:[%s198 + $0x130] sm:$0xff]
      %v249 = vld [vmem:[%s198 + $0x138] sm:$0xff]
      %v250 = vld [vmem:[%s198 + $0x140] sm:$0xff]
      %v251 = vld [vmem:[%s198 + $0x148] sm:$0xff]
      %v252 = vld [vmem:[%s198 + $0x150] sm:$0xff]
      %v253 = vld [vmem:[%s198 + $0x158] sm:$0xff]
      %v254 = vld [vmem:[%s198 + $0x160] sm:$0xff]
      %v255 = vld [vmem:[%s198 + $0x168] sm:$0xff]
      %v256 = vld [vmem:[%s198 + $0x170] sm:$0xff]
      %v257 = vld [vmem:[%s198 + $0x178] sm:$0xff]
      %v258 = vld [vmem:[%s198 + $0x180] sm:$0xff]
      %v259 = vld [vmem:[%s198 + $0x188] sm:$0xff]
      %v260 = vld [vmem:[%s198 + $0x190] sm:$0xff]
      %v261 = vld [vmem:[%s198 + $0x198] sm:$0xff]
      %v262 = vld [vmem:[%s198 + $0x1a0] sm:$0xff]
      %v263 = vld [vmem:[%s198 + $0x1a8] sm:$0xff]
      %v264 = vld [vmem:[%s198 + $0x1b0] sm:$0xff]
      %v265 = vld [vmem:[%s198 + $0x1b8] sm:$0xff]
      %v266 = vld [vmem:[%s198 + $0x1c0] sm:$0xff]
      %v267 = vld [vmem:[%s198 + $0x1c8] sm:$0xff]
      %v268 = vld [vmem:[%s198 + $0x1d0] sm:$0xff]
      %v269 = vld [vmem:[%s198 + $0x1d8] sm:$0xff]
      %v270 = vld [vmem:[%s198 + $0x1e0] sm:$0xff]
      %v271 = vld [vmem:[%s198 + $0x1e8] sm:$0xff]
      %v272 = vld [vmem:[%s198 + $0x1f0] sm:$0xff]
      %v273 = vld [vmem:[%s198 + $0x1f8] sm:$0xff]
      %v274 = vld [vmem:[%s1] sm:$0x1]
      %v276 = vlaneseq
      %v277 = vshrl.u32 %v276, 7
      %v278 = vsub.s32 0, %v277
      %v279 = vrot.slane %v274, %v278
      %v281 = vmul.f32 %v210, %v279
      %v282 = vmul.f32 %v211, %v279
      %v283 = vmul.f32 %v212, %v279
      %v284 = vmul.f32 %v213, %v279
      %v285 = vmul.f32 %v214, %v279
      %v286 = vmul.f32 %v215, %v279
      %v287 = vmul.f32 %v216, %v279
      %v288 = vmul.f32 %v217, %v279
      %v289 = vmul.f32 %v218, %v279
      %v290 = vmul.f32 %v219, %v279
      %v291 = vmul.f32 %v220, %v279
      %v292 = vmul.f32 %v221, %v279
      %v293 = vmul.f32 %v222, %v279
      %v294 = vmul.f32 %v223, %v279
      %v295 = vmul.f32 %v224, %v279
      %v296 = vmul.f32 %v225, %v279
      %v297 = vmul.f32 %v226, %v279
      %v298 = vmul.f32 %v227, %v279
      %v299 = vmul.f32 %v228, %v279
      %v300 = vmul.f32 %v229, %v279
      %v301 = vmul.f32 %v230, %v279
      %v302 = vmul.f32 %v231, %v279
      %v303 = vmul.f32 %v232, %v279
      %v304 = vmul.f32 %v233, %v279
      %v305 = vmul.f32 %v234, %v279
      %v306 = vmul.f32 %v235, %v279
      %v307 = vmul.f32 %v236, %v279
      %v308 = vmul.f32 %v237, %v279
      %v309 = vmul.f32 %v238, %v279
      %v310 = vmul.f32 %v239, %v279
      %v311 = vmul.f32 %v240, %v279
      %v312 = vmul.f32 %v241, %v279
      %v313 = vmul.f32 %v242, %v279
      %v314 = vmul.f32 %v243, %v279
      %v315 = vmul.f32 %v244, %v279
      %v316 = vmul.f32 %v245, %v279
      %v317 = vmul.f32 %v246, %v279
      %v318 = vmul.f32 %v247, %v279
      %v319 = vmul.f32 %v248, %v279
      %v320 = vmul.f32 %v249, %v279
      %v321 = vmul.f32 %v250, %v279
      %v322 = vmul.f32 %v251, %v279
      %v323 = vmul.f32 %v252, %v279
      %v324 = vmul.f32 %v253, %v279
      %v325 = vmul.f32 %v254, %v279
      %v326 = vmul.f32 %v255, %v279
      %v327 = vmul.f32 %v256, %v279
      %v328 = vmul.f32 %v257, %v279
      %v329 = vmul.f32 %v258, %v279
      %v330 = vmul.f32 %v259, %v279
      %v331 = vmul.f32 %v260, %v279
      %v332 = vmul.f32 %v261, %v279
      %v333 = vmul.f32 %v262, %v279
      %v334 = vmul.f32 %v263, %v279
      %v335 = vmul.f32 %v264, %v279
      %v336 = vmul.f32 %v265, %v279
      %v337 = vmul.f32 %v266, %v279
      %v338 = vmul.f32 %v267, %v279
      %v339 = vmul.f32 %v268, %v279
      %v340 = vmul.f32 %v269, %v279
      %v341 = vmul.f32 %v270, %v279
      %v342 = vmul.f32 %v271, %v279
      %v343 = vmul.f32 %v272, %v279
      %v344 = vmul.f32 %v273, %v279
      %v345 = vld [vmem:[%s2] sm:$0x1]
      %v347 = vlaneseq
      %v348 = vshrl.u32 %v347, 7
      %v349 = vsub.s32 0, %v348
      %v350 = vrot.slane %v345, %v349
      %v352 = vadd.f32 %v281, %v350
      %v353 = vadd.f32 %v282, %v350
      %v354 = vadd.f32 %v283, %v350
      %v355 = vadd.f32 %v284, %v350
      %v356 = vadd.f32 %v285, %v350
      %v357 = vadd.f32 %v286, %v350
      %v358 = vadd.f32 %v287, %v350
      %v359 = vadd.f32 %v288, %v350
      %v360 = vadd.f32 %v289, %v350
      %v361 = vadd.f32 %v290, %v350
      %v362 = vadd.f32 %v291, %v350
      %v363 = vadd.f32 %v292, %v350
      %v364 = vadd.f32 %v293, %v350
      %v365 = vadd.f32 %v294, %v350
      %v366 = vadd.f32 %v295, %v350
      %v367 = vadd.f32 %v296, %v350
      %v368 = vadd.f32 %v297, %v350
      %v369 = vadd.f32 %v298, %v350
      %v370 = vadd.f32 %v299, %v350
      %v371 = vadd.f32 %v300, %v350
      %v372 = vadd.f32 %v301, %v350
      %v373 = vadd.f32 %v302, %v350
      %v374 = vadd.f32 %v303, %v350
      %v375 = vadd.f32 %v304, %v350
      %v376 = vadd.f32 %v305, %v350
      %v377 = vadd.f32 %v306, %v350
      %v378 = vadd.f32 %v307, %v350
      %v379 = vadd.f32 %v308, %v350
      %v380 = vadd.f32 %v309, %v350
      %v381 = vadd.f32 %v310, %v350
      %v382 = vadd.f32 %v311, %v350
      %v383 = vadd.f32 %v312, %v350
      %v384 = vadd.f32 %v313, %v350
      %v385 = vadd.f32 %v314, %v350
      %v386 = vadd.f32 %v315, %v350
      %v387 = vadd.f32 %v316, %v350
      %v388 = vadd.f32 %v317, %v350
      %v389 = vadd.f32 %v318, %v350
      %v390 = vadd.f32 %v319, %v350
      %v391 = vadd.f32 %v320, %v350
      %v392 = vadd.f32 %v321, %v350
      %v393 = vadd.f32 %v322, %v350
      %v394 = vadd.f32 %v323, %v350
      %v395 = vadd.f32 %v324, %v350
      %v396 = vadd.f32 %v325, %v350
      %v397 = vadd.f32 %v326, %v350
      %v398 = vadd.f32 %v327, %v350
      %v399 = vadd.f32 %v328, %v350
      %v400 = vadd.f32 %v329, %v350
      %v401 = vadd.f32 %v330, %v350
      %v402 = vadd.f32 %v331, %v350
      %v403 = vadd.f32 %v332, %v350
      %v404 = vadd.f32 %v333, %v350
      %v405 = vadd.f32 %v334, %v350
      %v406 = vadd.f32 %v335, %v350
      %v407 = vadd.f32 %v336, %v350
      %v408 = vadd.f32 %v337, %v350
      %v409 = vadd.f32 %v338, %v350
      %v410 = vadd.f32 %v339, %v350
      %v411 = vadd.f32 %v340, %v350
      %v412 = vadd.f32 %v341, %v350
      %v413 = vadd.f32 %v342, %v350
      %v414 = vadd.f32 %v343, %v350
      %v415 = vadd.f32 %v344, %v350
      %v416 = vmax.f32 %v352, 0.0
      %v417 = vmax.f32 %v353, 0.0
      %v418 = vmax.f32 %v354, 0.0
      %v419 = vmax.f32 %v355, 0.0
      %v420 = vmax.f32 %v356, 0.0
      %v421 = vmax.f32 %v357, 0.0
      %v422 = vmax.f32 %v358, 0.0
      %v423 = vmax.f32 %v359, 0.0
      %v424 = vmax.f32 %v360, 0.0
      %v425 = vmax.f32 %v361, 0.0
      %v426 = vmax.f32 %v362, 0.0
      %v427 = vmax.f32 %v363, 0.0
      %v428 = vmax.f32 %v364, 0.0
      %v429 = vmax.f32 %v365, 0.0
      %v430 = vmax.f32 %v366, 0.0
      %v431 = vmax.f32 %v367, 0.0
      %v432 = vmax.f32 %v368, 0.0
      %v433 = vmax.f32 %v369, 0.0
      %v434 = vmax.f32 %v370, 0.0
      %v435 = vmax.f32 %v371, 0.0
      %v436 = vmax.f32 %v372, 0.0
      %v437 = vmax.f32 %v373, 0.0
      %v438 = vmax.f32 %v374, 0.0
      %v439 = vmax.f32 %v375, 0.0
      %v440 = vmax.f32 %v376, 0.0
      %v441 = vmax.f32 %v377, 0.0
      %v442 = vmax.f32 %v378, 0.0
      %v443 = vmax.f32 %v379, 0.0
      %v444 = vmax.f32 %v380, 0.0
      %v445 = vmax.f32 %v381, 0.0
      %v446 = vmax.f32 %v382, 0.0
      %v447 = vmax.f32 %v383, 0.0
      %v448 = vmax.f32 %v384, 0.0
      %v449 = vmax.f32 %v385, 0.0
      %v450 = vmax.f32 %v386, 0.0
      %v451 = vmax.f32 %v387, 0.0
      %v452 = vmax.f32 %v388, 0.0
      %v453 = vmax.f32 %v389, 0.0
      %v454 = vmax.f32 %v390, 0.0
      %v455 = vmax.f32 %v391, 0.0
      %v456 = vmax.f32 %v392, 0.0
      %v457 = vmax.f32 %v393, 0.0
      %v458 = vmax.f32 %v394, 0.0
      %v459 = vmax.f32 %v395, 0.0
      %v460 = vmax.f32 %v396, 0.0
      %v461 = vmax.f32 %v397, 0.0
      %v462 = vmax.f32 %v398, 0.0
      %v463 = vmax.f32 %v399, 0.0
      %v464 = vmax.f32 %v400, 0.0
      %v465 = vmax.f32 %v401, 0.0
      %v466 = vmax.f32 %v402, 0.0
      %v467 = vmax.f32 %v403, 0.0
      %v468 = vmax.f32 %v404, 0.0
      %v469 = vmax.f32 %v405, 0.0
      %v470 = vmax.f32 %v406, 0.0
      %v471 = vmax.f32 %v407, 0.0
      %v472 = vmax.f32 %v408, 0.0
      %v473 = vmax.f32 %v409, 0.0
      %v474 = vmax.f32 %v410, 0.0
      %v475 = vmax.f32 %v411, 0.0
      %v476 = vmax.f32 %v412, 0.0
      %v477 = vmax.f32 %v413, 0.0
      %v478 = vmax.f32 %v414, 0.0
      %v479 = vmax.f32 %v415, 0.0
      %v480 = vpack.c.bf16 %v417, %v416
      %v481 = vpack.c.bf16 %v419, %v418
      %v482 = vpack.c.bf16 %v421, %v420
      %v483 = vpack.c.bf16 %v423, %v422
      %v484 = vpack.c.bf16 %v425, %v424
      %v485 = vpack.c.bf16 %v427, %v426
      %v486 = vpack.c.bf16 %v429, %v428
      %v487 = vpack.c.bf16 %v431, %v430
      %v488 = vpack.c.bf16 %v433, %v432
      %v489 = vpack.c.bf16 %v435, %v434
      %v490 = vpack.c.bf16 %v437, %v436
      %v491 = vpack.c.bf16 %v439, %v438
      %v492 = vpack.c.bf16 %v441, %v440
      %v493 = vpack.c.bf16 %v443, %v442
      %v494 = vpack.c.bf16 %v445, %v444
      %v495 = vpack.c.bf16 %v447, %v446
      %v496 = vpack.c.bf16 %v449, %v448
      %v497 = vpack.c.bf16 %v451, %v450
      %v498 = vpack.c.bf16 %v453, %v452
      %v499 = vpack.c.bf16 %v455, %v454
      %v500 = vpack.c.bf16 %v457, %v456
      %v501 = vpack.c.bf16 %v459, %v458
      %v502 = vpack.c.bf16 %v461, %v460
      %v503 = vpack.c.bf16 %v463, %v462
      %v504 = vpack.c.bf16 %v465, %v464
      %v505 = vpack.c.bf16 %v467, %v466
      %v506 = vpack.c.bf16 %v469, %v468
      %v507 = vpack.c.bf16 %v471, %v470
      %v508 = vpack.c.bf16 %v473, %v472
      %v509 = vpack.c.bf16 %v475, %v474
      %v510 = vpack.c.bf16 %v477, %v476
      %v511 = vpack.c.bf16 %v479, %v478
      %v544 = vunpack.c.l.b16 %v480
      %v545 = vunpack.c.h.b16 %v480
      %v546 = vunpack.c.l.b16 %v481
      %v547 = vunpack.c.h.b16 %v481
      %v548 = vunpack.c.l.b16 %v482
      %v549 = vunpack.c.h.b16 %v482
      %v550 = vunpack.c.l.b16 %v483
      %v551 = vunpack.c.h.b16 %v483
      %v552 = vunpack.c.l.b16 %v484
      %v553 = vunpack.c.h.b16 %v484
      %v554 = vunpack.c.l.b16 %v485
      %v555 = vunpack.c.h.b16 %v485
      %v556 = vunpack.c.l.b16 %v486
      %v557 = vunpack.c.h.b16 %v486
      %v558 = vunpack.c.l.b16 %v487
      %v559 = vunpack.c.h.b16 %v487
      %v560 = vunpack.c.l.b16 %v488
      %v561 = vunpack.c.h.b16 %v488
      %v562 = vunpack.c.l.b16 %v489
      %v563 = vunpack.c.h.b16 %v489
      %v564 = vunpack.c.l.b16 %v490
      %v565 = vunpack.c.h.b16 %v490
      %v566 = vunpack.c.l.b16 %v491
      %v567 = vunpack.c.h.b16 %v491
      %v568 = vunpack.c.l.b16 %v492
      %v569 = vunpack.c.h.b16 %v492
      %v570 = vunpack.c.l.b16 %v493
      %v571 = vunpack.c.h.b16 %v493
      %v572 = vunpack.c.l.b16 %v494
      %v573 = vunpack.c.h.b16 %v494
      %v574 = vunpack.c.l.b16 %v495
      %v575 = vunpack.c.h.b16 %v495
      %v576 = vunpack.c.l.b16 %v496
      %v577 = vunpack.c.h.b16 %v496
      %v578 = vunpack.c.l.b16 %v497
      %v579 = vunpack.c.h.b16 %v497
      %v580 = vunpack.c.l.b16 %v498
      %v581 = vunpack.c.h.b16 %v498
      %v582 = vunpack.c.l.b16 %v499
      %v583 = vunpack.c.h.b16 %v499
      %v584 = vunpack.c.l.b16 %v500
      %v585 = vunpack.c.h.b16 %v500
      %v586 = vunpack.c.l.b16 %v501
      %v587 = vunpack.c.h.b16 %v501
      %v588 = vunpack.c.l.b16 %v502
      %v589 = vunpack.c.h.b16 %v502
      %v590 = vunpack.c.l.b16 %v503
      %v591 = vunpack.c.h.b16 %v503
      %v592 = vunpack.c.l.b16 %v504
      %v593 = vunpack.c.h.b16 %v504
      %v594 = vunpack.c.l.b16 %v505
      %v595 = vunpack.c.h.b16 %v505
      %v596 = vunpack.c.l.b16 %v506
      %v597 = vunpack.c.h.b16 %v506
      %v598 = vunpack.c.l.b16 %v507
      %v599 = vunpack.c.h.b16 %v507
      %v600 = vunpack.c.l.b16 %v508
      %v601 = vunpack.c.h.b16 %v508
      %v602 = vunpack.c.l.b16 %v509
      %v603 = vunpack.c.h.b16 %v509
      %v604 = vunpack.c.l.b16 %v510
      %v605 = vunpack.c.h.b16 %v510
      %v606 = vunpack.c.l.b16 %v511
      %v607 = vunpack.c.h.b16 %v511
      %v608 = vpack.c.b16 %v544, %v544
      %v609 = vpack.c.b16 %v545, %v545
      %v610 = vpack.c.b16 %v546, %v546
      %v611 = vpack.c.b16 %v547, %v547
      %v612 = vpack.c.b16 %v548, %v548
      %v613 = vpack.c.b16 %v549, %v549
      %v614 = vpack.c.b16 %v550, %v550
      %v615 = vpack.c.b16 %v551, %v551
      %v616 = vpack.c.b16 %v552, %v552
      %v617 = vpack.c.b16 %v553, %v553
      %v618 = vpack.c.b16 %v554, %v554
      %v619 = vpack.c.b16 %v555, %v555
      %v620 = vpack.c.b16 %v556, %v556
      %v621 = vpack.c.b16 %v557, %v557
      %v622 = vpack.c.b16 %v558, %v558
      %v623 = vpack.c.b16 %v559, %v559
      %v624 = vpack.c.b16 %v560, %v560
      %v625 = vpack.c.b16 %v561, %v561
      %v626 = vpack.c.b16 %v562, %v562
      %v627 = vpack.c.b16 %v563, %v563
      %v628 = vpack.c.b16 %v564, %v564
      %v629 = vpack.c.b16 %v565, %v565
      %v630 = vpack.c.b16 %v566, %v566
      %v631 = vpack.c.b16 %v567, %v567
      %v632 = vpack.c.b16 %v568, %v568
      %v633 = vpack.c.b16 %v569, %v569
      %v634 = vpack.c.b16 %v570, %v570
      %v635 = vpack.c.b16 %v571, %v571
      %v636 = vpack.c.b16 %v572, %v572
      %v637 = vpack.c.b16 %v573, %v573
      %v638 = vpack.c.b16 %v574, %v574
      %v639 = vpack.c.b16 %v575, %v575
      %v640 = vpack.c.b16 %v576, %v576
      %v641 = vpack.c.b16 %v577, %v577
      %v642 = vpack.c.b16 %v578, %v578
      %v643 = vpack.c.b16 %v579, %v579
      %v644 = vpack.c.b16 %v580, %v580
      %v645 = vpack.c.b16 %v581, %v581
      %v646 = vpack.c.b16 %v582, %v582
      %v647 = vpack.c.b16 %v583, %v583
      %v648 = vpack.c.b16 %v584, %v584
      %v649 = vpack.c.b16 %v585, %v585
      %v650 = vpack.c.b16 %v586, %v586
      %v651 = vpack.c.b16 %v587, %v587
      %v652 = vpack.c.b16 %v588, %v588
      %v653 = vpack.c.b16 %v589, %v589
      %v654 = vpack.c.b16 %v590, %v590
      %v655 = vpack.c.b16 %v591, %v591
      %v656 = vpack.c.b16 %v592, %v592
      %v657 = vpack.c.b16 %v593, %v593
      %v658 = vpack.c.b16 %v594, %v594
      %v659 = vpack.c.b16 %v595, %v595
      %v660 = vpack.c.b16 %v596, %v596
      %v661 = vpack.c.b16 %v597, %v597
      %v662 = vpack.c.b16 %v598, %v598
      %v663 = vpack.c.b16 %v599, %v599
      %v664 = vpack.c.b16 %v600, %v600
      %v665 = vpack.c.b16 %v601, %v601
      %v666 = vpack.c.b16 %v602, %v602
      %v667 = vpack.c.b16 %v603, %v603
      %v668 = vpack.c.b16 %v604, %v604
      %v669 = vpack.c.b16 %v605, %v605
      %v670 = vpack.c.b16 %v606, %v606
      %v671 = vpack.c.b16 %v607, %v607
      %736 = vst [vmem:[%s208] sm:$0xf] %v608
      %737 = vst [vmem:[%s208 + $0x4] sm:$0xf] %v609
      %738 = vst [vmem:[%s208 + $0x8] sm:$0xf] %v610
      %739 = vst [vmem:[%s208 + $0xc] sm:$0xf] %v611
      %740 = vst [vmem:[%s208 + $0x10] sm:$0xf] %v612
      %741 = vst [vmem:[%s208 + $0x14] sm:$0xf] %v613
      %742 = vst [vmem:[%s208 + $0x18] sm:$0xf] %v614
      %743 = vst [vmem:[%s208 + $0x1c] sm:$0xf] %v615
      %744 = vst [vmem:[%s208 + $0x20] sm:$0xf] %v616
      %745 = vst [vmem:[%s208 + $0x24] sm:$0xf] %v617
      %746 = vst [vmem:[%s208 + $0x28] sm:$0xf] %v618
      %747 = vst [vmem:[%s208 + $0x2c] sm:$0xf] %v619
      %748 = vst [vmem:[%s208 + $0x30] sm:$0xf] %v620
      %749 = vst [vmem:[%s208 + $0x34] sm:$0xf] %v621
      %750 = vst [vmem:[%s208 + $0x38] sm:$0xf] %v622
      %751 = vst [vmem:[%s208 + $0x3c] sm:$0xf] %v623
      %752 = vst [vmem:[%s208 + $0x40] sm:$0xf] %v624
      %753 = vst [vmem:[%s208 + $0x44] sm:$0xf] %v625
      %754 = vst [vmem:[%s208 + $0x48] sm:$0xf] %v626
      %755 = vst [vmem:[%s208 + $0x4c] sm:$0xf] %v627
      %756 = vst [vmem:[%s208 + $0x50] sm:$0xf] %v628
      %757 = vst [vmem:[%s208 + $0x54] sm:$0xf] %v629
      %758 = vst [vmem:[%s208 + $0x58] sm:$0xf] %v630
      %759 = vst [vmem:[%s208 + $0x5c] sm:$0xf] %v631
      %760 = vst [vmem:[%s208 + $0x60] sm:$0xf] %v632
      %761 = vst [vmem:[%s208 + $0x64] sm:$0xf] %v633
      %762 = vst [vmem:[%s208 + $0x68] sm:$0xf] %v634
      %763 = vst [vmem:[%s208 + $0x6c] sm:$0xf] %v635
      %764 = vst [vmem:[%s208 + $0x70] sm:$0xf] %v636
      %765 = vst [vmem:[%s208 + $0x74] sm:$0xf] %v637
      %766 = vst [vmem:[%s208 + $0x78] sm:$0xf] %v638
      %767 = vst [vmem:[%s208 + $0x7c] sm:$0xf] %v639
      %768 = vst [vmem:[%s208 + $0x80] sm:$0xf] %v640
      %769 = vst [vmem:[%s208 + $0x84] sm:$0xf] %v641
      %770 = vst [vmem:[%s208 + $0x88] sm:$0xf] %v642
      %771 = vst [vmem:[%s208 + $0x8c] sm:$0xf] %v643
      %772 = vst [vmem:[%s208 + $0x90] sm:$0xf] %v644
      %773 = vst [vmem:[%s208 + $0x94] sm:$0xf] %v645
      %774 = vst [vmem:[%s208 + $0x98] sm:$0xf] %v646
      %775 = vst [vmem:[%s208 + $0x9c] sm:$0xf] %v647
      %776 = vst [vmem:[%s208 + $0xa0] sm:$0xf] %v648
      %777 = vst [vmem:[%s208 + $0xa4] sm:$0xf] %v649
      %778 = vst [vmem:[%s208 + $0xa8] sm:$0xf] %v650
      %779 = vst [vmem:[%s208 + $0xac] sm:$0xf] %v651
      %780 = vst [vmem:[%s208 + $0xb0] sm:$0xf] %v652
      %781 = vst [vmem:[%s208 + $0xb4] sm:$0xf] %v653
      %782 = vst [vmem:[%s208 + $0xb8] sm:$0xf] %v654
      %783 = vst [vmem:[%s208 + $0xbc] sm:$0xf] %v655
      %784 = vst [vmem:[%s208 + $0xc0] sm:$0xf] %v656
      %785 = vst [vmem:[%s208 + $0xc4] sm:$0xf] %v657
      %786 = vst [vmem:[%s208 + $0xc8] sm:$0xf] %v658
      %787 = vst [vmem:[%s208 + $0xcc] sm:$0xf] %v659
      %788 = vst [vmem:[%s208 + $0xd0] sm:$0xf] %v660
      %789 = vst [vmem:[%s208 + $0xd4] sm:$0xf] %v661
      %790 = vst [vmem:[%s208 + $0xd8] sm:$0xf] %v662
      %791 = vst [vmem:[%s208 + $0xdc] sm:$0xf] %v663
      %792 = vst [vmem:[%s208 + $0xe0] sm:$0xf] %v664
      %793 = vst [vmem:[%s208 + $0xe4] sm:$0xf] %v665
      %794 = vst [vmem:[%s208 + $0xe8] sm:$0xf] %v666
      %795 = vst [vmem:[%s208 + $0xec] sm:$0xf] %v667
      %796 = vst [vmem:[%s208 + $0xf0] sm:$0xf] %v668
      %797 = vst [vmem:[%s208 + $0xf4] sm:$0xf] %v669
      %798 = vst [vmem:[%s208 + $0xf8] sm:$0xf] %v670
      %799 = vst [vmem:[%s208 + $0xfc] sm:$0xf] %v671
      %s800 = smul.u32 64, %s19
      %p801 = scmp.lt.s32.totalorder %s18, 3
      %s802 = scalar_select %p801, %s18, 3
      %p803 = scmp.lt.s32.totalorder %s800, 63
      %s804 = scalar_select %p803, %s800, 63
      %s805 = smul.addr %s802, 64
      %s806 = sadd.s32 %s804, %s805
      %s807 = smul.addr %s806, 4
      %s808 = scalar_lea.vmem %s3, %s807
      // Predicated region
      $region33: #{generator_forward.20} parent=31 // pred_check
        %p809 = pneg %p116
      $region34: #{generator_forward.20} parent=31 // pred_check_branch
        %811 = sbr.rel (%p809) target = $region36
      $region35: #{generator_forward.20} parent=31 // pred_region
        %s812 = smul.u32 64, %s19
      $region36: #{generator_forward.20} parent=31 // pred_fallthru
        _
    $region32: #{generator_forward.20} parent=5 // pred_fallthru
      _
    %p813 = scmp.le.s32.totalorder 2, %s9
    // Predicated region
    $region37: #{generator_forward.20} parent=5 // pred_check
      %p814 = pneg %p813
    $region38: #{generator_forward.20} parent=5 // pred_check_branch
      %816 = sbr.rel (%p814) target = $region40
    $region39: #{generator_forward.20} parent=5 // pred_region
      %s817 = ssub.s32 %s9, 2
      // Predicated region
      $region41: #{generator_forward.20} parent=39 // pred_check
        %p818 = pneg %p122
      $region42: #{generator_forward.20} parent=39 // pred_check_branch
        %820 = sbr.rel (%p818) target = $region44
      $region43: #{generator_forward.20} parent=39 // pred_region
        %s821 = smul.u32 64, %s21
        %p822 = scmp.lt.s32.totalorder %s20, 3
        %s823 = scalar_select %p822, %s20, 3
        %p824 = scmp.lt.s32.totalorder %s821, 63
        %s825 = scalar_select %p824, %s821, 63
        %s826 = smul.addr %s823, 64
        %s827 = sadd.s32 %s825, %s826
        %s828 = smul.addr %s827, 4
        %s829 = scalar_lea.vmem %s3, %s828
      $region44: #{generator_forward.20} parent=39 // pred_fallthru
        _
    $region40: #{generator_forward.20} parent=5 // pred_fallthru
      _
  $region6: #{generator_forward.20} parent=0 // loop_footer
    %s13 = sadd.s32 1, %s9
  $region7: #{generator_forward.20} parent=0 // loop_footer_branch
    %8 = sbr.rel target = $region3
  $region8: #{generator_forward.20} parent=0 // loop_exit
    _

// kernel: generator_forward.19
$region0: #{generator_forward.19}
  #allocation0 [shape = 'u32[]', space=smem, size = 0x4, offset = 0x4, fixed_abs, tag = 'smem constant byte address 0x4 - core index']
  #allocation1 [shape = 'u32[144,128]{1,0:T(1,128)}', space=vmem, size = 0x12000, scoped, tag = 'internal scratch']
  %s0 = inlined_call_operand.vmem [shape: bf16[4,512,128], index: 0, kind: input, shape index: {}]
  %s1 = inlined_call_operand.vmem [shape: bf16[4,128,128], index: 1, kind: input, shape index: {}]
  %s2 = inlined_call_operand.vmem [shape: f32[4,512,128], index: 2, kind: output, shape index: {0}]
  %s3 = inlined_call_operand.vmem [shape: f32[4,1,2,128], index: 3, kind: output, shape index: {1}]
  %4 = xla_tuple %s2, %s3
  %s5 = sld [smem:[#allocation0]]
  $region49: #{generator_forward.19} parent=0
    _
  %s7 = ssub.s32 1, %s5
  %s8 = scalar_select 0, %s7, %s5
  loop: start=0, step=1, limit=6
  $region2: #{generator_forward.19} parent=0 // loop_pre_header
    _
  $region3: #{generator_forward.19} parent=0 // loop_header
    %s10 = sphi 0, %s14
    %p11 = scmp.ge.s32.totalorder %s10, 6
    %s17 = sphi 0, %s29
    %s18 = sphi 0, %s25
    %s19 = sphi 0, %s17
    %s20 = sphi 0, %s18
    %s21 = sphi 0, %s19
    %s22 = sphi 0, %s20
    %s34 = sphi 0, %s36
    %s37 = sphi 0, %s34
    %s38 = sphi 0, %s37
    %s54 = sphi 0, %s38
    %s60 = sphi 0, %s62
    %s63 = sphi 0, %s60
    %s64 = sphi 0, %s63
    %s80 = sphi 0, %s64
    %s88 = sphi 0, %s90
    %s91 = sphi 0, %s88
    %s92 = sphi 0, %s91
    %s108 = sphi 0, %s92
    %s116 = sphi 0, %s118
    %s119 = sphi 0, %s116
    %s120 = sphi 0, %s119
    %s136 = sphi 0, %s120
  $region4: #{generator_forward.19} parent=0 // loop_header_branch
    %13 = sbr.rel (%p11) target = $region8
  $region5: #{generator_forward.19} parent=0 // loop_body
    %s15 = ssub.s32 %s10, 1
    %s16 = ssub.s32 %s10, 2
    %s23 = sadd.s32 1, %s18
    %p24 = scmp.ge.s32.totalorder %s23, 1
    %s25 = scalar_select %p24, 0, %s23
    %s26 = sadd.s32 1, %s17
    %s27 = scalar_select %p24, %s26, %s17
    %p28 = scmp.ge.s32.totalorder %s27, 4
    %s29 = scalar_select %p28, 0, %s27
    %s30 = ssub.s32 %s17, %s29
    %s31 = ssub.s32 %s18, %s25
    %s32 = sor.u32 %s30, %s31
    %p33 = scmp.eq.s32.totalorder %s32, 0
    %s35 = sadd.s32 %s34, 1
    %s36 = scalar_select %p33, %s34, %s35
    %p39 = pneg %p33
    %p40 = scmp.eq.s32.totalorder %s10, 3
    %p41 = por %p39, %p40
    %p42 = scmp.ne.s32.totalorder %s34, %s37
    %p43 = scmp.eq.s32.totalorder %s10, 0
    %p44 = por %p42, %p43
    %p45 = scmp.ne.s32.totalorder %s34, %s37
    %p46 = scmp.eq.s32.totalorder %s15, 3
    %p47 = por %p45, %p46
    %p48 = scmp.ne.s32.totalorder %s37, %s38
    %p49 = scmp.eq.s32.totalorder %s15, 0
    %p50 = por %p48, %p49
    %p51 = scmp.ne.s32.totalorder %s37, %s38
    %p52 = scmp.eq.s32.totalorder %s16, 3
    %p53 = por %p51, %p52
    %p55 = scmp.ne.s32.totalorder %s38, %s54
    %p56 = scmp.eq.s32.totalorder %s16, 0
    %p57 = por %p55, %p56
    %s58 = ssub.s32 %s17, %s29
    %p59 = scmp.eq.s32.totalorder %s58, 0
    %s61 = sadd.s32 %s60, 1
    %s62 = scalar_select %p59, %s60, %s61
    %p65 = pneg %p59
    %p66 = scmp.eq.s32.totalorder %s10, 3
    %p67 = por %p65, %p66
    %p68 = scmp.ne.s32.totalorder %s60, %s63
    %p69 = scmp.eq.s32.totalorder %s10, 0
    %p70 = por %p68, %p69
    %p71 = scmp.ne.s32.totalorder %s60, %s63
    %p72 = scmp.eq.s32.totalorder %s15, 3
    %p73 = por %p71, %p72
    %p74 = scmp.ne.s32.totalorder %s63, %s64
    %p75 = scmp.eq.s32.totalorder %s15, 0
    %p76 = por %p74, %p75
    %p77 = scmp.ne.s32.totalorder %s63, %s64
    %p78 = scmp.eq.s32.totalorder %s16, 3
    %p79 = por %p77, %p78
    %p81 = scmp.ne.s32.totalorder %s64, %s80
    %p82 = scmp.eq.s32.totalorder %s16, 0
    %p83 = por %p81, %p82
    %s84 = ssub.s32 %s17, %s29
    %s85 = ssub.s32 %s18, %s25
    %s86 = sor.u32 %s84, %s85
    %p87 = scmp.eq.s32.totalorder %s86, 0
    %s89 = sadd.s32 %s88, 1
    %s90 = scalar_select %p87, %s88, %s89
    %p93 = pneg %p87
    %p94 = scmp.eq.s32.totalorder %s10, 3
    %p95 = por %p93, %p94
    %p96 = scmp.ne.s32.totalorder %s88, %s91
    %p97 = scmp.eq.s32.totalorder %s10, 0
    %p98 = por %p96, %p97
    %p99 = scmp.ne.s32.totalorder %s88, %s91
    %p100 = scmp.eq.s32.totalorder %s15, 3
    %p101 = por %p99, %p100
    %p102 = scmp.ne.s32.totalorder %s91, %s92
    %p103 = scmp.eq.s32.totalorder %s15, 0
    %p104 = por %p102, %p103
    %p105 = scmp.ne.s32.totalorder %s91, %s92
    %p106 = scmp.eq.s32.totalorder %s16, 3
    %p107 = por %p105, %p106
    %p109 = scmp.ne.s32.totalorder %s92, %s108
    %p110 = scmp.eq.s32.totalorder %s16, 0
    %p111 = por %p109, %p110
    %s112 = ssub.s32 %s17, %s29
    %s113 = ssub.s32 %s18, %s25
    %s114 = sor.u32 %s112, %s113
    %p115 = scmp.eq.s32.totalorder %s114, 0
    %s117 = sadd.s32 %s116, 1
    %s118 = scalar_select %p115, %s116, %s117
    %p121 = pneg %p115
    %p122 = scmp.eq.s32.totalorder %s10, 3
    %p123 = por %p121, %p122
    %p124 = scmp.ne.s32.totalorder %s116, %s119
    %p125 = scmp.eq.s32.totalorder %s10, 0
    %p126 = por %p124, %p125
    %p127 = scmp.ne.s32.totalorder %s116, %s119
    %p128 = scmp.eq.s32.totalorder %s15, 3
    %p129 = por %p127, %p128
    %p130 = scmp.ne.s32.totalorder %s119, %s120
    %p131 = scmp.eq.s32.totalorder %s15, 0
    %p132 = por %p130, %p131
    %p133 = scmp.ne.s32.totalorder %s119, %s120
    %p134 = scmp.eq.s32.totalorder %s16, 3
    %p135 = por %p133, %p134
    %p137 = scmp.ne.s32.totalorder %s120, %s136
    %p138 = scmp.eq.s32.totalorder %s16, 0
    %p139 = por %p137, %p138
    %p140 = scmp.le.s32.totalorder 1, %s10
    %p141 = scmp.lt.s32.totalorder %s10, 5
    %p142 = pnand %p140, %p141
    %p143 = pneg %p142
    // Predicated region
    $region9: #{generator_forward.19} parent=5 // pred_check
      _
    $region10: #{generator_forward.19} parent=5 // pred_check_branch
      %145 = sbr.rel (%p142) target = $region12
    $region11: #{generator_forward.19} parent=5 // pred_region
      %s146 = ssub.s32 %s10, 1
    $region12: #{generator_forward.19} parent=5 // pred_fallthru
      _
    %p147 = scmp.lt.s32.totalorder %s10, 4
    // Predicated region
    $region13: #{generator_forward.19} parent=5 // pred_check
      %p148 = pneg %p147
    $region14: #{generator_forward.19} parent=5 // pred_check_branch
      %150 = sbr.rel (%p148) target = $region16
    $region15: #{generator_forward.19} parent=5 // pred_region
      // Predicated region
      $region17: #{generator_forward.19} parent=15 // pred_check
        %p151 = pneg %p44
      $region18: #{generator_forward.19} parent=15 // pred_check_branch
        %153 = sbr.rel (%p151) target = $region20
      $region19: #{generator_forward.19} parent=15 // pred_region
        %s154 = smul.u32 64, %s18
        %p155 = scmp.lt.s32.totalorder %s17, 3
        %s156 = scalar_select %p155, %s17, 3
        %p157 = scmp.lt.s32.totalorder %s154, 63
        %s158 = scalar_select %p157, %s154, 63
        %s159 = smul.addr %s156, 64
        %s160 = sadd.s32 %s158, %s159
        %s161 = smul.addr %s160, 4
        %s162 = scalar_lea.vmem %s0, %s161
        %s163 = smul.u32 64, %s18
      $region20: #{generator_forward.19} parent=15 // pred_fallthru
        _
      // Predicated region
      $region21: #{generator_forward.19} parent=15 // pred_check
        %p164 = pneg %p70
      $region22: #{generator_forward.19} parent=15 // pred_check_branch
        %166 = sbr.rel (%p164) target = $region24
      $region23: #{generator_forward.19} parent=15 // pred_region
        %p167 = scmp.lt.s32.totalorder %s17, 3
        %s168 = scalar_select %p167, %s17, 3
        %s169 = smul.addr %s168, 16
        %s170 = smul.addr %s169, 4
        %s171 = scalar_lea.vmem %s1, %s170
      $region24: #{generator_forward.19} parent=15 // pred_fallthru
        _
    $region16: #{generator_forward.19} parent=5 // pred_fallthru
      _
    %p172 = scmp.le.s32.totalorder 1, %s10
    %p173 = scmp.lt.s32.totalorder %s10, 5
    %p174 = pnand %p172, %p173
    %p175 = pneg %p174
    // Predicated region
    $region25: #{generator_forward.19} parent=5 // pred_check
      _
    $region26: #{generator_forward.19} parent=5 // pred_check_branch
      %177 = sbr.rel (%p174) target = $region28
    $region27: #{generator_forward.19} parent=5 // pred_region
      %s178 = ssub.s32 %s10, 1
      %s179 = smul.u32 64, %s20
      %p180 = scmp.lt.s32.totalorder %s19, 3
      %s181 = scalar_select %p180, %s19, 3
      %p182 = scmp.lt.s32.totalorder %s179, 63
      %s183 = scalar_select %p182, %s179, 63
      %s184 = smul.addr %s181, 64
      %s185 = sadd.s32 %s183, %s184
      %s186 = smul.addr %s185, 4
      %s187 = scalar_lea.vmem %s0, %s186
      %p188 = pneg %p50
      %p189 = pneg %p47
      %p190 = scmp.lt.s32.totalorder %s19, 3
      %s191 = scalar_select %p190, %s19, 3
      %s192 = smul.addr %s191, 16
      %s193 = smul.addr %s192, 4
      %s194 = scalar_lea.vmem %s1, %s193
      %p195 = pneg %p76
      %p196 = pneg %p73
      %p197 = pneg %p104
      %p198 = pneg %p101
      %s199 = smul.u32 64, %s20
      %p200 = scmp.lt.s32.totalorder %s19, 3
      %s201 = scalar_select %p200, %s19, 3
      %p202 = scmp.lt.s32.totalorder %s199, 63
      %s203 = scalar_select %p202, %s199, 63
      %s204 = smul.addr %s201, 64
      %s205 = sadd.s32 %s203, %s204
      %s206 = smul.addr %s205, 8
      %s207 = scalar_lea.vmem %s2, %s206
      %p208 = pneg %p132
      %p209 = pneg %p129
      %p210 = scmp.lt.s32.totalorder %s19, 3
      %s211 = scalar_select %p210, %s19, 3
      %p212 = scmp.lt.s32.totalorder %s20, 0
      %s213 = scalar_select %p212, %s20, 0
      %s214 = sadd.s32 %s213, %s211
      %s215 = smul.addr %s214, 2
      %s216 = scalar_lea.vmem %s3, %s215
      %s217 = smul.u32 64, %s20
      %p218 = scmp.lt.s32.totalorder %s19, 3
      %s219 = scalar_select %p218, %s19, 3
      %p220 = scmp.lt.s32.totalorder %s217, 63
      %s221 = scalar_select %p220, %s217, 63
      %s222 = smul.addr %s219, 64
      %s223 = sadd.s32 %s221, %s222
      %s224 = smul.addr %s223, 4
      %s225 = scalar_lea.vmem %s0, %s224
      %s226 = smul.u32 64, %s20
      %p227 = scmp.lt.s32.totalorder %s19, 3
      %s228 = scalar_select %p227, %s19, 3
      %s229 = smul.addr %s228, 16
      %s230 = smul.addr %s229, 4
      %s231 = scalar_lea.vmem %s1, %s230
      %s232 = smul.u32 64, %s20
      %p233 = scmp.lt.s32.totalorder %s19, 3
      %s234 = scalar_select %p233, %s19, 3
      %p235 = scmp.lt.s32.totalorder %s232, 63
      %s236 = scalar_select %p235, %s232, 63
      %s237 = smul.addr %s234, 64
      %s238 = sadd.s32 %s236, %s237
      %s239 = smul.addr %s238, 8
      %s240 = scalar_lea.vmem %s2, %s239
      %s241 = smul.u32 64, %s20
      %p242 = scmp.lt.s32.totalorder %s19, 3
      %s243 = scalar_select %p242, %s19, 3
      %p244 = scmp.lt.s32.totalorder %s20, 0
      %s245 = scalar_select %p244, %s20, 0
      %s246 = sadd.s32 %s245, %s243
      %s247 = smul.addr %s246, 2
      %s248 = scalar_lea.vmem %s3, %s247
      %v250 = vld [vmem:[%s225] sm:$0xf]
      %v251 = vld [vmem:[%s225 + $0x4] sm:$0xf]
      %v252 = vld [vmem:[%s225 + $0x8] sm:$0xf]
      %v253 = vld [vmem:[%s225 + $0xc] sm:$0xf]
      %v254 = vld [vmem:[%s225 + $0x10] sm:$0xf]
      %v255 = vld [vmem:[%s225 + $0x14] sm:$0xf]
      %v256 = vld [vmem:[%s225 + $0x18] sm:$0xf]
      %v257 = vld [vmem:[%s225 + $0x1c] sm:$0xf]
      %v258 = vld [vmem:[%s225 + $0x20] sm:$0xf]
      %v259 = vld [vmem:[%s225 + $0x24] sm:$0xf]
      %v260 = vld [vmem:[%s225 + $0x28] sm:$0xf]
      %v261 = vld [vmem:[%s225 + $0x2c] sm:$0xf]
      %v262 = vld [vmem:[%s225 + $0x30] sm:$0xf]
      %v263 = vld [vmem:[%s225 + $0x34] sm:$0xf]
      %v264 = vld [vmem:[%s225 + $0x38] sm:$0xf]
      %v265 = vld [vmem:[%s225 + $0x3c] sm:$0xf]
      %v266 = vld [vmem:[%s225 + $0x40] sm:$0xf]
      %v267 = vld [vmem:[%s225 + $0x44] sm:$0xf]
      %v268 = vld [vmem:[%s225 + $0x48] sm:$0xf]
      %v269 = vld [vmem:[%s225 + $0x4c] sm:$0xf]
      %v270 = vld [vmem:[%s225 + $0x50] sm:$0xf]
      %v271 = vld [vmem:[%s225 + $0x54] sm:$0xf]
      %v272 = vld [vmem:[%s225 + $0x58] sm:$0xf]
      %v273 = vld [vmem:[%s225 + $0x5c] sm:$0xf]
      %v274 = vld [vmem:[%s225 + $0x60] sm:$0xf]
      %v275 = vld [vmem:[%s225 + $0x64] sm:$0xf]
      %v276 = vld [vmem:[%s225 + $0x68] sm:$0xf]
      %v277 = vld [vmem:[%s225 + $0x6c] sm:$0xf]
      %v278 = vld [vmem:[%s225 + $0x70] sm:$0xf]
      %v279 = vld [vmem:[%s225 + $0x74] sm:$0xf]
      %v280 = vld [vmem:[%s225 + $0x78] sm:$0xf]
      %v281 = vld [vmem:[%s225 + $0x7c] sm:$0xf]
      %v282 = vld [vmem:[%s225 + $0x80] sm:$0xf]
      %v283 = vld [vmem:[%s225 + $0x84] sm:$0xf]
      %v284 = vld [vmem:[%s225 + $0x88] sm:$0xf]
      %v285 = vld [vmem:[%s225 + $0x8c] sm:$0xf]
      %v286 = vld [vmem:[%s225 + $0x90] sm:$0xf]
      %v287 = vld [vmem:[%s225 + $0x94] sm:$0xf]
      %v288 = vld [vmem:[%s225 + $0x98] sm:$0xf]
      %v289 = vld [vmem:[%s225 + $0x9c] sm:$0xf]
      %v290 = vld [vmem:[%s225 + $0xa0] sm:$0xf]
      %v291 = vld [vmem:[%s225 + $0xa4] sm:$0xf]
      %v292 = vld [vmem:[%s225 + $0xa8] sm:$0xf]
      %v293 = vld [vmem:[%s225 + $0xac] sm:$0xf]
      %v294 = vld [vmem:[%s225 + $0xb0] sm:$0xf]
      %v295 = vld [vmem:[%s225 + $0xb4] sm:$0xf]
      %v296 = vld [vmem:[%s225 + $0xb8] sm:$0xf]
      %v297 = vld [vmem:[%s225 + $0xbc] sm:$0xf]
      %v298 = vld [vmem:[%s225 + $0xc0] sm:$0xf]
      %v299 = vld [vmem:[%s225 + $0xc4] sm:$0xf]
      %v300 = vld [vmem:[%s225 + $0xc8] sm:$0xf]
      %v301 = vld [vmem:[%s225 + $0xcc] sm:$0xf]
      %v302 = vld [vmem:[%s225 + $0xd0] sm:$0xf]
      %v303 = vld [vmem:[%s225 + $0xd4] sm:$0xf]
      %v304 = vld [vmem:[%s225 + $0xd8] sm:$0xf]
      %v305 = vld [vmem:[%s225 + $0xdc] sm:$0xf]
      %v306 = vld [vmem:[%s225 + $0xe0] sm:$0xf]
      %v307 = vld [vmem:[%s225 + $0xe4] sm:$0xf]
      %v308 = vld [vmem:[%s225 + $0xe8] sm:$0xf]
      %v309 = vld [vmem:[%s225 + $0xec] sm:$0xf]
      %v310 = vld [vmem:[%s225 + $0xf0] sm:$0xf]
      %v311 = vld [vmem:[%s225 + $0xf4] sm:$0xf]
      %v312 = vld [vmem:[%s225 + $0xf8] sm:$0xf]
      %v313 = vld [vmem:[%s225 + $0xfc] sm:$0xf]
      %v314 = vld [vmem:[%s231] sm:$0xf]
      %v315 = vld [vmem:[%s231 + $0x4] sm:$0xf]
      %v316 = vld [vmem:[%s231 + $0x8] sm:$0xf]
      %v317 = vld [vmem:[%s231 + $0xc] sm:$0xf]
      %v318 = vld [vmem:[%s231 + $0x10] sm:$0xf]
      %v319 = vld [vmem:[%s231 + $0x14] sm:$0xf]
      %v320 = vld [vmem:[%s231 + $0x18] sm:$0xf]
      %v321 = vld [vmem:[%s231 + $0x1c] sm:$0xf]
      %v322 = vld [vmem:[%s231 + $0x20] sm:$0xf]
      %v323 = vld [vmem:[%s231 + $0x24] sm:$0xf]
      %v324 = vld [vmem:[%s231 + $0x28] sm:$0xf]
      %v325 = vld [vmem:[%s231 + $0x2c] sm:$0xf]
      %v326 = vld [vmem:[%s231 + $0x30] sm:$0xf]
      %v327 = vld [vmem:[%s231 + $0x34] sm:$0xf]
      %v328 = vld [vmem:[%s231 + $0x38] sm:$0xf]
      %v329 = vld [vmem:[%s231 + $0x3c] sm:$0xf]
      %v394 = vunpack.c.l.b16 %v250
      %v395 = vunpack.c.l.b16 %v251
      %v396 = vunpack.c.l.b16 %v252
      %v397 = vunpack.c.l.b16 %v253
      %v398 = vunpack.c.l.b16 %v254
      %v399 = vunpack.c.l.b16 %v255
      %v400 = vunpack.c.l.b16 %v256
      %v401 = vunpack.c.l.b16 %v257
      %v402 = vunpack.c.l.b16 %v258
      %v403 = vunpack.c.l.b16 %v259
      %v404 = vunpack.c.l.b16 %v260
      %v405 = vunpack.c.l.b16 %v261
      %v406 = vunpack.c.l.b16 %v262
      %v407 = vunpack.c.l.b16 %v263
      %v408 = vunpack.c.l.b16 %v264
      %v409 = vunpack.c.l.b16 %v265
      %v410 = vunpack.c.l.b16 %v266
      %v411 = vunpack.c.l.b16 %v267
      %v412 = vunpack.c.l.b16 %v268
      %v413 = vunpack.c.l.b16 %v269
      %v414 = vunpack.c.l.b16 %v270
      %v415 = vunpack.c.l.b16 %v271
      %v416 = vunpack.c.l.b16 %v272
      %v417 = vunpack.c.l.b16 %v273
      %v418 = vunpack.c.l.b16 %v274
      %v419 = vunpack.c.l.b16 %v275
      %v420 = vunpack.c.l.b16 %v276
      %v421 = vunpack.c.l.b16 %v277
      %v422 = vunpack.c.l.b16 %v278
      %v423 = vunpack.c.l.b16 %v279
      %v424 = vunpack.c.l.b16 %v280
      %v425 = vunpack.c.l.b16 %v281
      %v426 = vunpack.c.l.b16 %v282
      %v427 = vunpack.c.l.b16 %v283
      %v428 = vunpack.c.l.b16 %v284
      %v429 = vunpack.c.l.b16 %v285
      %v430 = vunpack.c.l.b16 %v286
      %v431 = vunpack.c.l.b16 %v287
      %v432 = vunpack.c.l.b16 %v288
      %v433 = vunpack.c.l.b16 %v289
      %v434 = vunpack.c.l.b16 %v290
      %v435 = vunpack.c.l.b16 %v291
      %v436 = vunpack.c.l.b16 %v292
      %v437 = vunpack.c.l.b16 %v293
      %v438 = vunpack.c.l.b16 %v294
      %v439 = vunpack.c.l.b16 %v295
      %v440 = vunpack.c.l.b16 %v296
      %v441 = vunpack.c.l.b16 %v297
      %v442 = vunpack.c.l.b16 %v298
      %v443 = vunpack.c.l.b16 %v299
      %v444 = vunpack.c.l.b16 %v300
      %v445 = vunpack.c.l.b16 %v301
      %v446 = vunpack.c.l.b16 %v302
      %v447 = vunpack.c.l.b16 %v303
      %v448 = vunpack.c.l.b16 %v304
      %v449 = vunpack.c.l.b16 %v305
      %v450 = vunpack.c.l.b16 %v306
      %v451 = vunpack.c.l.b16 %v307
      %v452 = vunpack.c.l.b16 %v308
      %v453 = vunpack.c.l.b16 %v309
      %v454 = vunpack.c.l.b16 %v310
      %v455 = vunpack.c.l.b16 %v311
      %v456 = vunpack.c.l.b16 %v312
      %v457 = vunpack.c.l.b16 %v313
      %v458 = vpack.c.b16 %v395, %v394
      %v459 = vpack.c.b16 %v397, %v396
      %v460 = vpack.c.b16 %v399, %v398
      %v461 = vpack.c.b16 %v401, %v400
      %v462 = vpack.c.b16 %v403, %v402
      %v463 = vpack.c.b16 %v405, %v404
      %v464 = vpack.c.b16 %v407, %v406
      %v465 = vpack.c.b16 %v409, %v408
      %v466 = vpack.c.b16 %v411, %v410
      %v467 = vpack.c.b16 %v413, %v412
      %v468 = vpack.c.b16 %v415, %v414
      %v469 = vpack.c.b16 %v417, %v416
      %v470 = vpack.c.b16 %v419, %v418
      %v471 = vpack.c.b16 %v421, %v420
      %v472 = vpack.c.b16 %v423, %v422
      %v473 = vpack.c.b16 %v425, %v424
      %v474 = vpack.c.b16 %v427, %v426
      %v475 = vpack.c.b16 %v429, %v428
      %v476 = vpack.c.b16 %v431, %v430
      %v477 = vpack.c.b16 %v433, %v432
      %v478 = vpack.c.b16 %v435, %v434
      %v479 = vpack.c.b16 %v437, %v436
      %v480 = vpack.c.b16 %v439, %v438
      %v481 = vpack.c.b16 %v441, %v440
      %v482 = vpack.c.b16 %v443, %v442
      %v483 = vpack.c.b16 %v445, %v444
      %v484 = vpack.c.b16 %v447, %v446
      %v485 = vpack.c.b16 %v449, %v448
      %v486 = vpack.c.b16 %v451, %v450
      %v487 = vpack.c.b16 %v453, %v452
      %v488 = vpack.c.b16 %v455, %v454
      %v489 = vpack.c.b16 %v457, %v456
      %v538 = vunpack.c.l.b16 %v314
      %v539 = vunpack.c.l.b16 %v315
      %v540 = vunpack.c.l.b16 %v316
      %v541 = vunpack.c.l.b16 %v317
      %v542 = vunpack.c.l.b16 %v318
      %v543 = vunpack.c.l.b16 %v319
      %v544 = vunpack.c.l.b16 %v320
      %v545 = vunpack.c.l.b16 %v321
      %v546 = vunpack.c.l.b16 %v322
      %v547 = vunpack.c.l.b16 %v323
      %v548 = vunpack.c.l.b16 %v324
      %v549 = vunpack.c.l.b16 %v325
      %v550 = vunpack.c.l.b16 %v326
      %v551 = vunpack.c.l.b16 %v327
      %v552 = vunpack.c.l.b16 %v328
      %v553 = vunpack.c.l.b16 %v329
      %v554 = vpack.c.b16 %v539, %v538
      %v555 = vpack.c.b16 %v541, %v540
      %v556 = vpack.c.b16 %v543, %v542
      %v557 = vpack.c.b16 %v545, %v544
      %v558 = vpack.c.b16 %v547, %v546
      %v559 = vpack.c.b16 %v549, %v548
      %v560 = vpack.c.b16 %v551, %v550
      %v561 = vpack.c.b16 %v553, %v552
      %570 = vmatprep.subr.bf16.mxu0 0
      %571 = vmatpush1.bf16.msra.mxu0 %v561
      %572 = vmatprep.subr.bf16.mxu0 0
      %573 = vmatpush1.bf16.msra.mxu0 %v560
      %574 = vmatprep.subr.bf16.mxu0 0
      %575 = vmatpush1.bf16.msra.mxu0 %v559
      %576 = vmatprep.subr.bf16.mxu0 0
      %577 = vmatpush1.bf16.msra.mxu0 %v558
      %578 = vmatprep.subr.bf16.mxu0 0
      %579 = vmatpush1.bf16.msra.mxu0 %v557
      %580 = vmatprep.subr.bf16.mxu0 0
      %581 = vmatpush1.bf16.msra.mxu0 %v556
      %582 = vmatprep.subr.bf16.mxu0 0
      %583 = vmatpush1.bf16.msra.mxu0 %v555
      %584 = vmatprep.subr.bf16.mxu0 0
      %585 = vmatpush1.bf16.msra.mxu0 %v554
      %586 = vmatprep.subr.bf16.mxu0 0
      %587 = vmatpush2.bf16.msra.mxu0 0
      %588 = vmatprep.subr.bf16.mxu0 0
      %589 = vmatpush2.bf16.msra.mxu0 0
      %590 = vmatprep.subr.bf16.mxu0 0
      %591 = vmatpush2.bf16.msra.mxu0 0
      %592 = vmatprep.subr.bf16.mxu0 0
      %593 = vmatpush2.bf16.msra.mxu0 0
      %594 = vmatprep.subr.bf16.mxu0 0
      %595 = vmatpush2.bf16.msra.mxu0 0
      %596 = vmatprep.subr.bf16.mxu0 0
      %597 = vmatpush2.bf16.msra.mxu0 0
      %598 = vmatprep.subr.bf16.mxu0 0
      %599 = vmatpush2.bf16.msra.mxu0 0
      %600 = vmatprep.subr.bf16.mxu0 0
      %601 = vmatpush2.bf16.msra.mxu0 0
      %602 = vmatprep.mubr.bf16.mxu0 0
      %603 = vmatmul.mubr.bf16.gmra.mxu0 %v458
      %v604 = vpop.f32.mrf.mxu0
      %v605 = vadd.f32 0.0, %v604
      %v606 = vpop.f32.mrf.mxu0
      %v607 = vpop.f32.mrf.mxu0
      %v608 = vadd.f32 0.0, %v607
      %v609 = vpop.f32.mrf.mxu0
      %610 = vmatprep.mubr.bf16.mxu0 0
      %611 = vmatmul.mubr.bf16.gmra.mxu0 %v459
      %v612 = vpop.f32.mrf.mxu0
      %v613 = vadd.f32 0.0, %v612
      %v614 = vpop.f32.mrf.mxu0
      %v615 = vpop.f32.mrf.mxu0
      %v616 = vadd.f32 0.0, %v615
      %v617 = vpop.f32.mrf.mxu0
      %618 = vmatprep.mubr.bf16.mxu0 0
      %619 = vmatmul.mubr.bf16.gmra.mxu0 %v460
      %v620 = vpop.f32.mrf.mxu0
      %v621 = vadd.f32 0.0, %v620
      %v622 = vpop.f32.mrf.mxu0
      %v623 = vpop.f32.mrf.mxu0
      %v624 = vadd.f32 0.0, %v623
      %v625 = vpop.f32.mrf.mxu0
      %626 = vmatprep.mubr.bf16.mxu0 0
      %627 = vmatmul.mubr.bf16.gmra.mxu0 %v461
      %v628 = vpop.f32.mrf.mxu0
      %v629 = vadd.f32 0.0, %v628
      %v630 = vpop.f32.mrf.mxu0
      %v631 = vpop.f32.mrf.mxu0
      %v632 = vadd.f32 0.0, %v631
      %v633 = vpop.f32.mrf.mxu0
      %634 = vmatprep.mubr.bf16.mxu0 0
      %635 = vmatmul.mubr.bf16.gmra.mxu0 %v462
      %v636 = vpop.f32.mrf.mxu0
      %v637 = vadd.f32 0.0, %v636
      %v638 = vpop.f32.mrf.mxu0
      %v639 = vpop.f32.mrf.mxu0
      %v640 = vadd.f32 0.0, %v639
      %v641 = vpop.f32.mrf.mxu0
      %642 = vmatprep.mubr.bf16.mxu0 0
      %643 = vmatmul.mubr.bf16.gmra.mxu0 %v463
      %v644 = vpop.f32.mrf.mxu0
      %v645 = vadd.f32 0.0, %v644
      %v646 = vpop.f32.mrf.mxu0
      %v647 = vpop.f32.mrf.mxu0
      %v648 = vadd.f32 0.0, %v647
      %v649 = vpop.f32.mrf.mxu0
      %650 = vmatprep.mubr.bf16.mxu0 0
      %651 = vmatmul.mubr.bf16.gmra.mxu0 %v464
      %v652 = vpop.f32.mrf.mxu0
      %v653 = vadd.f32 0.0, %v652
      %v654 = vpop.f32.mrf.mxu0
      %v655 = vpop.f32.mrf.mxu0
      %v656 = vadd.f32 0.0, %v655
      %v657 = vpop.f32.mrf.mxu0
      %658 = vmatprep.mubr.bf16.mxu0 0
      %659 = vmatmul.mubr.bf16.gmra.mxu0 %v465
      %v660 = vpop.f32.mrf.mxu0
      %v661 = vadd.f32 0.0, %v660
      %v662 = vpop.f32.mrf.mxu0
      %v663 = vpop.f32.mrf.mxu0
      %v664 = vadd.f32 0.0, %v663
      %v665 = vpop.f32.mrf.mxu0
      %666 = vmatprep.mubr.bf16.mxu0 0
      %667 = vmatmul.mubr.bf16.gmra.mxu0 %v466
      %v668 = vpop.f32.mrf.mxu0
      %v669 = vadd.f32 0.0, %v668
      %v670 = vpop.f32.mrf.mxu0
      %v671 = vpop.f32.mrf.mxu0
      %v672 = vadd.f32 0.0, %v671
      %v673 = vpop.f32.mrf.mxu0
      %674 = vmatprep.mubr.bf16.mxu0 0
      %675 = vmatmul.mubr.bf16.gmra.mxu0 %v467
      %v676 = vpop.f32.mrf.mxu0
      %v677 = vadd.f32 0.0, %v676
      %v678 = vpop.f32.mrf.mxu0
      %v679 = vpop.f32.mrf.mxu0
      %v680 = vadd.f32 0.0, %v679
      %v681 = vpop.f32.mrf.mxu0
      %682 = vmatprep.mubr.bf16.mxu0 0
      %683 = vmatmul.mubr.bf16.gmra.mxu0 %v468
      %v684 = vpop.f32.mrf.mxu0
      %v685 = vadd.f32 0.0, %v684
      %v686 = vpop.f32.mrf.mxu0
      %v687 = vpop.f32.mrf.mxu0
      %v688 = vadd.f32 0.0, %v687
      %v689 = vpop.f32.mrf.mxu0
      %690 = vmatprep.mubr.bf16.mxu0 0
      %691 = vmatmul.mubr.bf16.gmra.mxu0 %v469
      %v692 = vpop.f32.mrf.mxu0
      %v693 = vadd.f32 0.0, %v692
      %v694 = vpop.f32.mrf.mxu0
      %v695 = vpop.f32.mrf.mxu0
      %v696 = vadd.f32 0.0, %v695
      %v697 = vpop.f32.mrf.mxu0
      %698 = vmatprep.mubr.bf16.mxu0 0
      %699 = vmatmul.mubr.bf16.gmra.mxu0 %v470
      %v700 = vpop.f32.mrf.mxu0
      %v701 = vadd.f32 0.0, %v700
      %v702 = vpop.f32.mrf.mxu0
      %v703 = vpop.f32.mrf.mxu0
      %v704 = vadd.f32 0.0, %v703
      %v705 = vpop.f32.mrf.mxu0
      %706 = vmatprep.mubr.bf16.mxu0 0
      %707 = vmatmul.mubr.bf16.gmra.mxu0 %v471
      %v708 = vpop.f32.mrf.mxu0
      %v709 = vadd.f32 0.0, %v708
      %v710 = vpop.f32.mrf.mxu0
      %v711 = vpop.f32.mrf.mxu0
      %v712 = vadd.f32 0.0, %v711
      %v713 = vpop.f32.mrf.mxu0
      %714 = vmatprep.mubr.bf16.mxu0 0
      %715 = vmatmul.mubr.bf16.gmra.mxu0 %v472
      %v716 = vpop.f32.mrf.mxu0
      %v717 = vadd.f32 0.0, %v716
      %v718 = vpop.f32.mrf.mxu0
      %v719 = vpop.f32.mrf.mxu0
      %v720 = vadd.f32 0.0, %v719
      %v721 = vpop.f32.mrf.mxu0
      %722 = vmatprep.mubr.bf16.mxu0 0
      %723 = vmatmul.mubr.bf16.gmra.mxu0 %v473
      %v724 = vpop.f32.mrf.mxu0
      %v725 = vadd.f32 0.0, %v724
      %v726 = vpop.f32.mrf.mxu0
      %v727 = vpop.f32.mrf.mxu0
      %v728 = vadd.f32 0.0, %v727
      %v729 = vpop.f32.mrf.mxu0
      %730 = vmatprep.mubr.bf16.mxu0 0
      %731 = vmatmul.mubr.bf16.gmra.mxu0 %v474
      %v732 = vpop.f32.mrf.mxu0
      %v733 = vadd.f32 0.0, %v732
      %v734 = vpop.f32.mrf.mxu0
      %v735 = vpop.f32.mrf.mxu0
      %v736 = vadd.f32 0.0, %v735
      %v737 = vpop.f32.mrf.mxu0
      %738 = vmatprep.mubr.bf16.mxu0 0
      %739 = vmatmul.mubr.bf16.gmra.mxu0 %v475
      %v740 = vpop.f32.mrf.mxu0
      %v741 = vadd.f32 0.0, %v740
      %v742 = vpop.f32.mrf.mxu0
      %v743 = vpop.f32.mrf.mxu0
      %v744 = vadd.f32 0.0, %v743
      %v745 = vpop.f32.mrf.mxu0
      %746 = vmatprep.mubr.bf16.mxu0 0
      %747 = vmatmul.mubr.bf16.gmra.mxu0 %v476
      %v748 = vpop.f32.mrf.mxu0
      %v749 = vadd.f32 0.0, %v748
      %v750 = vpop.f32.mrf.mxu0
      %v751 = vpop.f32.mrf.mxu0
      %v752 = vadd.f32 0.0, %v751
      %v753 = vpop.f32.mrf.mxu0
      %754 = vmatprep.mubr.bf16.mxu0 0
      %755 = vmatmul.mubr.bf16.gmra.mxu0 %v477
      %v756 = vpop.f32.mrf.mxu0
      %v757 = vadd.f32 0.0, %v756
      %v758 = vpop.f32.mrf.mxu0
      %v759 = vpop.f32.mrf.mxu0
      %v760 = vadd.f32 0.0, %v759
      %v761 = vpop.f32.mrf.mxu0
      %762 = vmatprep.mubr.bf16.mxu0 0
      %763 = vmatmul.mubr.bf16.gmra.mxu0 %v478
      %v764 = vpop.f32.mrf.mxu0
      %v765 = vadd.f32 0.0, %v764
      %v766 = vpop.f32.mrf.mxu0
      %v767 = vpop.f32.mrf.mxu0
      %v768 = vadd.f32 0.0, %v767
      %v769 = vpop.f32.mrf.mxu0
      %770 = vmatprep.mubr.bf16.mxu0 0
      %771 = vmatmul.mubr.bf16.gmra.mxu0 %v479
      %v772 = vpop.f32.mrf.mxu0
      %v773 = vadd.f32 0.0, %v772
      %v774 = vpop.f32.mrf.mxu0
      %v775 = vpop.f32.mrf.mxu0
      %v776 = vadd.f32 0.0, %v775
      %v777 = vpop.f32.mrf.mxu0
      %778 = vmatprep.mubr.bf16.mxu0 0
      %779 = vmatmul.mubr.bf16.gmra.mxu0 %v480
      %v780 = vpop.f32.mrf.mxu0
      %v781 = vadd.f32 0.0, %v780
      %v782 = vpop.f32.mrf.mxu0
      %v783 = vpop.f32.mrf.mxu0
      %v784 = vadd.f32 0.0, %v783
      %v785 = vpop.f32.mrf.mxu0
      %786 = vmatprep.mubr.bf16.mxu0 0
      %787 = vmatmul.mubr.bf16.gmra.mxu0 %v481
      %v788 = vpop.f32.mrf.mxu0
      %v789 = vadd.f32 0.0, %v788
      %v790 = vpop.f32.mrf.mxu0
      %v791 = vpop.f32.mrf.mxu0
      %v792 = vadd.f32 0.0, %v791
      %v793 = vpop.f32.mrf.mxu0
      %794 = vmatprep.mubr.bf16.mxu0 0
      %795 = vmatmul.mubr.bf16.gmra.mxu0 %v482
      %v796 = vpop.f32.mrf.mxu0
      %v797 = vadd.f32 0.0, %v796
      %v798 = vpop.f32.mrf.mxu0
      %v799 = vpop.f32.mrf.mxu0
      %v800 = vadd.f32 0.0, %v799
      %v801 = vpop.f32.mrf.mxu0
      %802 = vmatprep.mubr.bf16.mxu0 0
      %803 = vmatmul.mubr.bf16.gmra.mxu0 %v483
      %v804 = vpop.f32.mrf.mxu0
      %v805 = vadd.f32 0.0, %v804
      %v806 = vpop.f32.mrf.mxu0
      %v807 = vpop.f32.mrf.mxu0
      %v808 = vadd.f32 0.0, %v807
      %v809 = vpop.f32.mrf.mxu0
      %810 = vmatprep.mubr.bf16.mxu0 0
      %811 = vmatmul.mubr.bf16.gmra.mxu0 %v484
      %v812 = vpop.f32.mrf.mxu0
      %v813 = vadd.f32 0.0, %v812
      %v814 = vpop.f32.mrf.mxu0
      %v815 = vpop.f32.mrf.mxu0
      %v816 = vadd.f32 0.0, %v815
      %v817 = vpop.f32.mrf.mxu0
      %818 = vmatprep.mubr.bf16.mxu0 0
      %819 = vmatmul.mubr.bf16.gmra.mxu0 %v485
      %v820 = vpop.f32.mrf.mxu0
      %v821 = vadd.f32 0.0, %v820
      %v822 = vpop.f32.mrf.mxu0
      %v823 = vpop.f32.mrf.mxu0
      %v824 = vadd.f32 0.0, %v823
      %v825 = vpop.f32.mrf.mxu0
      %826 = vmatprep.mubr.bf16.mxu0 0
      %827 = vmatmul.mubr.bf16.gmra.mxu0 %v486
      %v828 = vpop.f32.mrf.mxu0
      %v829 = vadd.f32 0.0, %v828
      %v830 = vpop.f32.mrf.mxu0
      %v831 = vpop.f32.mrf.mxu0
      %v832 = vadd.f32 0.0, %v831
      %v833 = vpop.f32.mrf.mxu0
      %834 = vmatprep.mubr.bf16.mxu0 0
      %835 = vmatmul.mubr.bf16.gmra.mxu0 %v487
      %v836 = vpop.f32.mrf.mxu0
      %v837 = vadd.f32 0.0, %v836
      %v838 = vpop.f32.mrf.mxu0
      %v839 = vpop.f32.mrf.mxu0
      %v840 = vadd.f32 0.0, %v839
      %v841 = vpop.f32.mrf.mxu0
      %842 = vmatprep.mubr.bf16.mxu0 0
      %843 = vmatmul.mubr.bf16.gmra.mxu0 %v488
      %v844 = vpop.f32.mrf.mxu0
      %v845 = vadd.f32 0.0, %v844
      %v846 = vpop.f32.mrf.mxu0
      %v847 = vpop.f32.mrf.mxu0
      %v848 = vadd.f32 0.0, %v847
      %v849 = vpop.f32.mrf.mxu0
      %850 = vmatprep.mubr.bf16.mxu0 0
      %851 = vmatmul.mubr.bf16.gmra.mxu0 %v489
      %v852 = vpop.f32.mrf.mxu0
      %v853 = vadd.f32 0.0, %v852
      %v854 = vpop.f32.mrf.mxu0
      %v855 = vpop.f32.mrf.mxu0
      %v856 = vadd.f32 0.0, %v855
      %v857 = vpop.f32.mrf.mxu0
      %858 = vdwg.mxu0
      %859 = vst [vmem:[%s240] sm:$0xff] %v605
      %860 = vst [vmem:[%s240 + $0x8] sm:$0xff] %v608
      %861 = vst [vmem:[%s240 + $0x10] sm:$0xff] %v613
      %862 = vst [vmem:[%s240 + $0x18] sm:$0xff] %v616
      %863 = vst [vmem:[%s240 + $0x20] sm:$0xff] %v621
      %864 = vst [vmem:[%s240 + $0x28] sm:$0xff] %v624
      %865 = vst [vmem:[%s240 + $0x30] sm:$0xff] %v629
      %866 = vst [vmem:[%s240 + $0x38] sm:$0xff] %v632
      %867 = vst [vmem:[%s240 + $0x40] sm:$0xff] %v637
      %868 = vst [vmem:[%s240 + $0x48] sm:$0xff] %v640
      %869 = vst [vmem:[%s240 + $0x50] sm:$0xff] %v645
      %870 = vst [vmem:[%s240 + $0x58] sm:$0xff] %v648
      %871 = vst [vmem:[%s240 + $0x60] sm:$0xff] %v653
      %872 = vst [vmem:[%s240 + $0x68] sm:$0xff] %v656
      %873 = vst [vmem:[%s240 + $0x70] sm:$0xff] %v661
      %874 = vst [vmem:[%s240 + $0x78] sm:$0xff] %v664
      %875 = vst [vmem:[%s240 + $0x80] sm:$0xff] %v669
      %876 = vst [vmem:[%s240 + $0x88] sm:$0xff] %v672
      %877 = vst [vmem:[%s240 + $0x90] sm:$0xff] %v677
      %878 = vst [vmem:[%s240 + $0x98] sm:$0xff] %v680
      %879 = vst [vmem:[%s240 + $0xa0] sm:$0xff] %v685
      %880 = vst [vmem:[%s240 + $0xa8] sm:$0xff] %v688
      %881 = vst [vmem:[%s240 + $0xb0] sm:$0xff] %v693
      %882 = vst [vmem:[%s240 + $0xb8] sm:$0xff] %v696
      %883 = vst [vmem:[%s240 + $0xc0] sm:$0xff] %v701
      %884 = vst [vmem:[%s240 + $0xc8] sm:$0xff] %v704
      %885 = vst [vmem:[%s240 + $0xd0] sm:$0xff] %v709
      %886 = vst [vmem:[%s240 + $0xd8] sm:$0xff] %v712
      %887 = vst [vmem:[%s240 + $0xe0] sm:$0xff] %v717
      %888 = vst [vmem:[%s240 + $0xe8] sm:$0xff] %v720
      %889 = vst [vmem:[%s240 + $0xf0] sm:$0xff] %v725
      %890 = vst [vmem:[%s240 + $0xf8] sm:$0xff] %v728
      %891 = vst [vmem:[%s240 + $0x100] sm:$0xff] %v733
      %892 = vst [vmem:[%s240 + $0x108] sm:$0xff] %v736
      %893 = vst [vmem:[%s240 + $0x110] sm:$0xff] %v741
      %894 = vst [vmem:[%s240 + $0x118] sm:$0xff] %v744
      %895 = vst [vmem:[%s240 + $0x120] sm:$0xff] %v749
      %896 = vst [vmem:[%s240 + $0x128] sm:$0xff] %v752
      %897 = vst [vmem:[%s240 + $0x130] sm:$0xff] %v757
      %898 = vst [vmem:[%s240 + $0x138] sm:$0xff] %v760
      %899 = vst [vmem:[%s240 + $0x140] sm:$0xff] %v765
      %900 = vst [vmem:[%s240 + $0x148] sm:$0xff] %v768
      %901 = vst [vmem:[%s240 + $0x150] sm:$0xff] %v773
      %902 = vst [vmem:[%s240 + $0x158] sm:$0xff] %v776
      %903 = vst [vmem:[%s240 + $0x160] sm:$0xff] %v781
      %904 = vst [vmem:[%s240 + $0x168] sm:$0xff] %v784
      %905 = vst [vmem:[%s240 + $0x170] sm:$0xff] %v789
      %906 = vst [vmem:[%s240 + $0x178] sm:$0xff] %v792
      %907 = vst [vmem:[%s240 + $0x180] sm:$0xff] %v797
      %908 = vst [vmem:[%s240 + $0x188] sm:$0xff] %v800
      %909 = vst [vmem:[%s240 + $0x190] sm:$0xff] %v805
      %910 = vst [vmem:[%s240 + $0x198] sm:$0xff] %v808
      %911 = vst [vmem:[%s240 + $0x1a0] sm:$0xff] %v813
      %912 = vst [vmem:[%s240 + $0x1a8] sm:$0xff] %v816
      %913 = vst [vmem:[%s240 + $0x1b0] sm:$0xff] %v821
      %914 = vst [vmem:[%s240 + $0x1b8] sm:$0xff] %v824
      %915 = vst [vmem:[%s240 + $0x1c0] sm:$0xff] %v829
      %916 = vst [vmem:[%s240 + $0x1c8] sm:$0xff] %v832
      %917 = vst [vmem:[%s240 + $0x1d0] sm:$0xff] %v837
      %918 = vst [vmem:[%s240 + $0x1d8] sm:$0xff] %v840
      %919 = vst [vmem:[%s240 + $0x1e0] sm:$0xff] %v845
      %920 = vst [vmem:[%s240 + $0x1e8] sm:$0xff] %v848
      %921 = vst [vmem:[%s240 + $0x1f0] sm:$0xff] %v853
      %922 = vst [vmem:[%s240 + $0x1f8] sm:$0xff] %v856
      %v923 = vadd.f32 %v605, %v608
      %v924 = vadd.f32 %v923, %v613
      %v925 = vadd.f32 %v924, %v616
      %v926 = vadd.f32 %v925, %v621
      %v927 = vadd.f32 %v926, %v624
      %v928 = vadd.f32 %v927, %v629
      %v929 = vadd.f32 %v928, %v632
      %v930 = vadd.f32 %v929, %v637
      %v931 = vadd.f32 %v930, %v640
      %v932 = vadd.f32 %v931, %v645
      %v933 = vadd.f32 %v932, %v648
      %v934 = vadd.f32 %v933, %v653
      %v935 = vadd.f32 %v934, %v656
      %v936 = vadd.f32 %v935, %v661
      %v937 = vadd.f32 %v936, %v664
      %v938 = vadd.f32 %v937, %v669
      %v939 = vadd.f32 %v938, %v672
      %v940 = vadd.f32 %v939, %v677
      %v941 = vadd.f32 %v940, %v680
      %v942 = vadd.f32 %v941, %v685
      %v943 = vadd.f32 %v942, %v688
      %v944 = vadd.f32 %v943, %v693
      %v945 = vadd.f32 %v944, %v696
      %v946 = vadd.f32 %v945, %v701
      %v947 = vadd.f32 %v946, %v704
      %v948 = vadd.f32 %v947, %v709
      %v949 = vadd.f32 %v948, %v712
      %v950 = vadd.f32 %v949, %v717
      %v951 = vadd.f32 %v950, %v720
      %v952 = vadd.f32 %v951, %v725
      %v953 = vadd.f32 %v952, %v728
      %v954 = vadd.f32 %v953, %v733
      %v955 = vadd.f32 %v954, %v736
      %v956 = vadd.f32 %v955, %v741
      %v957 = vadd.f32 %v956, %v744
      %v958 = vadd.f32 %v957, %v749
      %v959 = vadd.f32 %v958, %v752
      %v960 = vadd.f32 %v959, %v757
      %v961 = vadd.f32 %v960, %v760
      %v962 = vadd.f32 %v961, %v765
      %v963 = vadd.f32 %v962, %v768
      %v964 = vadd.f32 %v963, %v773
      %v965 = vadd.f32 %v964, %v776
      %v966 = vadd.f32 %v965, %v781
      %v967 = vadd.f32 %v966, %v784
      %v968 = vadd.f32 %v967, %v789
      %v969 = vadd.f32 %v968, %v792
      %v970 = vadd.f32 %v969, %v797
      %v971 = vadd.f32 %v970, %v800
      %v972 = vadd.f32 %v971, %v805
      %v973 = vadd.f32 %v972, %v808
      %v974 = vadd.f32 %v973, %v813
      %v975 = vadd.f32 %v974, %v816
      %v976 = vadd.f32 %v975, %v821
      %v977 = vadd.f32 %v976, %v824
      %v978 = vadd.f32 %v977, %v829
      %v979 = vadd.f32 %v978, %v832
      %v980 = vadd.f32 %v979, %v837
      %v981 = vadd.f32 %v980, %v840
      %v982 = vadd.f32 %v981, %v845
      %v983 = vadd.f32 %v982, %v848
      %v984 = vadd.f32 %v983, %v853
      %v985 = vadd.f32 %v984, %v856
      %v986 = vrot.slane %v985, 4
      %v987 = vadd.f32 %v985, %v986
      %v988 = vrot.slane %v987, 2
      %v989 = vadd.f32 %v987, %v988
      %v990 = vrot.slane %v989, 1
      %v991 = vadd.f32 %v989, %v990
      %992 = vst [vmem:[%s248] sm:$0x1] %v991
      %v993 = vmul.f32 %v605, %v605
      %v994 = vmul.f32 %v608, %v608
      %v995 = vmul.f32 %v613, %v613
      %v996 = vmul.f32 %v616, %v616
      %v997 = vmul.f32 %v621, %v621
      %v998 = vmul.f32 %v624, %v624
      %v999 = vmul.f32 %v629, %v629
      %v1000 = vmul.f32 %v632, %v632
      %v1001 = vmul.f32 %v637, %v637
      %v1002 = vmul.f32 %v640, %v640
      %v1003 = vmul.f32 %v645, %v645
      %v1004 = vmul.f32 %v648, %v648
      %v1005 = vmul.f32 %v653, %v653
      %v1006 = vmul.f32 %v656, %v656
      %v1007 = vmul.f32 %v661, %v661
      %v1008 = vmul.f32 %v664, %v664
      %v1009 = vmul.f32 %v669, %v669
      %v1010 = vmul.f32 %v672, %v672
      %v1011 = vmul.f32 %v677, %v677
      %v1012 = vmul.f32 %v680, %v680
      %v1013 = vmul.f32 %v685, %v685
      %v1014 = vmul.f32 %v688, %v688
      %v1015 = vmul.f32 %v693, %v693
      %v1016 = vmul.f32 %v696, %v696
      %v1017 = vmul.f32 %v701, %v701
      %v1018 = vmul.f32 %v704, %v704
      %v1019 = vmul.f32 %v709, %v709
      %v1020 = vmul.f32 %v712, %v712
      %v1021 = vmul.f32 %v717, %v717
      %v1022 = vmul.f32 %v720, %v720
      %v1023 = vmul.f32 %v725, %v725
      %v1024 = vmul.f32 %v728, %v728
      %v1025 = vmul.f32 %v733, %v733
      %v1026 = vmul.f32 %v736, %v736
      %v1027 = vmul.f32 %v741, %v741
      %v1028 = vmul.f32 %v744, %v744
      %v1029 = vmul.f32 %v749, %v749
      %v1030 = vmul.f32 %v752, %v752
      %v1031 = vmul.f32 %v757, %v757
      %v1032 = vmul.f32 %v760, %v760
      %v1033 = vmul.f32 %v765, %v765
      %v1034 = vmul.f32 %v768, %v768
      %v1035 = vmul.f32 %v773, %v773
      %v1036 = vmul.f32 %v776, %v776
      %v1037 = vmul.f32 %v781, %v781
      %v1038 = vmul.f32 %v784, %v784
      %v1039 = vmul.f32 %v789, %v789
      %v1040 = vmul.f32 %v792, %v792
      %v1041 = vmul.f32 %v797, %v797
      %v1042 = vmul.f32 %v800, %v800
      %v1043 = vmul.f32 %v805, %v805
      %v1044 = vmul.f32 %v808, %v808
      %v1045 = vmul.f32 %v813, %v813
      %v1046 = vmul.f32 %v816, %v816
      %v1047 = vmul.f32 %v821, %v821
      %v1048 = vmul.f32 %v824, %v824
      %v1049 = vmul.f32 %v829, %v829
      %v1050 = vmul.f32 %v832, %v832
      %v1051 = vmul.f32 %v837, %v837
      %v1052 = vmul.f32 %v840, %v840
      %v1053 = vmul.f32 %v845, %v845
      %v1054 = vmul.f32 %v848, %v848
      %v1055 = vmul.f32 %v853, %v853
      %v1056 = vmul.f32 %v856, %v856
      %v1057 = vadd.f32 %v993, %v994
      %v1058 = vadd.f32 %v1057, %v995
      %v1059 = vadd.f32 %v1058, %v996
      %v1060 = vadd.f32 %v1059, %v997
      %v1061 = vadd.f32 %v1060, %v998
      %v1062 = vadd.f32 %v1061, %v999
      %v1063 = vadd.f32 %v1062, %v1000
      %v1064 = vadd.f32 %v1063, %v1001
      %v1065 = vadd.f32 %v1064, %v1002
      %v1066 = vadd.f32 %v1065, %v1003
      %v1067 = vadd.f32 %v1066, %v1004
      %v1068 = vadd.f32 %v1067, %v1005
      %v1069 = vadd.f32 %v1068, %v1006
      %v1070 = vadd.f32 %v1069, %v1007
      %v1071 = vadd.f32 %v1070, %v1008
      %v1072 = vadd.f32 %v1071, %v1009
      %v1073 = vadd.f32 %v1072, %v1010
      %v1074 = vadd.f32 %v1073, %v1011
      %v1075 = vadd.f32 %v1074, %v1012
      %v1076 = vadd.f32 %v1075, %v1013
      %v1077 = vadd.f32 %v1076, %v1014
      %v1078 = vadd.f32 %v1077, %v1015
      %v1079 = vadd.f32 %v1078, %v1016
      %v1080 = vadd.f32 %v1079, %v1017
      %v1081 = vadd.f32 %v1080, %v1018
      %v1082 = vadd.f32 %v1081, %v1019
      %v1083 = vadd.f32 %v1082, %v1020
      %v1084 = vadd.f32 %v1083, %v1021
      %v1085 = vadd.f32 %v1084, %v1022
      %v1086 = vadd.f32 %v1085, %v1023
      %v1087 = vadd.f32 %v1086, %v1024
      %v1088 = vadd.f32 %v1087, %v1025
      %v1089 = vadd.f32 %v1088, %v1026
      %v1090 = vadd.f32 %v1089, %v1027
      %v1091 = vadd.f32 %v1090, %v1028
      %v1092 = vadd.f32 %v1091, %v1029
      %v1093 = vadd.f32 %v1092, %v1030
      %v1094 = vadd.f32 %v1093, %v1031
      %v1095 = vadd.f32 %v1094, %v1032
      %v1096 = vadd.f32 %v1095, %v1033
      %v1097 = vadd.f32 %v1096, %v1034
      %v1098 = vadd.f32 %v1097, %v1035
      %v1099 = vadd.f32 %v1098, %v1036
      %v1100 = vadd.f32 %v1099, %v1037
      %v1101 = vadd.f32 %v1100, %v1038
      %v1102 = vadd.f32 %v1101, %v1039
      %v1103 = vadd.f32 %v1102, %v1040
      %v1104 = vadd.f32 %v1103, %v1041
      %v1105 = vadd.f32 %v1104, %v1042
      %v1106 = vadd.f32 %v1105, %v1043
      %v1107 = vadd.f32 %v1106, %v1044
      %v1108 = vadd.f32 %v1107, %v1045
      %v1109 = vadd.f32 %v1108, %v1046
      %v1110 = vadd.f32 %v1109, %v1047
      %v1111 = vadd.f32 %v1110, %v1048
      %v1112 = vadd.f32 %v1111, %v1049
      %v1113 = vadd.f32 %v1112, %v1050
      %v1114 = vadd.f32 %v1113, %v1051
      %v1115 = vadd.f32 %v1114, %v1052
      %v1116 = vadd.f32 %v1115, %v1053
      %v1117 = vadd.f32 %v1116, %v1054
      %v1118 = vadd.f32 %v1117, %v1055
      %v1119 = vadd.f32 %v1118, %v1056
      %v1120 = vrot.slane %v1119, 4
      %v1121 = vadd.f32 %v1119, %v1120
      %v1122 = vrot.slane %v1121, 2
      %v1123 = vadd.f32 %v1121, %v1122
      %v1124 = vrot.slane %v1123, 1
      %v1125 = vadd.f32 %v1123, %v1124
      %1126 = vst [vmem:[%s248 + $0x1] sm:$0x1] %v1125
      %s1127 = smul.u32 64, %s20
      %p1128 = scmp.lt.s32.totalorder %s19, 3
      %s1129 = scalar_select %p1128, %s19, 3
      %p1130 = scmp.lt.s32.totalorder %s1127, 63
      %s1131 = scalar_select %p1130, %s1127, 63
      %s1132 = smul.addr %s1129, 64
      %s1133 = sadd.s32 %s1131, %s1132
      %s1134 = smul.addr %s1133, 8
      %s1135 = scalar_lea.vmem %s2, %s1134
      %p1136 = scmp.lt.s32.totalorder %s19, 3
      %s1137 = scalar_select %p1136, %s19, 3
      %p1138 = scmp.lt.s32.totalorder %s20, 0
      %s1139 = scalar_select %p1138, %s20, 0
      %s1140 = sadd.s32 %s1139, %s1137
      %s1141 = smul.addr %s1140, 2
      %s1142 = scalar_lea.vmem %s3, %s1141
      // Predicated region
      $region29: #{generator_forward.19} parent=27 // pred_check
        %p1143 = pneg %p101
      $region30: #{generator_forward.19} parent=27 // pred_check_branch
        %1145 = sbr.rel (%p1143) target = $region32
      $region31: #{generator_forward.19} parent=27 // pred_region
        %s1146 = smul.u32 64, %s20
      $region32: #{generator_forward.19} parent=27 // pred_fallthru
        _
      // Predicated region
      $region33: #{generator_forward.19} parent=27 // pred_check
        %p1147 = pneg %p129
      $region34: #{generator_forward.19} parent=27 // pred_check_branch
        %1149 = sbr.rel (%p1147) target = $region36
      $region35: #{generator_forward.19} parent=27 // pred_region
        _
      $region36: #{generator_forward.19} parent=27 // pred_fallthru
        _
    $region28: #{generator_forward.19} parent=5 // pred_fallthru
      _
    %p1150 = scmp.le.s32.totalorder 2, %s10
    // Predicated region
    $region37: #{generator_forward.19} parent=5 // pred_check
      %p1151 = pneg %p1150
    $region38: #{generator_forward.19} parent=5 // pred_check_branch
      %1153 = sbr.rel (%p1151) target = $region40
    $region39: #{generator_forward.19} parent=5 // pred_region
      %s1154 = ssub.s32 %s10, 2
      // Predicated region
      $region41: #{generator_forward.19} parent=39 // pred_check
        %p1155 = pneg %p107
      $region42: #{generator_forward.19} parent=39 // pred_check_branch
        %1157 = sbr.rel (%p1155) target = $region44
      $region43: #{generator_forward.19} parent=39 // pred_region
        %s1158 = smul.u32 64, %s22
        %p1159 = scmp.lt.s32.totalorder %s21, 3
        %s1160 = scalar_select %p1159, %s21, 3
        %p1161 = scmp.lt.s32.totalorder %s1158, 63
        %s1162 = scalar_select %p1161, %s1158, 63
        %s1163 = smul.addr %s1160, 64
        %s1164 = sadd.s32 %s1162, %s1163
        %s1165 = smul.addr %s1164, 8
        %s1166 = scalar_lea.vmem %s2, %s1165
      $region44: #{generator_forward.19} parent=39 // pred_fallthru
        _
      // Predicated region
      $region45: #{generator_forward.19} parent=39 // pred_check
        %p1167 = pneg %p135
      $region46: #{generator_forward.19} parent=39 // pred_check_branch
        %1169 = sbr.rel (%p1167) target = $region48
      $region47: #{generator_forward.19} parent=39 // pred_region
        %p1170 = scmp.lt.s32.totalorder %s21, 3
        %s1171 = scalar_select %p1170, %s21, 3
        %p1172 = scmp.lt.s32.totalorder %s22, 0
        %s1173 = scalar_select %p1172, %s22, 0
        %s1174 = sadd.s32 %s1173, %s1171
        %s1175 = smul.addr %s1174, 2
        %s1176 = scalar_lea.vmem %s3, %s1175
      $region48: #{generator_forward.19} parent=39 // pred_fallthru
        _
    $region40: #{generator_forward.19} parent=5 // pred_fallthru
      _
  $region6: #{generator_forward.19} parent=0 // loop_footer
    %s14 = sadd.s32 1, %s10
  $region7: #{generator_forward.19} parent=0 // loop_footer_branch
    %9 = sbr.rel target = $region3
  $region8: #{generator_forward.19} parent=0 // loop_exit
    _

// kernel: generator_forward.21
$region0: #{generator_forward.21}
  #allocation0 [shape = 'u32[]', space=smem, size = 0x4, offset = 0x4, fixed_abs, tag = 'smem constant byte address 0x4 - core index']
  #allocation1 [shape = 'u32[144,128]{1,0:T(1,128)}', space=vmem, size = 0x12000, scoped, tag = 'internal scratch']
  %s0 = inlined_call_operand.vmem [shape: bf16[4,2048,128], index: 0, kind: input, shape index: {}]
  %s1 = inlined_call_operand.vmem [shape: bf16[4,128,128], index: 1, kind: input, shape index: {}]
  %s2 = inlined_call_operand.vmem [shape: f32[4,2048,128], index: 2, kind: output, shape index: {}]
  %s3 = sld [smem:[#allocation0]]
  $region41: #{generator_forward.21} parent=0
    _
  %s5 = ssub.s32 1, %s3
  %s6 = scalar_select 0, %s5, %s3
  loop: start=0, step=1, limit=10
  $region2: #{generator_forward.21} parent=0 // loop_pre_header
    _
  $region3: #{generator_forward.21} parent=0 // loop_header
    %s8 = sphi 0, %s12
    %p9 = scmp.ge.s32.totalorder %s8, 10
    %s15 = sphi 0, %s27
    %s16 = sphi 0, %s23
    %s17 = sphi 0, %s15
    %s18 = sphi 0, %s16
    %s19 = sphi 0, %s17
    %s20 = sphi 0, %s18
    %s32 = sphi 0, %s34
    %s35 = sphi 0, %s32
    %s36 = sphi 0, %s35
    %s52 = sphi 0, %s36
    %s58 = sphi 0, %s60
    %s61 = sphi 0, %s58
    %s62 = sphi 0, %s61
    %s78 = sphi 0, %s62
    %s86 = sphi 0, %s88
    %s89 = sphi 0, %s86
    %s90 = sphi 0, %s89
    %s106 = sphi 0, %s90
  $region4: #{generator_forward.21} parent=0 // loop_header_branch
    %11 = sbr.rel (%p9) target = $region8
  $region5: #{generator_forward.21} parent=0 // loop_body
    %s13 = ssub.s32 %s8, 1
    %s14 = ssub.s32 %s8, 2
    %s21 = sadd.s32 1, %s16
    %p22 = scmp.ge.s32.totalorder %s21, 2
    %s23 = scalar_select %p22, 0, %s21
    %s24 = sadd.s32 1, %s15
    %s25 = scalar_select %p22, %s24, %s15
    %p26 = scmp.ge.s32.totalorder %s25, 4
    %s27 = scalar_select %p26, 0, %s25
    %s28 = ssub.s32 %s15, %s27
    %s29 = ssub.s32 %s16, %s23
    %s30 = sor.u32 %s28, %s29
    %p31 = scmp.eq.s32.totalorder %s30, 0
    %s33 = sadd.s32 %s32, 1
    %s34 = scalar_select %p31, %s32, %s33
    %p37 = pneg %p31
    %p38 = scmp.eq.s32.totalorder %s8, 7
    %p39 = por %p37, %p38
    %p40 = scmp.ne.s32.totalorder %s32, %s35
    %p41 = scmp.eq.s32.totalorder %s8, 0
    %p42 = por %p40, %p41
    %p43 = scmp.ne.s32.totalorder %s32, %s35
    %p44 = scmp.eq.s32.totalorder %s13, 7
    %p45 = por %p43, %p44
    %p46 = scmp.ne.s32.totalorder %s35, %s36
    %p47 = scmp.eq.s32.totalorder %s13, 0
    %p48 = por %p46, %p47
    %p49 = scmp.ne.s32.totalorder %s35, %s36
    %p50 = scmp.eq.s32.totalorder %s14, 7
    %p51 = por %p49, %p50
    %p53 = scmp.ne.s32.totalorder %s36, %s52
    %p54 = scmp.eq.s32.totalorder %s14, 0
    %p55 = por %p53, %p54
    %s56 = ssub.s32 %s15, %s27
    %p57 = scmp.eq.s32.totalorder %s56, 0
    %s59 = sadd.s32 %s58, 1
    %s60 = scalar_select %p57, %s58, %s59
    %p63 = pneg %p57
    %p64 = scmp.eq.s32.totalorder %s8, 7
    %p65 = por %p63, %p64
    %p66 = scmp.ne.s32.totalorder %s58, %s61
    %p67 = scmp.eq.s32.totalorder %s8, 0
    %p68 = por %p66, %p67
    %p69 = scmp.ne.s32.totalorder %s58, %s61
    %p70 = scmp.eq.s32.totalorder %s13, 7
    %p71 = por %p69, %p70
    %p72 = scmp.ne.s32.totalorder %s61, %s62
    %p73 = scmp.eq.s32.totalorder %s13, 0
    %p74 = por %p72, %p73
    %p75 = scmp.ne.s32.totalorder %s61, %s62
    %p76 = scmp.eq.s32.totalorder %s14, 7
    %p77 = por %p75, %p76
    %p79 = scmp.ne.s32.totalorder %s62, %s78
    %p80 = scmp.eq.s32.totalorder %s14, 0
    %p81 = por %p79, %p80
    %s82 = ssub.s32 %s15, %s27
    %s83 = ssub.s32 %s16, %s23
    %s84 = sor.u32 %s82, %s83
    %p85 = scmp.eq.s32.totalorder %s84, 0
    %s87 = sadd.s32 %s86, 1
    %s88 = scalar_select %p85, %s86, %s87
    %p91 = pneg %p85
    %p92 = scmp.eq.s32.totalorder %s8, 7
    %p93 = por %p91, %p92
    %p94 = scmp.ne.s32.totalorder %s86, %s89
    %p95 = scmp.eq.s32.totalorder %s8, 0
    %p96 = por %p94, %p95
    %p97 = scmp.ne.s32.totalorder %s86, %s89
    %p98 = scmp.eq.s32.totalorder %s13, 7
    %p99 = por %p97, %p98
    %p100 = scmp.ne.s32.totalorder %s89, %s90
    %p101 = scmp.eq.s32.totalorder %s13, 0
    %p102 = por %p100, %p101
    %p103 = scmp.ne.s32.totalorder %s89, %s90
    %p104 = scmp.eq.s32.totalorder %s14, 7
    %p105 = por %p103, %p104
    %p107 = scmp.ne.s32.totalorder %s90, %s106
    %p108 = scmp.eq.s32.totalorder %s14, 0
    %p109 = por %p107, %p108
    %p110 = scmp.le.s32.totalorder 1, %s8
    %p111 = scmp.lt.s32.totalorder %s8, 9
    %p112 = pnand %p110, %p111
    %p113 = pneg %p112
    // Predicated region
    $region9: #{generator_forward.21} parent=5 // pred_check
      _
    $region10: #{generator_forward.21} parent=5 // pred_check_branch
      %115 = sbr.rel (%p112) target = $region12
    $region11: #{generator_forward.21} parent=5 // pred_region
      %s116 = ssub.s32 %s8, 1
    $region12: #{generator_forward.21} parent=5 // pred_fallthru
      _
    %p117 = scmp.lt.s32.totalorder %s8, 8
    // Predicated region
    $region13: #{generator_forward.21} parent=5 // pred_check
      %p118 = pneg %p117
    $region14: #{generator_forward.21} parent=5 // pred_check_branch
      %120 = sbr.rel (%p118) target = $region16
    $region15: #{generator_forward.21} parent=5 // pred_region
      // Predicated region
      $region17: #{generator_forward.21} parent=15 // pred_check
        %p121 = pneg %p42
      $region18: #{generator_forward.21} parent=15 // pred_check_branch
        %123 = sbr.rel (%p121) target = $region20
      $region19: #{generator_forward.21} parent=15 // pred_region
        %s124 = smul.u32 128, %s16
        %p125 = scmp.lt.s32.totalorder %s15, 3
        %s126 = scalar_select %p125, %s15, 3
        %p127 = scmp.lt.s32.totalorder %s124, 255
        %s128 = scalar_select %p127, %s124, 255
        %s129 = smul.addr %s126, 256
        %s130 = sadd.s32 %s128, %s129
        %s131 = smul.addr %s130, 4
        %s132 = scalar_lea.vmem %s0, %s131
        %s133 = smul.u32 128, %s16
      $region20: #{generator_forward.21} parent=15 // pred_fallthru
        _
      // Predicated region
      $region21: #{generator_forward.21} parent=15 // pred_check
        %p134 = pneg %p68
      $region22: #{generator_forward.21} parent=15 // pred_check_branch
        %136 = sbr.rel (%p134) target = $region24
      $region23: #{generator_forward.21} parent=15 // pred_region
        %p137 = scmp.lt.s32.totalorder %s15, 3
        %s138 = scalar_select %p137, %s15, 3
        %s139 = smul.addr %s138, 16
        %s140 = smul.addr %s139, 4
        %s141 = scalar_lea.vmem %s1, %s140
      $region24: #{generator_forward.21} parent=15 // pred_fallthru
        _
    $region16: #{generator_forward.21} parent=5 // pred_fallthru
      _
    %p142 = scmp.le.s32.totalorder 1, %s8
    %p143 = scmp.lt.s32.totalorder %s8, 9
    %p144 = pnand %p142, %p143
    %p145 = pneg %p144
    // Predicated region
    $region25: #{generator_forward.21} parent=5 // pred_check
      _
    $region26: #{generator_forward.21} parent=5 // pred_check_branch
      %147 = sbr.rel (%p144) target = $region28
    $region27: #{generator_forward.21} parent=5 // pred_region
      %s148 = ssub.s32 %s8, 1
      %s149 = smul.u32 128, %s18
      %p150 = scmp.lt.s32.totalorder %s17, 3
      %s151 = scalar_select %p150, %s17, 3
      %p152 = scmp.lt.s32.totalorder %s149, 255
      %s153 = scalar_select %p152, %s149, 255
      %s154 = smul.addr %s151, 256
      %s155 = sadd.s32 %s153, %s154
      %s156 = smul.addr %s155, 4
      %s157 = scalar_lea.vmem %s0, %s156
      %p158 = pneg %p48
      %p159 = pneg %p45
      %p160 = scmp.lt.s32.totalorder %s17, 3
      %s161 = scalar_select %p160, %s17, 3
      %s162 = smul.addr %s161, 16
      %s163 = smul.addr %s162, 4
      %s164 = scalar_lea.vmem %s1, %s163
      %p165 = pneg %p74
      %p166 = pneg %p71
      %p167 = pneg %p102
      %p168 = pneg %p99
      %s169 = smul.u32 128, %s18
      %p170 = scmp.lt.s32.totalorder %s17, 3
      %s171 = scalar_select %p170, %s17, 3
      %p172 = scmp.lt.s32.totalorder %s169, 255
      %s173 = scalar_select %p172, %s169, 255
      %s174 = smul.addr %s171, 256
      %s175 = sadd.s32 %s173, %s174
      %s176 = smul.addr %s175, 8
      %s177 = scalar_lea.vmem %s2, %s176
      %s178 = smul.u32 128, %s18
      %p179 = scmp.lt.s32.totalorder %s17, 3
      %s180 = scalar_select %p179, %s17, 3
      %p181 = scmp.lt.s32.totalorder %s178, 255
      %s182 = scalar_select %p181, %s178, 255
      %s183 = smul.addr %s180, 256
      %s184 = sadd.s32 %s182, %s183
      %s185 = smul.addr %s184, 4
      %s186 = scalar_lea.vmem %s0, %s185
      %s187 = smul.u32 128, %s18
      %p188 = scmp.lt.s32.totalorder %s17, 3
      %s189 = scalar_select %p188, %s17, 3
      %s190 = smul.addr %s189, 16
      %s191 = smul.addr %s190, 4
      %s192 = scalar_lea.vmem %s1, %s191
      %s193 = smul.u32 128, %s18
      %p194 = scmp.lt.s32.totalorder %s17, 3
      %s195 = scalar_select %p194, %s17, 3
      %p196 = scmp.lt.s32.totalorder %s193, 255
      %s197 = scalar_select %p196, %s193, 255
      %s198 = smul.addr %s195, 256
      %s199 = sadd.s32 %s197, %s198
      %s200 = smul.addr %s199, 8
      %s201 = scalar_lea.vmem %s2, %s200
      %s202 = smul.u32 128, %s18
      %v204 = vld [vmem:[%s186] sm:$0xf]
      %v205 = vld [vmem:[%s186 + $0x4] sm:$0xf]
      %v206 = vld [vmem:[%s186 + $0x8] sm:$0xf]
      %v207 = vld [vmem:[%s186 + $0xc] sm:$0xf]
      %v208 = vld [vmem:[%s186 + $0x10] sm:$0xf]
      %v209 = vld [vmem:[%s186 + $0x14] sm:$0xf]
      %v210 = vld [vmem:[%s186 + $0x18] sm:$0xf]
      %v211 = vld [vmem:[%s186 + $0x1c] sm:$0xf]
      %v212 = vld [vmem:[%s186 + $0x20] sm:$0xf]
      %v213 = vld [vmem:[%s186 + $0x24] sm:$0xf]
      %v214 = vld [vmem:[%s186 + $0x28] sm:$0xf]
      %v215 = vld [vmem:[%s186 + $0x2c] sm:$0xf]
      %v216 = vld [vmem:[%s186 + $0x30] sm:$0xf]
      %v217 = vld [vmem:[%s186 + $0x34] sm:$0xf]
      %v218 = vld [vmem:[%s186 + $0x38] sm:$0xf]
      %v219 = vld [vmem:[%s186 + $0x3c] sm:$0xf]
      %v220 = vld [vmem:[%s186 + $0x40] sm:$0xf]
      %v221 = vld [vmem:[%s186 + $0x44] sm:$0xf]
      %v222 = vld [vmem:[%s186 + $0x48] sm:$0xf]
      %v223 = vld [vmem:[%s186 + $0x4c] sm:$0xf]
      %v224 = vld [vmem:[%s186 + $0x50] sm:$0xf]
      %v225 = vld [vmem:[%s186 + $0x54] sm:$0xf]
      %v226 = vld [vmem:[%s186 + $0x58] sm:$0xf]
      %v227 = vld [vmem:[%s186 + $0x5c] sm:$0xf]
      %v228 = vld [vmem:[%s186 + $0x60] sm:$0xf]
      %v229 = vld [vmem:[%s186 + $0x64] sm:$0xf]
      %v230 = vld [vmem:[%s186 + $0x68] sm:$0xf]
      %v231 = vld [vmem:[%s186 + $0x6c] sm:$0xf]
      %v232 = vld [vmem:[%s186 + $0x70] sm:$0xf]
      %v233 = vld [vmem:[%s186 + $0x74] sm:$0xf]
      %v234 = vld [vmem:[%s186 + $0x78] sm:$0xf]
      %v235 = vld [vmem:[%s186 + $0x7c] sm:$0xf]
      %v236 = vld [vmem:[%s186 + $0x80] sm:$0xf]
      %v237 = vld [vmem:[%s186 + $0x84] sm:$0xf]
      %v238 = vld [vmem:[%s186 + $0x88] sm:$0xf]
      %v239 = vld [vmem:[%s186 + $0x8c] sm:$0xf]
      %v240 = vld [vmem:[%s186 + $0x90] sm:$0xf]
      %v241 = vld [vmem:[%s186 + $0x94] sm:$0xf]
      %v242 = vld [vmem:[%s186 + $0x98] sm:$0xf]
      %v243 = vld [vmem:[%s186 + $0x9c] sm:$0xf]
      %v244 = vld [vmem:[%s186 + $0xa0] sm:$0xf]
      %v245 = vld [vmem:[%s186 + $0xa4] sm:$0xf]
      %v246 = vld [vmem:[%s186 + $0xa8] sm:$0xf]
      %v247 = vld [vmem:[%s186 + $0xac] sm:$0xf]
      %v248 = vld [vmem:[%s186 + $0xb0] sm:$0xf]
      %v249 = vld [vmem:[%s186 + $0xb4] sm:$0xf]
      %v250 = vld [vmem:[%s186 + $0xb8] sm:$0xf]
      %v251 = vld [vmem:[%s186 + $0xbc] sm:$0xf]
      %v252 = vld [vmem:[%s186 + $0xc0] sm:$0xf]
      %v253 = vld [vmem:[%s186 + $0xc4] sm:$0xf]
      %v254 = vld [vmem:[%s186 + $0xc8] sm:$0xf]
      %v255 = vld [vmem:[%s186 + $0xcc] sm:$0xf]
      %v256 = vld [vmem:[%s186 + $0xd0] sm:$0xf]
      %v257 = vld [vmem:[%s186 + $0xd4] sm:$0xf]
      %v258 = vld [vmem:[%s186 + $0xd8] sm:$0xf]
      %v259 = vld [vmem:[%s186 + $0xdc] sm:$0xf]
      %v260 = vld [vmem:[%s186 + $0xe0] sm:$0xf]
      %v261 = vld [vmem:[%s186 + $0xe4] sm:$0xf]
      %v262 = vld [vmem:[%s186 + $0xe8] sm:$0xf]
      %v263 = vld [vmem:[%s186 + $0xec] sm:$0xf]
      %v264 = vld [vmem:[%s186 + $0xf0] sm:$0xf]
      %v265 = vld [vmem:[%s186 + $0xf4] sm:$0xf]
      %v266 = vld [vmem:[%s186 + $0xf8] sm:$0xf]
      %v267 = vld [vmem:[%s186 + $0xfc] sm:$0xf]
      %v268 = vld [vmem:[%s186 + $0x100] sm:$0xf]
      %v269 = vld [vmem:[%s186 + $0x104] sm:$0xf]
      %v270 = vld [vmem:[%s186 + $0x108] sm:$0xf]
      %v271 = vld [vmem:[%s186 + $0x10c] sm:$0xf]
      %v272 = vld [vmem:[%s186 + $0x110] sm:$0xf]
      %v273 = vld [vmem:[%s186 + $0x114] sm:$0xf]
      %v274 = vld [vmem:[%s186 + $0x118] sm:$0xf]
      %v275 = vld [vmem:[%s186 + $0x11c] sm:$0xf]
      %v276 = vld [vmem:[%s186 + $0x120] sm:$0xf]
      %v277 = vld [vmem:[%s186 + $0x124] sm:$0xf]
      %v278 = vld [vmem:[%s186 + $0x128] sm:$0xf]
      %v279 = vld [vmem:[%s186 + $0x12c] sm:$0xf]
      %v280 = vld [vmem:[%s186 + $0x130] sm:$0xf]
      %v281 = vld [vmem:[%s186 + $0x134] sm:$0xf]
      %v282 = vld [vmem:[%s186 + $0x138] sm:$0xf]
      %v283 = vld [vmem:[%s186 + $0x13c] sm:$0xf]
      %v284 = vld [vmem:[%s186 + $0x140] sm:$0xf]
      %v285 = vld [vmem:[%s186 + $0x144] sm:$0xf]
      %v286 = vld [vmem:[%s186 + $0x148] sm:$0xf]
      %v287 = vld [vmem:[%s186 + $0x14c] sm:$0xf]
      %v288 = vld [vmem:[%s186 + $0x150] sm:$0xf]
      %v289 = vld [vmem:[%s186 + $0x154] sm:$0xf]
      %v290 = vld [vmem:[%s186 + $0x158] sm:$0xf]
      %v291 = vld [vmem:[%s186 + $0x15c] sm:$0xf]
      %v292 = vld [vmem:[%s186 + $0x160] sm:$0xf]
      %v293 = vld [vmem:[%s186 + $0x164] sm:$0xf]
      %v294 = vld [vmem:[%s186 + $0x168] sm:$0xf]
      %v295 = vld [vmem:[%s186 + $0x16c] sm:$0xf]
      %v296 = vld [vmem:[%s186 + $0x170] sm:$0xf]
      %v297 = vld [vmem:[%s186 + $0x174] sm:$0xf]
      %v298 = vld [vmem:[%s186 + $0x178] sm:$0xf]
      %v299 = vld [vmem:[%s186 + $0x17c] sm:$0xf]
      %v300 = vld [vmem:[%s186 + $0x180] sm:$0xf]
      %v301 = vld [vmem:[%s186 + $0x184] sm:$0xf]
      %v302 = vld [vmem:[%s186 + $0x188] sm:$0xf]
      %v303 = vld [vmem:[%s186 + $0x18c] sm:$0xf]
      %v304 = vld [vmem:[%s186 + $0x190] sm:$0xf]
      %v305 = vld [vmem:[%s186 + $0x194] sm:$0xf]
      %v306 = vld [vmem:[%s186 + $0x198] sm:$0xf]
      %v307 = vld [vmem:[%s186 + $0x19c] sm:$0xf]
      %v308 = vld [vmem:[%s186 + $0x1a0] sm:$0xf]
      %v309 = vld [vmem:[%s186 + $0x1a4] sm:$0xf]
      %v310 = vld [vmem:[%s186 + $0x1a8] sm:$0xf]
      %v311 = vld [vmem:[%s186 + $0x1ac] sm:$0xf]
      %v312 = vld [vmem:[%s186 + $0x1b0] sm:$0xf]
      %v313 = vld [vmem:[%s186 + $0x1b4] sm:$0xf]
      %v314 = vld [vmem:[%s186 + $0x1b8] sm:$0xf]
      %v315 = vld [vmem:[%s186 + $0x1bc] sm:$0xf]
      %v316 = vld [vmem:[%s186 + $0x1c0] sm:$0xf]
      %v317 = vld [vmem:[%s186 + $0x1c4] sm:$0xf]
      %v318 = vld [vmem:[%s186 + $0x1c8] sm:$0xf]
      %v319 = vld [vmem:[%s186 + $0x1cc] sm:$0xf]
      %v320 = vld [vmem:[%s186 + $0x1d0] sm:$0xf]
      %v321 = vld [vmem:[%s186 + $0x1d4] sm:$0xf]
      %v322 = vld [vmem:[%s186 + $0x1d8] sm:$0xf]
      %v323 = vld [vmem:[%s186 + $0x1dc] sm:$0xf]
      %v324 = vld [vmem:[%s186 + $0x1e0] sm:$0xf]
      %v325 = vld [vmem:[%s186 + $0x1e4] sm:$0xf]
      %v326 = vld [vmem:[%s186 + $0x1e8] sm:$0xf]
      %v327 = vld [vmem:[%s186 + $0x1ec] sm:$0xf]
      %v328 = vld [vmem:[%s186 + $0x1f0] sm:$0xf]
      %v329 = vld [vmem:[%s186 + $0x1f4] sm:$0xf]
      %v330 = vld [vmem:[%s186 + $0x1f8] sm:$0xf]
      %v331 = vld [vmem:[%s186 + $0x1fc] sm:$0xf]
      %v332 = vld [vmem:[%s192] sm:$0xf]
      %v333 = vld [vmem:[%s192 + $0x4] sm:$0xf]
      %v334 = vld [vmem:[%s192 + $0x8] sm:$0xf]
      %v335 = vld [vmem:[%s192 + $0xc] sm:$0xf]
      %v336 = vld [vmem:[%s192 + $0x10] sm:$0xf]
      %v337 = vld [vmem:[%s192 + $0x14] sm:$0xf]
      %v338 = vld [vmem:[%s192 + $0x18] sm:$0xf]
      %v339 = vld [vmem:[%s192 + $0x1c] sm:$0xf]
      %v340 = vld [vmem:[%s192 + $0x20] sm:$0xf]
      %v341 = vld [vmem:[%s192 + $0x24] sm:$0xf]
      %v342 = vld [vmem:[%s192 + $0x28] sm:$0xf]
      %v343 = vld [vmem:[%s192 + $0x2c] sm:$0xf]
      %v344 = vld [vmem:[%s192 + $0x30] sm:$0xf]
      %v345 = vld [vmem:[%s192 + $0x34] sm:$0xf]
      %v346 = vld [vmem:[%s192 + $0x38] sm:$0xf]
      %v347 = vld [vmem:[%s192 + $0x3c] sm:$0xf]
      %v476 = vunpack.c.l.b16 %v204
      %v477 = vunpack.c.l.b16 %v205
      %v478 = vunpack.c.l.b16 %v206
      %v479 = vunpack.c.l.b16 %v207
      %v480 = vunpack.c.l.b16 %v208
      %v481 = vunpack.c.l.b16 %v209
      %v482 = vunpack.c.l.b16 %v210
      %v483 = vunpack.c.l.b16 %v211
      %v484 = vunpack.c.l.b16 %v212
      %v485 = vunpack.c.l.b16 %v213
      %v486 = vunpack.c.l.b16 %v214
      %v487 = vunpack.c.l.b16 %v215
      %v488 = vunpack.c.l.b16 %v216
      %v489 = vunpack.c.l.b16 %v217
      %v490 = vunpack.c.l.b16 %v218
      %v491 = vunpack.c.l.b16 %v219
      %v492 = vunpack.c.l.b16 %v220
      %v493 = vunpack.c.l.b16 %v221
      %v494 = vunpack.c.l.b16 %v222
      %v495 = vunpack.c.l.b16 %v223
      %v496 = vunpack.c.l.b16 %v224
      %v497 = vunpack.c.l.b16 %v225
      %v498 = vunpack.c.l.b16 %v226
      %v499 = vunpack.c.l.b16 %v227
      %v500 = vunpack.c.l.b16 %v228
      %v501 = vunpack.c.l.b16 %v229
      %v502 = vunpack.c.l.b16 %v230
      %v503 = vunpack.c.l.b16 %v231
      %v504 = vunpack.c.l.b16 %v232
      %v505 = vunpack.c.l.b16 %v233
      %v506 = vunpack.c.l.b16 %v234
      %v507 = vunpack.c.l.b16 %v235
      %v508 = vunpack.c.l.b16 %v236
      %v509 = vunpack.c.l.b16 %v237
      %v510 = vunpack.c.l.b16 %v238
      %v511 = vunpack.c.l.b16 %v239
      %v512 = vunpack.c.l.b16 %v240
      %v513 = vunpack.c.l.b16 %v241
      %v514 = vunpack.c.l.b16 %v242
      %v515 = vunpack.c.l.b16 %v243
      %v516 = vunpack.c.l.b16 %v244
      %v517 = vunpack.c.l.b16 %v245
      %v518 = vunpack.c.l.b16 %v246
      %v519 = vunpack.c.l.b16 %v247
      %v520 = vunpack.c.l.b16 %v248
      %v521 = vunpack.c.l.b16 %v249
      %v522 = vunpack.c.l.b16 %v250
      %v523 = vunpack.c.l.b16 %v251
      %v524 = vunpack.c.l.b16 %v252
      %v525 = vunpack.c.l.b16 %v253
      %v526 = vunpack.c.l.b16 %v254
      %v527 = vunpack.c.l.b16 %v255
      %v528 = vunpack.c.l.b16 %v256
      %v529 = vunpack.c.l.b16 %v257
      %v530 = vunpack.c.l.b16 %v258
      %v531 = vunpack.c.l.b16 %v259
      %v532 = vunpack.c.l.b16 %v260
      %v533 = vunpack.c.l.b16 %v261
      %v534 = vunpack.c.l.b16 %v262
      %v535 = vunpack.c.l.b16 %v263
      %v536 = vunpack.c.l.b16 %v264
      %v537 = vunpack.c.l.b16 %v265
      %v538 = vunpack.c.l.b16 %v266
      %v539 = vunpack.c.l.b16 %v267
      %v540 = vunpack.c.l.b16 %v268
      %v541 = vunpack.c.l.b16 %v269
      %v542 = vunpack.c.l.b16 %v270
      %v543 = vunpack.c.l.b16 %v271
      %v544 = vunpack.c.l.b16 %v272
      %v545 = vunpack.c.l.b16 %v273
      %v546 = vunpack.c.l.b16 %v274
      %v547 = vunpack.c.l.b16 %v275
      %v548 = vunpack.c.l.b16 %v276
      %v549 = vunpack.c.l.b16 %v277
      %v550 = vunpack.c.l.b16 %v278
      %v551 = vunpack.c.l.b16 %v279
      %v552 = vunpack.c.l.b16 %v280
      %v553 = vunpack.c.l.b16 %v281
      %v554 = vunpack.c.l.b16 %v282
      %v555 = vunpack.c.l.b16 %v283
      %v556 = vunpack.c.l.b16 %v284
      %v557 = vunpack.c.l.b16 %v285
      %v558 = vunpack.c.l.b16 %v286
      %v559 = vunpack.c.l.b16 %v287
      %v560 = vunpack.c.l.b16 %v288
      %v561 = vunpack.c.l.b16 %v289
      %v562 = vunpack.c.l.b16 %v290
      %v563 = vunpack.c.l.b16 %v291
      %v564 = vunpack.c.l.b16 %v292
      %v565 = vunpack.c.l.b16 %v293
      %v566 = vunpack.c.l.b16 %v294
      %v567 = vunpack.c.l.b16 %v295
      %v568 = vunpack.c.l.b16 %v296
      %v569 = vunpack.c.l.b16 %v297
      %v570 = vunpack.c.l.b16 %v298
      %v571 = vunpack.c.l.b16 %v299
      %v572 = vunpack.c.l.b16 %v300
      %v573 = vunpack.c.l.b16 %v301
      %v574 = vunpack.c.l.b16 %v302
      %v575 = vunpack.c.l.b16 %v303
      %v576 = vunpack.c.l.b16 %v304
      %v577 = vunpack.c.l.b16 %v305
      %v578 = vunpack.c.l.b16 %v306
      %v579 = vunpack.c.l.b16 %v307
      %v580 = vunpack.c.l.b16 %v308
      %v581 = vunpack.c.l.b16 %v309
      %v582 = vunpack.c.l.b16 %v310
      %v583 = vunpack.c.l.b16 %v311
      %v584 = vunpack.c.l.b16 %v312
      %v585 = vunpack.c.l.b16 %v313
      %v586 = vunpack.c.l.b16 %v314
      %v587 = vunpack.c.l.b16 %v315
      %v588 = vunpack.c.l.b16 %v316
      %v589 = vunpack.c.l.b16 %v317
      %v590 = vunpack.c.l.b16 %v318
      %v591 = vunpack.c.l.b16 %v319
      %v592 = vunpack.c.l.b16 %v320
      %v593 = vunpack.c.l.b16 %v321
      %v594 = vunpack.c.l.b16 %v322
      %v595 = vunpack.c.l.b16 %v323
      %v596 = vunpack.c.l.b16 %v324
      %v597 = vunpack.c.l.b16 %v325
      %v598 = vunpack.c.l.b16 %v326
      %v599 = vunpack.c.l.b16 %v327
      %v600 = vunpack.c.l.b16 %v328
      %v601 = vunpack.c.l.b16 %v329
      %v602 = vunpack.c.l.b16 %v330
      %v603 = vunpack.c.l.b16 %v331
      %v604 = vpack.c.b16 %v477, %v476
      %v605 = vpack.c.b16 %v479, %v478
      %v606 = vpack.c.b16 %v481, %v480
      %v607 = vpack.c.b16 %v483, %v482
      %v608 = vpack.c.b16 %v485, %v484
      %v609 = vpack.c.b16 %v487, %v486
      %v610 = vpack.c.b16 %v489, %v488
      %v611 = vpack.c.b16 %v491, %v490
      %v612 = vpack.c.b16 %v493, %v492
      %v613 = vpack.c.b16 %v495, %v494
      %v614 = vpack.c.b16 %v497, %v496
      %v615 = vpack.c.b16 %v499, %v498
      %v616 = vpack.c.b16 %v501, %v500
      %v617 = vpack.c.b16 %v503, %v502
      %v618 = vpack.c.b16 %v505, %v504
      %v619 = vpack.c.b16 %v507, %v506
      %v620 = vpack.c.b16 %v509, %v508
      %v621 = vpack.c.b16 %v511, %v510
      %v622 = vpack.c.b16 %v513, %v512
      %v623 = vpack.c.b16 %v515, %v514
      %v624 = vpack.c.b16 %v517, %v516
      %v625 = vpack.c.b16 %v519, %v518
      %v626 = vpack.c.b16 %v521, %v520
      %v627 = vpack.c.b16 %v523, %v522
      %v628 = vpack.c.b16 %v525, %v524
      %v629 = vpack.c.b16 %v527, %v526
      %v630 = vpack.c.b16 %v529, %v528
      %v631 = vpack.c.b16 %v531, %v530
      %v632 = vpack.c.b16 %v533, %v532
      %v633 = vpack.c.b16 %v535, %v534
      %v634 = vpack.c.b16 %v537, %v536
      %v635 = vpack.c.b16 %v539, %v538
      %v636 = vpack.c.b16 %v541, %v540
      %v637 = vpack.c.b16 %v543, %v542
      %v638 = vpack.c.b16 %v545, %v544
      %v639 = vpack.c.b16 %v547, %v546
      %v640 = vpack.c.b16 %v549, %v548
      %v641 = vpack.c.b16 %v551, %v550
      %v642 = vpack.c.b16 %v553, %v552
      %v643 = vpack.c.b16 %v555, %v554
      %v644 = vpack.c.b16 %v557, %v556
      %v645 = vpack.c.b16 %v559, %v558
      %v646 = vpack.c.b16 %v561, %v560
      %v647 = vpack.c.b16 %v563, %v562
      %v648 = vpack.c.b16 %v565, %v564
      %v649 = vpack.c.b16 %v567, %v566
      %v650 = vpack.c.b16 %v569, %v568
      %v651 = vpack.c.b16 %v571, %v570
      %v652 = vpack.c.b16 %v573, %v572
      %v653 = vpack.c.b16 %v575, %v574
      %v654 = vpack.c.b16 %v577, %v576
      %v655 = vpack.c.b16 %v579, %v578
      %v656 = vpack.c.b16 %v581, %v580
      %v657 = vpack.c.b16 %v583, %v582
      %v658 = vpack.c.b16 %v585, %v584
      %v659 = vpack.c.b16 %v587, %v586
      %v660 = vpack.c.b16 %v589, %v588
      %v661 = vpack.c.b16 %v591, %v590
      %v662 = vpack.c.b16 %v593, %v592
      %v663 = vpack.c.b16 %v595, %v594
      %v664 = vpack.c.b16 %v597, %v596
      %v665 = vpack.c.b16 %v599, %v598
      %v666 = vpack.c.b16 %v601, %v600
      %v667 = vpack.c.b16 %v603, %v602
      %v748 = vunpack.c.l.b16 %v332
      %v749 = vunpack.c.l.b16 %v333
      %v750 = vunpack.c.l.b16 %v334
      %v751 = vunpack.c.l.b16 %v335
      %v752 = vunpack.c.l.b16 %v336
      %v753 = vunpack.c.l.b16 %v337
      %v754 = vunpack.c.l.b16 %v338
      %v755 = vunpack.c.l.b16 %v339
      %v756 = vunpack.c.l.b16 %v340
      %v757 = vunpack.c.l.b16 %v341
      %v758 = vunpack.c.l.b16 %v342
      %v759 = vunpack.c.l.b16 %v343
      %v760 = vunpack.c.l.b16 %v344
      %v761 = vunpack.c.l.b16 %v345
      %v762 = vunpack.c.l.b16 %v346
      %v763 = vunpack.c.l.b16 %v347
      %v764 = vpack.c.b16 %v749, %v748
      %v765 = vpack.c.b16 %v751, %v750
      %v766 = vpack.c.b16 %v753, %v752
      %v767 = vpack.c.b16 %v755, %v754
      %v768 = vpack.c.b16 %v757, %v756
      %v769 = vpack.c.b16 %v759, %v758
      %v770 = vpack.c.b16 %v761, %v760
      %v771 = vpack.c.b16 %v763, %v762
      %780 = vmatprep.subr.bf16.mxu0 0
      %781 = vmatpush1.bf16.msra.mxu0 %v771
      %782 = vmatprep.subr.bf16.mxu0 0
      %783 = vmatpush1.bf16.msra.mxu0 %v770
      %784 = vmatprep.subr.bf16.mxu0 0
      %785 = vmatpush1.bf16.msra.mxu0 %v769
      %786 = vmatprep.subr.bf16.mxu0 0
      %787 = vmatpush1.bf16.msra.mxu0 %v768
      %788 = vmatprep.subr.bf16.mxu0 0
      %789 = vmatpush1.bf16.msra.mxu0 %v767
      %790 = vmatprep.subr.bf16.mxu0 0
      %791 = vmatpush1.bf16.msra.mxu0 %v766
      %792 = vmatprep.subr.bf16.mxu0 0
      %793 = vmatpush1.bf16.msra.mxu0 %v765
      %794 = vmatprep.subr.bf16.mxu0 0
      %795 = vmatpush1.bf16.msra.mxu0 %v764
      %796 = vmatprep.subr.bf16.mxu0 0
      %797 = vmatpush2.bf16.msra.mxu0 0
      %798 = vmatprep.subr.bf16.mxu0 0
      %799 = vmatpush2.bf16.msra.mxu0 0
      %800 = vmatprep.subr.bf16.mxu0 0
      %801 = vmatpush2.bf16.msra.mxu0 0
      %802 = vmatprep.subr.bf16.mxu0 0
      %803 = vmatpush2.bf16.msra.mxu0 0
      %804 = vmatprep.subr.bf16.mxu0 0
      %805 = vmatpush2.bf16.msra.mxu0 0
      %806 = vmatprep.subr.bf16.mxu0 0
      %807 = vmatpush2.bf16.msra.mxu0 0
      %808 = vmatprep.subr.bf16.mxu0 0
      %809 = vmatpush2.bf16.msra.mxu0 0
      %810 = vmatprep.subr.bf16.mxu0 0
      %811 = vmatpush2.bf16.msra.mxu0 0
      %812 = vmatprep.mubr.bf16.mxu0 0
      %813 = vmatmul.mubr.bf16.gmra.mxu0 %v604
      %v814 = vpop.f32.mrf.mxu0
      %v815 = vadd.f32 0.0, %v814
      %v816 = vpop.f32.mrf.mxu0
      %v817 = vpop.f32.mrf.mxu0
      %v818 = vadd.f32 0.0, %v817
      %v819 = vpop.f32.mrf.mxu0
      %820 = vmatprep.mubr.bf16.mxu0 0
      %821 = vmatmul.mubr.bf16.gmra.mxu0 %v605
      %v822 = vpop.f32.mrf.mxu0
      %v823 = vadd.f32 0.0, %v822
      %v824 = vpop.f32.mrf.mxu0
      %v825 = vpop.f32.mrf.mxu0
      %v826 = vadd.f32 0.0, %v825
      %v827 = vpop.f32.mrf.mxu0
      %828 = vmatprep.mubr.bf16.mxu0 0
      %829 = vmatmul.mubr.bf16.gmra.mxu0 %v606
      %v830 = vpop.f32.mrf.mxu0
      %v831 = vadd.f32 0.0, %v830
      %v832 = vpop.f32.mrf.mxu0
      %v833 = vpop.f32.mrf.mxu0
      %v834 = vadd.f32 0.0, %v833
      %v835 = vpop.f32.mrf.mxu0
      %836 = vmatprep.mubr.bf16.mxu0 0
      %837 = vmatmul.mubr.bf16.gmra.mxu0 %v607
      %v838 = vpop.f32.mrf.mxu0
      %v839 = vadd.f32 0.0, %v838
      %v840 = vpop.f32.mrf.mxu0
      %v841 = vpop.f32.mrf.mxu0
      %v842 = vadd.f32 0.0, %v841
      %v843 = vpop.f32.mrf.mxu0
      %844 = vmatprep.mubr.bf16.mxu0 0
      %845 = vmatmul.mubr.bf16.gmra.mxu0 %v608
      %v846 = vpop.f32.mrf.mxu0
      %v847 = vadd.f32 0.0, %v846
      %v848 = vpop.f32.mrf.mxu0
      %v849 = vpop.f32.mrf.mxu0
      %v850 = vadd.f32 0.0, %v849
      %v851 = vpop.f32.mrf.mxu0
      %852 = vmatprep.mubr.bf16.mxu0 0
      %853 = vmatmul.mubr.bf16.gmra.mxu0 %v609
      %v854 = vpop.f32.mrf.mxu0
      %v855 = vadd.f32 0.0, %v854
      %v856 = vpop.f32.mrf.mxu0
      %v857 = vpop.f32.mrf.mxu0
      %v858 = vadd.f32 0.0, %v857
      %v859 = vpop.f32.mrf.mxu0
      %860 = vmatprep.mubr.bf16.mxu0 0
      %861 = vmatmul.mubr.bf16.gmra.mxu0 %v610
      %v862 = vpop.f32.mrf.mxu0
      %v863 = vadd.f32 0.0, %v862
      %v864 = vpop.f32.mrf.mxu0
      %v865 = vpop.f32.mrf.mxu0
      %v866 = vadd.f32 0.0, %v865
      %v867 = vpop.f32.mrf.mxu0
      %868 = vmatprep.mubr.bf16.mxu0 0
      %869 = vmatmul.mubr.bf16.gmra.mxu0 %v611
      %v870 = vpop.f32.mrf.mxu0
      %v871 = vadd.f32 0.0, %v870
      %v872 = vpop.f32.mrf.mxu0
      %v873 = vpop.f32.mrf.mxu0
      %v874 = vadd.f32 0.0, %v873
      %v875 = vpop.f32.mrf.mxu0
      %876 = vmatprep.mubr.bf16.mxu0 0
      %877 = vmatmul.mubr.bf16.gmra.mxu0 %v612
      %v878 = vpop.f32.mrf.mxu0
      %v879 = vadd.f32 0.0, %v878
      %v880 = vpop.f32.mrf.mxu0
      %v881 = vpop.f32.mrf.mxu0
      %v882 = vadd.f32 0.0, %v881
      %v883 = vpop.f32.mrf.mxu0
      %884 = vmatprep.mubr.bf16.mxu0 0
      %885 = vmatmul.mubr.bf16.gmra.mxu0 %v613
      %v886 = vpop.f32.mrf.mxu0
      %v887 = vadd.f32 0.0, %v886
      %v888 = vpop.f32.mrf.mxu0
      %v889 = vpop.f32.mrf.mxu0
      %v890 = vadd.f32 0.0, %v889
      %v891 = vpop.f32.mrf.mxu0
      %892 = vmatprep.mubr.bf16.mxu0 0
      %893 = vmatmul.mubr.bf16.gmra.mxu0 %v614
      %v894 = vpop.f32.mrf.mxu0
      %v895 = vadd.f32 0.0, %v894
      %v896 = vpop.f32.mrf.mxu0
      %v897 = vpop.f32.mrf.mxu0
      %v898 = vadd.f32 0.0, %v897
      %v899 = vpop.f32.mrf.mxu0
      %900 = vmatprep.mubr.bf16.mxu0 0
      %901 = vmatmul.mubr.bf16.gmra.mxu0 %v615
      %v902 = vpop.f32.mrf.mxu0
      %v903 = vadd.f32 0.0, %v902
      %v904 = vpop.f32.mrf.mxu0
      %v905 = vpop.f32.mrf.mxu0
      %v906 = vadd.f32 0.0, %v905
      %v907 = vpop.f32.mrf.mxu0
      %908 = vmatprep.mubr.bf16.mxu0 0
      %909 = vmatmul.mubr.bf16.gmra.mxu0 %v616
      %v910 = vpop.f32.mrf.mxu0
      %v911 = vadd.f32 0.0, %v910
      %v912 = vpop.f32.mrf.mxu0
      %v913 = vpop.f32.mrf.mxu0
      %v914 = vadd.f32 0.0, %v913
      %v915 = vpop.f32.mrf.mxu0
      %916 = vmatprep.mubr.bf16.mxu0 0
      %917 = vmatmul.mubr.bf16.gmra.mxu0 %v617
      %v918 = vpop.f32.mrf.mxu0
      %v919 = vadd.f32 0.0, %v918
      %v920 = vpop.f32.mrf.mxu0
      %v921 = vpop.f32.mrf.mxu0
      %v922 = vadd.f32 0.0, %v921
      %v923 = vpop.f32.mrf.mxu0
      %924 = vmatprep.mubr.bf16.mxu0 0
      %925 = vmatmul.mubr.bf16.gmra.mxu0 %v618
      %v926 = vpop.f32.mrf.mxu0
      %v927 = vadd.f32 0.0, %v926
      %v928 = vpop.f32.mrf.mxu0
      %v929 = vpop.f32.mrf.mxu0
      %v930 = vadd.f32 0.0, %v929
      %v931 = vpop.f32.mrf.mxu0
      %932 = vmatprep.mubr.bf16.mxu0 0
      %933 = vmatmul.mubr.bf16.gmra.mxu0 %v619
      %v934 = vpop.f32.mrf.mxu0
      %v935 = vadd.f32 0.0, %v934
      %v936 = vpop.f32.mrf.mxu0
      %v937 = vpop.f32.mrf.mxu0
      %v938 = vadd.f32 0.0, %v937
      %v939 = vpop.f32.mrf.mxu0
      %940 = vmatprep.mubr.bf16.mxu0 0
      %941 = vmatmul.mubr.bf16.gmra.mxu0 %v620
      %v942 = vpop.f32.mrf.mxu0
      %v943 = vadd.f32 0.0, %v942
      %v944 = vpop.f32.mrf.mxu0
      %v945 = vpop.f32.mrf.mxu0
      %v946 = vadd.f32 0.0, %v945
      %v947 = vpop.f32.mrf.mxu0
      %948 = vmatprep.mubr.bf16.mxu0 0
      %949 = vmatmul.mubr.bf16.gmra.mxu0 %v621
      %v950 = vpop.f32.mrf.mxu0
      %v951 = vadd.f32 0.0, %v950
      %v952 = vpop.f32.mrf.mxu0
      %v953 = vpop.f32.mrf.mxu0
      %v954 = vadd.f32 0.0, %v953
      %v955 = vpop.f32.mrf.mxu0
      %956 = vmatprep.mubr.bf16.mxu0 0
      %957 = vmatmul.mubr.bf16.gmra.mxu0 %v622
      %v958 = vpop.f32.mrf.mxu0
      %v959 = vadd.f32 0.0, %v958
      %v960 = vpop.f32.mrf.mxu0
      %v961 = vpop.f32.mrf.mxu0
      %v962 = vadd.f32 0.0, %v961
      %v963 = vpop.f32.mrf.mxu0
      %964 = vmatprep.mubr.bf16.mxu0 0
      %965 = vmatmul.mubr.bf16.gmra.mxu0 %v623
      %v966 = vpop.f32.mrf.mxu0
      %v967 = vadd.f32 0.0, %v966
      %v968 = vpop.f32.mrf.mxu0
      %v969 = vpop.f32.mrf.mxu0
      %v970 = vadd.f32 0.0, %v969
      %v971 = vpop.f32.mrf.mxu0
      %972 = vmatprep.mubr.bf16.mxu0 0
      %973 = vmatmul.mubr.bf16.gmra.mxu0 %v624
      %v974 = vpop.f32.mrf.mxu0
      %v975 = vadd.f32 0.0, %v974
      %v976 = vpop.f32.mrf.mxu0
      %v977 = vpop.f32.mrf.mxu0
      %v978 = vadd.f32 0.0, %v977
      %v979 = vpop.f32.mrf.mxu0
      %980 = vmatprep.mubr.bf16.mxu0 0
      %981 = vmatmul.mubr.bf16.gmra.mxu0 %v625
      %v982 = vpop.f32.mrf.mxu0
      %v983 = vadd.f32 0.0, %v982
      %v984 = vpop.f32.mrf.mxu0
      %v985 = vpop.f32.mrf.mxu0
      %v986 = vadd.f32 0.0, %v985
      %v987 = vpop.f32.mrf.mxu0
      %988 = vmatprep.mubr.bf16.mxu0 0
      %989 = vmatmul.mubr.bf16.gmra.mxu0 %v626
      %v990 = vpop.f32.mrf.mxu0
      %v991 = vadd.f32 0.0, %v990
      %v992 = vpop.f32.mrf.mxu0
      %v993 = vpop.f32.mrf.mxu0
      %v994 = vadd.f32 0.0, %v993
      %v995 = vpop.f32.mrf.mxu0
      %996 = vmatprep.mubr.bf16.mxu0 0
      %997 = vmatmul.mubr.bf16.gmra.mxu0 %v627
      %v998 = vpop.f32.mrf.mxu0
      %v999 = vadd.f32 0.0, %v998
      %v1000 = vpop.f32.mrf.mxu0
      %v1001 = vpop.f32.mrf.mxu0
      %v1002 = vadd.f32 0.0, %v1001
      %v1003 = vpop.f32.mrf.mxu0
      %1004 = vmatprep.mubr.bf16.mxu0 0
      %1005 = vmatmul.mubr.bf16.gmra.mxu0 %v628
      %v1006 = vpop.f32.mrf.mxu0
      %v1007 = vadd.f32 0.0, %v1006
      %v1008 = vpop.f32.mrf.mxu0
      %v1009 = vpop.f32.mrf.mxu0
      %v1010 = vadd.f32 0.0, %v1009
      %v1011 = vpop.f32.mrf.mxu0
      %1012 = vmatprep.mubr.bf16.mxu0 0
      %1013 = vmatmul.mubr.bf16.gmra.mxu0 %v629
      %v1014 = vpop.f32.mrf.mxu0
      %v1015 = vadd.f32 0.0, %v1014
      %v1016 = vpop.f32.mrf.mxu0
      %v1017 = vpop.f32.mrf.mxu0
      %v1018 = vadd.f32 0.0, %v1017
      %v1019 = vpop.f32.mrf.mxu0
      %1020 = vmatprep.mubr.bf16.mxu0 0
      %1021 = vmatmul.mubr.bf16.gmra.mxu0 %v630
      %v1022 = vpop.f32.mrf.mxu0
      %v1023 = vadd.f32 0.0, %v1022
      %v1024 = vpop.f32.mrf.mxu0
      %v1025 = vpop.f32.mrf.mxu0
      %v1026 = vadd.f32 0.0, %v1025
      %v1027 = vpop.f32.mrf.mxu0
      %1028 = vmatprep.mubr.bf16.mxu0 0
      %1029 = vmatmul.mubr.bf16.gmra.mxu0 %v631
      %v1030 = vpop.f32.mrf.mxu0
      %v1031 = vadd.f32 0.0, %v1030
      %v1032 = vpop.f32.mrf.mxu0
      %v1033 = vpop.f32.mrf.mxu0
      %v1034 = vadd.f32 0.0, %v1033
      %v1035 = vpop.f32.mrf.mxu0
      %1036 = vmatprep.mubr.bf16.mxu0 0
      %1037 = vmatmul.mubr.bf16.gmra.mxu0 %v632
      %v1038 = vpop.f32.mrf.mxu0
      %v1039 = vadd.f32 0.0, %v1038
      %v1040 = vpop.f32.mrf.mxu0
      %v1041 = vpop.f32.mrf.mxu0
      %v1042 = vadd.f32 0.0, %v1041
      %v1043 = vpop.f32.mrf.mxu0
      %1044 = vmatprep.mubr.bf16.mxu0 0
      %1045 = vmatmul.mubr.bf16.gmra.mxu0 %v633
      %v1046 = vpop.f32.mrf.mxu0
      %v1047 = vadd.f32 0.0, %v1046
      %v1048 = vpop.f32.mrf.mxu0
      %v1049 = vpop.f32.mrf.mxu0
      %v1050 = vadd.f32 0.0, %v1049
      %v1051 = vpop.f32.mrf.mxu0
      %1052 = vmatprep.mubr.bf16.mxu0 0
      %1053 = vmatmul.mubr.bf16.gmra.mxu0 %v634
      %v1054 = vpop.f32.mrf.mxu0
      %v1055 = vadd.f32 0.0, %v1054
      %v1056 = vpop.f32.mrf.mxu0
      %v1057 = vpop.f32.mrf.mxu0
      %v1058 = vadd.f32 0.0, %v1057
      %v1059 = vpop.f32.mrf.mxu0
      %1060 = vmatprep.mubr.bf16.mxu0 0
      %1061 = vmatmul.mubr.bf16.gmra.mxu0 %v635
      %v1062 = vpop.f32.mrf.mxu0
      %v1063 = vadd.f32 0.0, %v1062
      %v1064 = vpop.f32.mrf.mxu0
      %v1065 = vpop.f32.mrf.mxu0
      %v1066 = vadd.f32 0.0, %v1065
      %v1067 = vpop.f32.mrf.mxu0
      %1068 = vmatprep.mubr.bf16.mxu0 0
      %1069 = vmatmul.mubr.bf16.gmra.mxu0 %v636
      %v1070 = vpop.f32.mrf.mxu0
      %v1071 = vadd.f32 0.0, %v1070
      %v1072 = vpop.f32.mrf.mxu0
      %v1073 = vpop.f32.mrf.mxu0
      %v1074 = vadd.f32 0.0, %v1073
      %v1075 = vpop.f32.mrf.mxu0
      %1076 = vmatprep.mubr.bf16.mxu0 0
      %1077 = vmatmul.mubr.bf16.gmra.mxu0 %v637
      %v1078 = vpop.f32.mrf.mxu0
      %v1079 = vadd.f32 0.0, %v1078
      %v1080 = vpop.f32.mrf.mxu0
      %v1081 = vpop.f32.mrf.mxu0
      %v1082 = vadd.f32 0.0, %v1081
      %v1083 = vpop.f32.mrf.mxu0
      %1084 = vmatprep.mubr.bf16.mxu0 0
      %1085 = vmatmul.mubr.bf16.gmra.mxu0 %v638
      %v1086 = vpop.f32.mrf.mxu0
      %v1087 = vadd.f32 0.0, %v1086
      %v1088 = vpop.f32.mrf.mxu0
      %v1089 = vpop.f32.mrf.mxu0
      %v1090 = vadd.f32 0.0, %v1089
      %v1091 = vpop.f32.mrf.mxu0
      %1092 = vmatprep.mubr.bf16.mxu0 0
      %1093 = vmatmul.mubr.bf16.gmra.mxu0 %v639
      %v1094 = vpop.f32.mrf.mxu0
      %v1095 = vadd.f32 0.0, %v1094
      %v1096 = vpop.f32.mrf.mxu0
      %v1097 = vpop.f32.mrf.mxu0
      %v1098 = vadd.f32 0.0, %v1097
      %v1099 = vpop.f32.mrf.mxu0
      %1100 = vmatprep.mubr.bf16.mxu0 0
      %1101 = vmatmul.mubr.bf16.gmra.mxu0 %v640
      %v1102 = vpop.f32.mrf.mxu0
      %v1103 = vadd.f32 0.0, %v1102
      %v1104 = vpop.f32.mrf.mxu0
      %v1105 = vpop.f32.mrf.mxu0
      %v1106 = vadd.f32 0.0, %v1105
      %v1107 = vpop.f32.mrf.mxu0
      %1108 = vmatprep.mubr.bf16.mxu0 0
      %1109 = vmatmul.mubr.bf16.gmra.mxu0 %v641
      %v1110 = vpop.f32.mrf.mxu0
      %v1111 = vadd.f32 0.0, %v1110
      %v1112 = vpop.f32.mrf.mxu0
      %v1113 = vpop.f32.mrf.mxu0
      %v1114 = vadd.f32 0.0, %v1113
      %v1115 = vpop.f32.mrf.mxu0
      %1116 = vmatprep.mubr.bf16.mxu0 0
      %1117 = vmatmul.mubr.bf16.gmra.mxu0 %v642
      %v1118 = vpop.f32.mrf.mxu0
      %v1119 = vadd.f32 0.0, %v1118
      %v1120 = vpop.f32.mrf.mxu0
      %v1121 = vpop.f32.mrf.mxu0
      %v1122 = vadd.f32 0.0, %v1121
      %v1123 = vpop.f32.mrf.mxu0
      %1124 = vmatprep.mubr.bf16.mxu0 0
      %1125 = vmatmul.mubr.bf16.gmra.mxu0 %v643
      %v1126 = vpop.f32.mrf.mxu0
      %v1127 = vadd.f32 0.0, %v1126
      %v1128 = vpop.f32.mrf.mxu0
      %v1129 = vpop.f32.mrf.mxu0
      %v1130 = vadd.f32 0.0, %v1129
      %v1131 = vpop.f32.mrf.mxu0
      %1132 = vmatprep.mubr.bf16.mxu0 0
      %1133 = vmatmul.mubr.bf16.gmra.mxu0 %v644
      %v1134 = vpop.f32.mrf.mxu0
      %v1135 = vadd.f32 0.0, %v1134
      %v1136 = vpop.f32.mrf.mxu0
      %v1137 = vpop.f32.mrf.mxu0
      %v1138 = vadd.f32 0.0, %v1137
      %v1139 = vpop.f32.mrf.mxu0
      %1140 = vmatprep.mubr.bf16.mxu0 0
      %1141 = vmatmul.mubr.bf16.gmra.mxu0 %v645
      %v1142 = vpop.f32.mrf.mxu0
      %v1143 = vadd.f32 0.0, %v1142
      %v1144 = vpop.f32.mrf.mxu0
      %v1145 = vpop.f32.mrf.mxu0
      %v1146 = vadd.f32 0.0, %v1145
      %v1147 = vpop.f32.mrf.mxu0
      %1148 = vmatprep.mubr.bf16.mxu0 0
      %1149 = vmatmul.mubr.bf16.gmra.mxu0 %v646
      %v1150 = vpop.f32.mrf.mxu0
      %v1151 = vadd.f32 0.0, %v1150
      %v1152 = vpop.f32.mrf.mxu0
      %v1153 = vpop.f32.mrf.mxu0
      %v1154 = vadd.f32 0.0, %v1153
      %v1155 = vpop.f32.mrf.mxu0
      %1156 = vmatprep.mubr.bf16.mxu0 0
      %1157 = vmatmul.mubr.bf16.gmra.mxu0 %v647
      %v1158 = vpop.f32.mrf.mxu0
      %v1159 = vadd.f32 0.0, %v1158
      %v1160 = vpop.f32.mrf.mxu0
      %v1161 = vpop.f32.mrf.mxu0
      %v1162 = vadd.f32 0.0, %v1161
      %v1163 = vpop.f32.mrf.mxu0
      %1164 = vmatprep.mubr.bf16.mxu0 0
      %1165 = vmatmul.mubr.bf16.gmra.mxu0 %v648
      %v1166 = vpop.f32.mrf.mxu0
      %v1167 = vadd.f32 0.0, %v1166
      %v1168 = vpop.f32.mrf.mxu0
      %v1169 = vpop.f32.mrf.mxu0
      %v1170 = vadd.f32 0.0, %v1169
      %v1171 = vpop.f32.mrf.mxu0
      %1172 = vmatprep.mubr.bf16.mxu0 0
      %1173 = vmatmul.mubr.bf16.gmra.mxu0 %v649
      %v1174 = vpop.f32.mrf.mxu0
      %v1175 = vadd.f32 0.0, %v1174
      %v1176 = vpop.f32.mrf.mxu0
      %v1177 = vpop.f32.mrf.mxu0
      %v1178 = vadd.f32 0.0, %v1177
      %v1179 = vpop.f32.mrf.mxu0
      %1180 = vmatprep.mubr.bf16.mxu0 0
      %1181 = vmatmul.mubr.bf16.gmra.mxu0 %v650
      %v1182 = vpop.f32.mrf.mxu0
      %v1183 = vadd.f32 0.0, %v1182
      %v1184 = vpop.f32.mrf.mxu0
      %v1185 = vpop.f32.mrf.mxu0
      %v1186 = vadd.f32 0.0, %v1185
      %v1187 = vpop.f32.mrf.mxu0
      %1188 = vmatprep.mubr.bf16.mxu0 0
      %1189 = vmatmul.mubr.bf16.gmra.mxu0 %v651
      %v1190 = vpop.f32.mrf.mxu0
      %v1191 = vadd.f32 0.0, %v1190
      %v1192 = vpop.f32.mrf.mxu0
      %v1193 = vpop.f32.mrf.mxu0
      %v1194 = vadd.f32 0.0, %v1193
      %v1195 = vpop.f32.mrf.mxu0
      %1196 = vmatprep.mubr.bf16.mxu0 0
      %1197 = vmatmul.mubr.bf16.gmra.mxu0 %v652
      %v1198 = vpop.f32.mrf.mxu0
      %v1199 = vadd.f32 0.0, %v1198
      %v1200 = vpop.f32.mrf.mxu0
      %v1201 = vpop.f32.mrf.mxu0
      %v1202 = vadd.f32 0.0, %v1201
      %v1203 = vpop.f32.mrf.mxu0
      %1204 = vmatprep.mubr.bf16.mxu0 0
      %1205 = vmatmul.mubr.bf16.gmra.mxu0 %v653
      %v1206 = vpop.f32.mrf.mxu0
      %v1207 = vadd.f32 0.0, %v1206
      %v1208 = vpop.f32.mrf.mxu0
      %v1209 = vpop.f32.mrf.mxu0
      %v1210 = vadd.f32 0.0, %v1209
      %v1211 = vpop.f32.mrf.mxu0
      %1212 = vmatprep.mubr.bf16.mxu0 0
      %1213 = vmatmul.mubr.bf16.gmra.mxu0 %v654
      %v1214 = vpop.f32.mrf.mxu0
      %v1215 = vadd.f32 0.0, %v1214
      %v1216 = vpop.f32.mrf.mxu0
      %v1217 = vpop.f32.mrf.mxu0
      %v1218 = vadd.f32 0.0, %v1217
      %v1219 = vpop.f32.mrf.mxu0
      %1220 = vmatprep.mubr.bf16.mxu0 0
      %1221 = vmatmul.mubr.bf16.gmra.mxu0 %v655
      %v1222 = vpop.f32.mrf.mxu0
      %v1223 = vadd.f32 0.0, %v1222
      %v1224 = vpop.f32.mrf.mxu0
      %v1225 = vpop.f32.mrf.mxu0
      %v1226 = vadd.f32 0.0, %v1225
      %v1227 = vpop.f32.mrf.mxu0
      %1228 = vmatprep.mubr.bf16.mxu0 0
      %1229 = vmatmul.mubr.bf16.gmra.mxu0 %v656
      %v1230 = vpop.f32.mrf.mxu0
      %v1231 = vadd.f32 0.0, %v1230
      %v1232 = vpop.f32.mrf.mxu0
      %v1233 = vpop.f32.mrf.mxu0
      %v1234 = vadd.f32 0.0, %v1233
      %v1235 = vpop.f32.mrf.mxu0
      %1236 = vmatprep.mubr.bf16.mxu0 0
      %1237 = vmatmul.mubr.bf16.gmra.mxu0 %v657
      %v1238 = vpop.f32.mrf.mxu0
      %v1239 = vadd.f32 0.0, %v1238
      %v1240 = vpop.f32.mrf.mxu0
      %v1241 = vpop.f32.mrf.mxu0
      %v1242 = vadd.f32 0.0, %v1241
      %v1243 = vpop.f32.mrf.mxu0
      %1244 = vmatprep.mubr.bf16.mxu0 0
      %1245 = vmatmul.mubr.bf16.gmra.mxu0 %v658
      %v1246 = vpop.f32.mrf.mxu0
      %v1247 = vadd.f32 0.0, %v1246
      %v1248 = vpop.f32.mrf.mxu0
      %v1249 = vpop.f32.mrf.mxu0
      %v1250 = vadd.f32 0.0, %v1249
      %v1251 = vpop.f32.mrf.mxu0
      %1252 = vmatprep.mubr.bf16.mxu0 0
      %1253 = vmatmul.mubr.bf16.gmra.mxu0 %v659
      %v1254 = vpop.f32.mrf.mxu0
      %v1255 = vadd.f32 0.0, %v1254
      %v1256 = vpop.f32.mrf.mxu0
      %v1257 = vpop.f32.mrf.mxu0
      %v1258 = vadd.f32 0.0, %v1257
      %v1259 = vpop.f32.mrf.mxu0
      %1260 = vmatprep.mubr.bf16.mxu0 0
      %1261 = vmatmul.mubr.bf16.gmra.mxu0 %v660
      %v1262 = vpop.f32.mrf.mxu0
      %v1263 = vadd.f32 0.0, %v1262
      %v1264 = vpop.f32.mrf.mxu0
      %v1265 = vpop.f32.mrf.mxu0
      %v1266 = vadd.f32 0.0, %v1265
      %v1267 = vpop.f32.mrf.mxu0
      %1268 = vmatprep.mubr.bf16.mxu0 0
      %1269 = vmatmul.mubr.bf16.gmra.mxu0 %v661
      %v1270 = vpop.f32.mrf.mxu0
      %v1271 = vadd.f32 0.0, %v1270
      %v1272 = vpop.f32.mrf.mxu0
      %v1273 = vpop.f32.mrf.mxu0
      %v1274 = vadd.f32 0.0, %v1273
      %v1275 = vpop.f32.mrf.mxu0
      %1276 = vmatprep.mubr.bf16.mxu0 0
      %1277 = vmatmul.mubr.bf16.gmra.mxu0 %v662
      %v1278 = vpop.f32.mrf.mxu0
      %v1279 = vadd.f32 0.0, %v1278
      %v1280 = vpop.f32.mrf.mxu0
      %v1281 = vpop.f32.mrf.mxu0
      %v1282 = vadd.f32 0.0, %v1281
      %v1283 = vpop.f32.mrf.mxu0
      %1284 = vmatprep.mubr.bf16.mxu0 0
      %1285 = vmatmul.mubr.bf16.gmra.mxu0 %v663
      %v1286 = vpop.f32.mrf.mxu0
      %v1287 = vadd.f32 0.0, %v1286
      %v1288 = vpop.f32.mrf.mxu0
      %v1289 = vpop.f32.mrf.mxu0
      %v1290 = vadd.f32 0.0, %v1289
      %v1291 = vpop.f32.mrf.mxu0
      %1292 = vmatprep.mubr.bf16.mxu0 0
      %1293 = vmatmul.mubr.bf16.gmra.mxu0 %v664
      %v1294 = vpop.f32.mrf.mxu0
      %v1295 = vadd.f32 0.0, %v1294
      %v1296 = vpop.f32.mrf.mxu0
      %v1297 = vpop.f32.mrf.mxu0
      %v1298 = vadd.f32 0.0, %v1297
      %v1299 = vpop.f32.mrf.mxu0
      %1300 = vmatprep.mubr.bf16.mxu0 0
      %1301 = vmatmul.mubr.bf16.gmra.mxu0 %v665
      %v1302 = vpop.f32.mrf.mxu0
      %v1303 = vadd.f32 0.0, %v1302
      %v1304 = vpop.f32.mrf.mxu0
      %v1305 = vpop.f32.mrf.mxu0
      %v1306 = vadd.f32 0.0, %v1305
      %v1307 = vpop.f32.mrf.mxu0
      %1308 = vmatprep.mubr.bf16.mxu0 0
      %1309 = vmatmul.mubr.bf16.gmra.mxu0 %v666
      %v1310 = vpop.f32.mrf.mxu0
      %v1311 = vadd.f32 0.0, %v1310
      %v1312 = vpop.f32.mrf.mxu0
      %v1313 = vpop.f32.mrf.mxu0
      %v1314 = vadd.f32 0.0, %v1313
      %v1315 = vpop.f32.mrf.mxu0
      %1316 = vmatprep.mubr.bf16.mxu0 0
      %1317 = vmatmul.mubr.bf16.gmra.mxu0 %v667
      %v1318 = vpop.f32.mrf.mxu0
      %v1319 = vadd.f32 0.0, %v1318
      %v1320 = vpop.f32.mrf.mxu0
      %v1321 = vpop.f32.mrf.mxu0
      %v1322 = vadd.f32 0.0, %v1321
      %v1323 = vpop.f32.mrf.mxu0
      %1324 = vdwg.mxu0
      %v1325 = vtanh.pop %v815
      %v1326 = vtanh.pop %v818
      %v1327 = vtanh.pop %v823
      %v1328 = vtanh.pop %v826
      %v1329 = vtanh.pop %v831
      %v1330 = vtanh.pop %v834
      %v1331 = vtanh.pop %v839
      %v1332 = vtanh.pop %v842
      %v1333 = vtanh.pop %v847
      %v1334 = vtanh.pop %v850
      %v1335 = vtanh.pop %v855
      %v1336 = vtanh.pop %v858
      %v1337 = vtanh.pop %v863
      %v1338 = vtanh.pop %v866
      %v1339 = vtanh.pop %v871
      %v1340 = vtanh.pop %v874
      %v1341 = vtanh.pop %v879
      %v1342 = vtanh.pop %v882
      %v1343 = vtanh.pop %v887
      %v1344 = vtanh.pop %v890
      %v1345 = vtanh.pop %v895
      %v1346 = vtanh.pop %v898
      %v1347 = vtanh.pop %v903
      %v1348 = vtanh.pop %v906
      %v1349 = vtanh.pop %v911
      %v1350 = vtanh.pop %v914
      %v1351 = vtanh.pop %v919
      %v1352 = vtanh.pop %v922
      %v1353 = vtanh.pop %v927
      %v1354 = vtanh.pop %v930
      %v1355 = vtanh.pop %v935
      %v1356 = vtanh.pop %v938
      %v1357 = vtanh.pop %v943
      %v1358 = vtanh.pop %v946
      %v1359 = vtanh.pop %v951
      %v1360 = vtanh.pop %v954
      %v1361 = vtanh.pop %v959
      %v1362 = vtanh.pop %v962
      %v1363 = vtanh.pop %v967
      %v1364 = vtanh.pop %v970
      %v1365 = vtanh.pop %v975
      %v1366 = vtanh.pop %v978
      %v1367 = vtanh.pop %v983
      %v1368 = vtanh.pop %v986
      %v1369 = vtanh.pop %v991
      %v1370 = vtanh.pop %v994
      %v1371 = vtanh.pop %v999
      %v1372 = vtanh.pop %v1002
      %v1373 = vtanh.pop %v1007
      %v1374 = vtanh.pop %v1010
      %v1375 = vtanh.pop %v1015
      %v1376 = vtanh.pop %v1018
      %v1377 = vtanh.pop %v1023
      %v1378 = vtanh.pop %v1026
      %v1379 = vtanh.pop %v1031
      %v1380 = vtanh.pop %v1034
      %v1381 = vtanh.pop %v1039
      %v1382 = vtanh.pop %v1042
      %v1383 = vtanh.pop %v1047
      %v1384 = vtanh.pop %v1050
      %v1385 = vtanh.pop %v1055
      %v1386 = vtanh.pop %v1058
      %v1387 = vtanh.pop %v1063
      %v1388 = vtanh.pop %v1066
      %v1389 = vtanh.pop %v1071
      %v1390 = vtanh.pop %v1074
      %v1391 = vtanh.pop %v1079
      %v1392 = vtanh.pop %v1082
      %v1393 = vtanh.pop %v1087
      %v1394 = vtanh.pop %v1090
      %v1395 = vtanh.pop %v1095
      %v1396 = vtanh.pop %v1098
      %v1397 = vtanh.pop %v1103
      %v1398 = vtanh.pop %v1106
      %v1399 = vtanh.pop %v1111
      %v1400 = vtanh.pop %v1114
      %v1401 = vtanh.pop %v1119
      %v1402 = vtanh.pop %v1122
      %v1403 = vtanh.pop %v1127
      %v1404 = vtanh.pop %v1130
      %v1405 = vtanh.pop %v1135
      %v1406 = vtanh.pop %v1138
      %v1407 = vtanh.pop %v1143
      %v1408 = vtanh.pop %v1146
      %v1409 = vtanh.pop %v1151
      %v1410 = vtanh.pop %v1154
      %v1411 = vtanh.pop %v1159
      %v1412 = vtanh.pop %v1162
      %v1413 = vtanh.pop %v1167
      %v1414 = vtanh.pop %v1170
      %v1415 = vtanh.pop %v1175
      %v1416 = vtanh.pop %v1178
      %v1417 = vtanh.pop %v1183
      %v1418 = vtanh.pop %v1186
      %v1419 = vtanh.pop %v1191
      %v1420 = vtanh.pop %v1194
      %v1421 = vtanh.pop %v1199
      %v1422 = vtanh.pop %v1202
      %v1423 = vtanh.pop %v1207
      %v1424 = vtanh.pop %v1210
      %v1425 = vtanh.pop %v1215
      %v1426 = vtanh.pop %v1218
      %v1427 = vtanh.pop %v1223
      %v1428 = vtanh.pop %v1226
      %v1429 = vtanh.pop %v1231
      %v1430 = vtanh.pop %v1234
      %v1431 = vtanh.pop %v1239
      %v1432 = vtanh.pop %v1242
      %v1433 = vtanh.pop %v1247
      %v1434 = vtanh.pop %v1250
      %v1435 = vtanh.pop %v1255
      %v1436 = vtanh.pop %v1258
      %v1437 = vtanh.pop %v1263
      %v1438 = vtanh.pop %v1266
      %v1439 = vtanh.pop %v1271
      %v1440 = vtanh.pop %v1274
      %v1441 = vtanh.pop %v1279
      %v1442 = vtanh.pop %v1282
      %v1443 = vtanh.pop %v1287
      %v1444 = vtanh.pop %v1290
      %v1445 = vtanh.pop %v1295
      %v1446 = vtanh.pop %v1298
      %v1447 = vtanh.pop %v1303
      %v1448 = vtanh.pop %v1306
      %v1449 = vtanh.pop %v1311
      %v1450 = vtanh.pop %v1314
      %v1451 = vtanh.pop %v1319
      %v1452 = vtanh.pop %v1322
      %1453 = vst [vmem:[%s201] sm:$0xff] %v1325
      %1454 = vst [vmem:[%s201 + $0x8] sm:$0xff] %v1326
      %1455 = vst [vmem:[%s201 + $0x10] sm:$0xff] %v1327
      %1456 = vst [vmem:[%s201 + $0x18] sm:$0xff] %v1328
      %1457 = vst [vmem:[%s201 + $0x20] sm:$0xff] %v1329
      %1458 = vst [vmem:[%s201 + $0x28] sm:$0xff] %v1330
      %1459 = vst [vmem:[%s201 + $0x30] sm:$0xff] %v1331
      %1460 = vst [vmem:[%s201 + $0x38] sm:$0xff] %v1332
      %1461 = vst [vmem:[%s201 + $0x40] sm:$0xff] %v1333
      %1462 = vst [vmem:[%s201 + $0x48] sm:$0xff] %v1334
      %1463 = vst [vmem:[%s201 + $0x50] sm:$0xff] %v1335
      %1464 = vst [vmem:[%s201 + $0x58] sm:$0xff] %v1336
      %1465 = vst [vmem:[%s201 + $0x60] sm:$0xff] %v1337
      %1466 = vst [vmem:[%s201 + $0x68] sm:$0xff] %v1338
      %1467 = vst [vmem:[%s201 + $0x70] sm:$0xff] %v1339
      %1468 = vst [vmem:[%s201 + $0x78] sm:$0xff] %v1340
      %1469 = vst [vmem:[%s201 + $0x80] sm:$0xff] %v1341
      %1470 = vst [vmem:[%s201 + $0x88] sm:$0xff] %v1342
      %1471 = vst [vmem:[%s201 + $0x90] sm:$0xff] %v1343
      %1472 = vst [vmem:[%s201 + $0x98] sm:$0xff] %v1344
      %1473 = vst [vmem:[%s201 + $0xa0] sm:$0xff] %v1345
      %1474 = vst [vmem:[%s201 + $0xa8] sm:$0xff] %v1346
      %1475 = vst [vmem:[%s201 + $0xb0] sm:$0xff] %v1347
      %1476 = vst [vmem:[%s201 + $0xb8] sm:$0xff] %v1348
      %1477 = vst [vmem:[%s201 + $0xc0] sm:$0xff] %v1349
      %1478 = vst [vmem:[%s201 + $0xc8] sm:$0xff] %v1350
      %1479 = vst [vmem:[%s201 + $0xd0] sm:$0xff] %v1351
      %1480 = vst [vmem:[%s201 + $0xd8] sm:$0xff] %v1352
      %1481 = vst [vmem:[%s201 + $0xe0] sm:$0xff] %v1353
      %1482 = vst [vmem:[%s201 + $0xe8] sm:$0xff] %v1354
      %1483 = vst [vmem:[%s201 + $0xf0] sm:$0xff] %v1355
      %1484 = vst [vmem:[%s201 + $0xf8] sm:$0xff] %v1356
      %1485 = vst [vmem:[%s201 + $0x100] sm:$0xff] %v1357
      %1486 = vst [vmem:[%s201 + $0x108] sm:$0xff] %v1358
      %1487 = vst [vmem:[%s201 + $0x110] sm:$0xff] %v1359
      %1488 = vst [vmem:[%s201 + $0x118] sm:$0xff] %v1360
      %1489 = vst [vmem:[%s201 + $0x120] sm:$0xff] %v1361
      %1490 = vst [vmem:[%s201 + $0x128] sm:$0xff] %v1362
      %1491 = vst [vmem:[%s201 + $0x130] sm:$0xff] %v1363
      %1492 = vst [vmem:[%s201 + $0x138] sm:$0xff] %v1364
      %1493 = vst [vmem:[%s201 + $0x140] sm:$0xff] %v1365
      %1494 = vst [vmem:[%s201 + $0x148] sm:$0xff] %v1366
      %1495 = vst [vmem:[%s201 + $0x150] sm:$0xff] %v1367
      %1496 = vst [vmem:[%s201 + $0x158] sm:$0xff] %v1368
      %1497 = vst [vmem:[%s201 + $0x160] sm:$0xff] %v1369
      %1498 = vst [vmem:[%s201 + $0x168] sm:$0xff] %v1370
      %1499 = vst [vmem:[%s201 + $0x170] sm:$0xff] %v1371
      %1500 = vst [vmem:[%s201 + $0x178] sm:$0xff] %v1372
      %1501 = vst [vmem:[%s201 + $0x180] sm:$0xff] %v1373
      %1502 = vst [vmem:[%s201 + $0x188] sm:$0xff] %v1374
      %1503 = vst [vmem:[%s201 + $0x190] sm:$0xff] %v1375
      %1504 = vst [vmem:[%s201 + $0x198] sm:$0xff] %v1376
      %1505 = vst [vmem:[%s201 + $0x1a0] sm:$0xff] %v1377
      %1506 = vst [vmem:[%s201 + $0x1a8] sm:$0xff] %v1378
      %1507 = vst [vmem:[%s201 + $0x1b0] sm:$0xff] %v1379
      %1508 = vst [vmem:[%s201 + $0x1b8] sm:$0xff] %v1380
      %1509 = vst [vmem:[%s201 + $0x1c0] sm:$0xff] %v1381
      %1510 = vst [vmem:[%s201 + $0x1c8] sm:$0xff] %v1382
      %1511 = vst [vmem:[%s201 + $0x1d0] sm:$0xff] %v1383
      %1512 = vst [vmem:[%s201 + $0x1d8] sm:$0xff] %v1384
      %1513 = vst [vmem:[%s201 + $0x1e0] sm:$0xff] %v1385
      %1514 = vst [vmem:[%s201 + $0x1e8] sm:$0xff] %v1386
      %1515 = vst [vmem:[%s201 + $0x1f0] sm:$0xff] %v1387
      %1516 = vst [vmem:[%s201 + $0x1f8] sm:$0xff] %v1388
      %1517 = vst [vmem:[%s201 + $0x200] sm:$0xff] %v1389
      %1518 = vst [vmem:[%s201 + $0x208] sm:$0xff] %v1390
      %1519 = vst [vmem:[%s201 + $0x210] sm:$0xff] %v1391
      %1520 = vst [vmem:[%s201 + $0x218] sm:$0xff] %v1392
      %1521 = vst [vmem:[%s201 + $0x220] sm:$0xff] %v1393
      %1522 = vst [vmem:[%s201 + $0x228] sm:$0xff] %v1394
      %1523 = vst [vmem:[%s201 + $0x230] sm:$0xff] %v1395
      %1524 = vst [vmem:[%s201 + $0x238] sm:$0xff] %v1396
      %1525 = vst [vmem:[%s201 + $0x240] sm:$0xff] %v1397
      %1526 = vst [vmem:[%s201 + $0x248] sm:$0xff] %v1398
      %1527 = vst [vmem:[%s201 + $0x250] sm:$0xff] %v1399
      %1528 = vst [vmem:[%s201 + $0x258] sm:$0xff] %v1400
      %1529 = vst [vmem:[%s201 + $0x260] sm:$0xff] %v1401
      %1530 = vst [vmem:[%s201 + $0x268] sm:$0xff] %v1402
      %1531 = vst [vmem:[%s201 + $0x270] sm:$0xff] %v1403
      %1532 = vst [vmem:[%s201 + $0x278] sm:$0xff] %v1404
      %1533 = vst [vmem:[%s201 + $0x280] sm:$0xff] %v1405
      %1534 = vst [vmem:[%s201 + $0x288] sm:$0xff] %v1406
      %1535 = vst [vmem:[%s201 + $0x290] sm:$0xff] %v1407
      %1536 = vst [vmem:[%s201 + $0x298] sm:$0xff] %v1408
      %1537 = vst [vmem:[%s201 + $0x2a0] sm:$0xff] %v1409
      %1538 = vst [vmem:[%s201 + $0x2a8] sm:$0xff] %v1410
      %1539 = vst [vmem:[%s201 + $0x2b0] sm:$0xff] %v1411
      %1540 = vst [vmem:[%s201 + $0x2b8] sm:$0xff] %v1412
      %1541 = vst [vmem:[%s201 + $0x2c0] sm:$0xff] %v1413
      %1542 = vst [vmem:[%s201 + $0x2c8] sm:$0xff] %v1414
      %1543 = vst [vmem:[%s201 + $0x2d0] sm:$0xff] %v1415
      %1544 = vst [vmem:[%s201 + $0x2d8] sm:$0xff] %v1416
      %1545 = vst [vmem:[%s201 + $0x2e0] sm:$0xff] %v1417
      %1546 = vst [vmem:[%s201 + $0x2e8] sm:$0xff] %v1418
      %1547 = vst [vmem:[%s201 + $0x2f0] sm:$0xff] %v1419
      %1548 = vst [vmem:[%s201 + $0x2f8] sm:$0xff] %v1420
      %1549 = vst [vmem:[%s201 + $0x300] sm:$0xff] %v1421
      %1550 = vst [vmem:[%s201 + $0x308] sm:$0xff] %v1422
      %1551 = vst [vmem:[%s201 + $0x310] sm:$0xff] %v1423
      %1552 = vst [vmem:[%s201 + $0x318] sm:$0xff] %v1424
      %1553 = vst [vmem:[%s201 + $0x320] sm:$0xff] %v1425
      %1554 = vst [vmem:[%s201 + $0x328] sm:$0xff] %v1426
      %1555 = vst [vmem:[%s201 + $0x330] sm:$0xff] %v1427
      %1556 = vst [vmem:[%s201 + $0x338] sm:$0xff] %v1428
      %1557 = vst [vmem:[%s201 + $0x340] sm:$0xff] %v1429
      %1558 = vst [vmem:[%s201 + $0x348] sm:$0xff] %v1430
      %1559 = vst [vmem:[%s201 + $0x350] sm:$0xff] %v1431
      %1560 = vst [vmem:[%s201 + $0x358] sm:$0xff] %v1432
      %1561 = vst [vmem:[%s201 + $0x360] sm:$0xff] %v1433
      %1562 = vst [vmem:[%s201 + $0x368] sm:$0xff] %v1434
      %1563 = vst [vmem:[%s201 + $0x370] sm:$0xff] %v1435
      %1564 = vst [vmem:[%s201 + $0x378] sm:$0xff] %v1436
      %1565 = vst [vmem:[%s201 + $0x380] sm:$0xff] %v1437
      %1566 = vst [vmem:[%s201 + $0x388] sm:$0xff] %v1438
      %1567 = vst [vmem:[%s201 + $0x390] sm:$0xff] %v1439
      %1568 = vst [vmem:[%s201 + $0x398] sm:$0xff] %v1440
      %1569 = vst [vmem:[%s201 + $0x3a0] sm:$0xff] %v1441
      %1570 = vst [vmem:[%s201 + $0x3a8] sm:$0xff] %v1442
      %1571 = vst [vmem:[%s201 + $0x3b0] sm:$0xff] %v1443
      %1572 = vst [vmem:[%s201 + $0x3b8] sm:$0xff] %v1444
      %1573 = vst [vmem:[%s201 + $0x3c0] sm:$0xff] %v1445
      %1574 = vst [vmem:[%s201 + $0x3c8] sm:$0xff] %v1446
      %1575 = vst [vmem:[%s201 + $0x3d0] sm:$0xff] %v1447
      %1576 = vst [vmem:[%s201 + $0x3d8] sm:$0xff] %v1448
      %1577 = vst [vmem:[%s201 + $0x3e0] sm:$0xff] %v1449
      %1578 = vst [vmem:[%s201 + $0x3e8] sm:$0xff] %v1450
      %1579 = vst [vmem:[%s201 + $0x3f0] sm:$0xff] %v1451
      %1580 = vst [vmem:[%s201 + $0x3f8] sm:$0xff] %v1452
      %s1581 = smul.u32 128, %s18
      %p1582 = scmp.lt.s32.totalorder %s17, 3
      %s1583 = scalar_select %p1582, %s17, 3
      %p1584 = scmp.lt.s32.totalorder %s1581, 255
      %s1585 = scalar_select %p1584, %s1581, 255
      %s1586 = smul.addr %s1583, 256
      %s1587 = sadd.s32 %s1585, %s1586
      %s1588 = smul.addr %s1587, 8
      %s1589 = scalar_lea.vmem %s2, %s1588
      // Predicated region
      $region29: #{generator_forward.21} parent=27 // pred_check
        %p1590 = pneg %p99
      $region30: #{generator_forward.21} parent=27 // pred_check_branch
        %1592 = sbr.rel (%p1590) target = $region32
      $region31: #{generator_forward.21} parent=27 // pred_region
        %s1593 = smul.u32 128, %s18
      $region32: #{generator_forward.21} parent=27 // pred_fallthru
        _
    $region28: #{generator_forward.21} parent=5 // pred_fallthru
      _
    %p1594 = scmp.le.s32.totalorder 2, %s8
    // Predicated region
    $region33: #{generator_forward.21} parent=5 // pred_check
      %p1595 = pneg %p1594
    $region34: #{generator_forward.21} parent=5 // pred_check_branch
      %1597 = sbr.rel (%p1595) target = $region36
    $region35: #{generator_forward.21} parent=5 // pred_region
      %s1598 = ssub.s32 %s8, 2
      // Predicated region
      $region37: #{generator_forward.21} parent=35 // pred_check
        %p1599 = pneg %p105
      $region38: #{generator_forward.21} parent=35 // pred_check_branch
        %1601 = sbr.rel (%p1599) target = $region40
      $region39: #{generator_forward.21} parent=35 // pred_region
        %s1602 = smul.u32 128, %s20
        %p1603 = scmp.lt.s32.totalorder %s19, 3
        %s1604 = scalar_select %p1603, %s19, 3
        %p1605 = scmp.lt.s32.totalorder %s1602, 255
        %s1606 = scalar_select %p1605, %s1602, 255
        %s1607 = smul.addr %s1604, 256
        %s1608 = sadd.s32 %s1606, %s1607
        %s1609 = smul.addr %s1608, 8
        %s1610 = scalar_lea.vmem %s2, %s1609
      $region40: #{generator_forward.21} parent=35 // pred_fallthru
        _
    $region36: #{generator_forward.21} parent=5 // pred_fallthru
      _
  $region6: #{generator_forward.21} parent=0 // loop_footer
    %s12 = sadd.s32 1, %s8
  $region7: #{generator_forward.21} parent=0 // loop_footer_branch
    %7 = sbr.rel target = $region3
  $region8: #{generator_forward.21} parent=0 // loop_exit
    _

</llo_original>
